<compile_context>
chip_gen: v7x
topology: tpu7x:2x2x1
jax: 0.10.0
libtpu: 0.0.40
codegen_flags: <defaults>
</compile_context>

<pallas_src>
import math

import jax
import jax.numpy as jnp
from jax.experimental import pallas as pl
from jax.experimental.pallas import tpu as pltpu

# ----------------------------- config ---------------------------------------
B = 2            # batch
L = 8            # max_length / sequence length
H = 32           # hidden size
NH = 2           # attention heads
DH = H // NH     # head dim
I = 64           # intermediate (FFN) size
N_LAYERS = 2
VOCAB = 64
TYPE_VOCAB = 2
LN_EPS = 1e-12

WDTYPE = jnp.bfloat16   # matmul weight dtype (f32 accumulation)


# --------------------------- shared math helpers ------------------------------
def _layernorm(x, g, b):
    mu = jnp.mean(x, axis=-1, keepdims=True)
    var = jnp.mean((x - mu) * (x - mu), axis=-1, keepdims=True)
    return (x - mu) * jax.lax.rsqrt(var + LN_EPS) * g + b


def _gelu(x):
    # TODO(synk): HF BERT default uses exact erf GELU; tanh approximation used
    # here since erf has no clean Mosaic lowering.
    c = math.sqrt(2.0 / math.pi)
    return 0.5 * x * (1.0 + jnp.tanh(c * (x + 0.044715 * x * x * x)))


def _mm(x, w):
    """bf16 MXU matmul with f32 accumulation (works on v5e/v6e/v7x)."""
    return jnp.dot(x.astype(w.dtype), w, preferred_element_type=jnp.float32)


# ------------------------------ fused kernel ---------------------------------
def fused_bert_kernel(x_ref, bias_ref, eg_ref, eb_ref,
                      wqkv_ref, bqkv_ref, wo_ref, bo_ref,
                      ln1g_ref, ln1b_ref, w1_ref, b1_ref,
                      w2_ref, b2_ref, ln2g_ref, ln2b_ref,
                      out_ref, ctx_ref):
    """Whole BERT encoder in one invocation.

    x_ref    : (B*L, H) f32   summed embeddings (pre-LayerNorm)
    bias_ref : (B, L)  f32    additive attention-mask bias
    weights  : stacked along a leading (N_LAYERS,) axis
    ctx_ref  : (B*L, H) f32   VMEM scratch for per-head attention contexts
    """
    f32 = jnp.float32
    scale = 1.0 / math.sqrt(DH)

    # embedding LayerNorm (dropout = identity in eval mode)
    x = _layernorm(x_ref[...], eg_ref[...], eb_ref[...])          # (B*L, H) f32
    mask = bias_ref[...]                                          # (B, L)

    for li in range(N_LAYERS):
        # ---- fused QKV projection: one (B*L, H) x (H, 3H) matmul ----
        qkv = _mm(x, wqkv_ref[li]) + bqkv_ref[li]                 # (B*L, 3H) f32

        # ---- masked multi-head self-attention (per batch / per head) ----
        for b in range(B):
            r0 = b * L
            bias_b = mask[b:b + 1, :]                             # (1, L)
            for h in range(NH):
                c0 = h * DH
                q = qkv[r0:r0 + L, c0:c0 + DH]                    # (L, DH)
                k = qkv[r0:r0 + L, H + c0:H + c0 + DH]            # (L, DH)
                v = qkv[r0:r0 + L, 2 * H + c0:2 * H + c0 + DH]    # (L, DH)

                s = jax.lax.dot_general(q, k, (((1,), (1,)), ((), ())),
                                        preferred_element_type=f32)  # (L, L)
                s = s * scale + bias_b
                s = s - jnp.max(s, axis=-1, keepdims=True)
                p = jnp.exp(s)
                p = p * pl.reciprocal(jnp.sum(p, axis=-1, keepdims=True),
                                      approx=True)
                # write this head's context straight into the scratch slab
                ctx_ref[r0:r0 + L, c0:c0 + DH] = jnp.dot(
                    p, v, preferred_element_type=f32)

        ctx = ctx_ref[...]                                        # (B*L, H) f32

        # ---- attention output projection + residual + LayerNorm ----
        attn = _mm(ctx, wo_ref[li]) + bo_ref[li]
        h1 = _layernorm(x + attn, ln1g_ref[li], ln1b_ref[li])

        # ---- feed-forward + residual + LayerNorm ----
        ff = _mm(h1, w1_ref[li]) + b1_ref[li]
        ff = _gelu(ff)
        ff = _mm(ff, w2_ref[li]) + b2_ref[li]
        x = _layernorm(h1 + ff, ln2g_ref[li], ln2b_ref[li])

    out_ref[...] = x.astype(out_ref.dtype)                        # one dense store


# --------------------------- pallas wrapper ----------------------------------
def bert_encoder_pallas(emb_flat, mask_bias, params):
    args = [emb_flat, mask_bias, params["emb_lng"], params["emb_lnb"],
            params["wqkv"], params["bqkv"], params["wo"], params["bo"],
            params["ln1g"], params["ln1b"], params["w1"], params["b1"],
            params["w2"], params["b2"], params["ln2g"], params["ln2b"]]
    vmem_spec = lambda: pl.BlockSpec(memory_space=pltpu.MemorySpace.VMEM)
    out = pl.pallas_call(
        fused_bert_kernel,
        out_shape=jax.ShapeDtypeStruct((B * L, H), jnp.float32),
        in_specs=[vmem_spec() for _ in args],
        out_specs=vmem_spec(),
        scratch_shapes=[pltpu.VMEM((B * L, H), jnp.float32)],
    )(*args)
    return out


# ------------------------------ parameters -----------------------------------
def init_params(key):
    std = 0.02

    def nrm(k, shape, dtype=jnp.float32):
        return (jax.random.normal(k, shape, jnp.float32) * std).astype(dtype)

    keys = jax.random.split(key, 4 + N_LAYERS)
    params = {
        "tok_emb": nrm(keys[0], (VOCAB, H)),
        "pos_emb": nrm(keys[1], (L, H)),
        "typ_emb": nrm(keys[2], (TYPE_VOCAB, H)),
        "emb_lng": jnp.ones((1, H), jnp.float32),
        "emb_lnb": jnp.zeros((1, H), jnp.float32),
    }

    wqkv, bqkv, wo, bo, ln1g, ln1b = [], [], [], [], [], []
    w1, b1, w2, b2, ln2g, ln2b = [], [], [], [], [], []
    for li in range(N_LAYERS):
        ks = jax.random.split(keys[4 + li], 8)
        wqkv.append(nrm(ks[0], (H, 3 * H), WDTYPE))
        bqkv.append(nrm(ks[1], (1, 3 * H)))
        wo.append(nrm(ks[2], (H, H), WDTYPE))
        bo.append(nrm(ks[3], (1, H)))
        ln1g.append(jnp.ones((1, H), jnp.float32))
        ln1b.append(jnp.zeros((1, H), jnp.float32))
        w1.append(nrm(ks[4], (H, I), WDTYPE))
        b1.append(nrm(ks[5], (1, I)))
        w2.append(nrm(ks[6], (I, H), WDTYPE))
        b2.append(nrm(ks[7], (1, H)))
        ln2g.append(jnp.ones((1, H), jnp.float32))
        ln2b.append(jnp.zeros((1, H), jnp.float32))

    params.update(
        wqkv=jnp.stack(wqkv), bqkv=jnp.stack(bqkv),
        wo=jnp.stack(wo), bo=jnp.stack(bo),
        ln1g=jnp.stack(ln1g), ln1b=jnp.stack(ln1b),
        w1=jnp.stack(w1), b1=jnp.stack(b1),
        w2=jnp.stack(w2), b2=jnp.stack(b2),
        ln2g=jnp.stack(ln2g), ln2b=jnp.stack(ln2b),
    )
    return params


# ------------------------------ forward --------------------------------------
def bert_encoder_forward(params, seqs, att_mask):
    """seqs: (B, L) int32 token ids; att_mask: (B, L) 1/0.  Returns (B, L, H)."""
    # embeddings (gathers are plain-JAX glue), token_type_ids = 0, eval mode
    tok = jnp.take(params["tok_emb"], seqs, axis=0)                  # (B, L, H)
    pos = params["pos_emb"][None, :, :]
    typ = params["typ_emb"][0][None, None, :]
    emb_flat = (tok + pos + typ).reshape(B * L, H)
    # extended attention mask: (1 - mask) * -10000, shape (B, L)
    mask_bias = (1.0 - att_mask.astype(jnp.float32)) * -10000.0
    out = bert_encoder_pallas(emb_flat, mask_bias, params)           # (B*L, H)
    return out.reshape(B, L, H)


# -------------------------- pure-JAX reference --------------------------------
def bert_encoder_reference(params, seqs, att_mask):
    tok = jnp.take(params["tok_emb"], seqs, axis=0)
    pos = params["pos_emb"][None, :, :]
    typ = params["typ_emb"][0][None, None, :]
    x = (tok + pos + typ).reshape(B * L, H)
    x = _layernorm(x, params["emb_lng"], params["emb_lnb"])
    mask = (1.0 - att_mask.astype(jnp.float32)) * -10000.0
    scale = 1.0 / math.sqrt(DH)
    for li in range(N_LAYERS):
        qkv = _mm(x, params["wqkv"][li]) + params["bqkv"][li]
        ctx = jnp.zeros((B * L, H), jnp.float32)
        for b in range(B):
            r0 = b * L
            bias_b = mask[b:b + 1, :]
            for h in range(NH):
                c0 = h * DH
                q = qkv[r0:r0 + L, c0:c0 + DH]
                k = qkv[r0:r0 + L, H + c0:H + c0 + DH]
                v = qkv[r0:r0 + L, 2 * H + c0:2 * H + c0 + DH]
                s = q @ k.T * scale + bias_b
                s = s - jnp.max(s, axis=-1, keepdims=True)
                p = jnp.exp(s)
                p = p / jnp.sum(p, axis=-1, keepdims=True)
                ctx = ctx.at[r0:r0 + L, c0:c0 + DH].set(p @ v)
        attn = _mm(ctx, params["wo"][li]) + params["bo"][li]
        h1 = _layernorm(x + attn, params["ln1g"][li], params["ln1b"][li])
        ff = _mm(h1, params["w1"][li]) + params["b1"][li]
        ff = _gelu(ff)
        ff = _mm(ff, params["w2"][li]) + params["b2"][li]
        x = _layernorm(h1 + ff, params["ln2g"][li], params["ln2b"][li])
    return x.reshape(B, L, H)


# -------------------------------- main ---------------------------------------
if __name__ == "__main__":
    key = jax.random.PRNGKey(0)
    pkey, skey = jax.random.split(key)
    params = init_params(pkey)

    seqs = jax.random.randint(skey, (B, L), 0, VOCAB, dtype=jnp.int32)
    lengths = jnp.array([L, 5], dtype=jnp.int32)
    att_mask = (jnp.arange(L)[None, :] < lengths[:, None]).astype(jnp.int32)

    out = bert_encoder_forward(params, seqs, att_mask)
    out = jax.block_until_ready(out)

    assert out.shape == (B, L, H) and out.dtype == jnp.float32
    assert bool(jnp.all(jnp.isfinite(out)))

    ref = bert_encoder_reference(params, seqs, att_mask)
    assert bool(jnp.allclose(out, ref, atol=1e-2, rtol=0.0)), "mismatch vs reference"

    print("KERNEL_OK")
</pallas_src>

<mosaic_0001>
module attributes {stable_mosaic.version = 11 : i64} {
  func.func @fused_bert_kernel(%arg0: memref<16x32xf32, #tpu.memory_space<vmem>>, %arg1: memref<2x8xf32, #tpu.memory_space<vmem>>, %arg2: memref<1x32xf32, #tpu.memory_space<vmem>>, %arg3: memref<1x32xf32, #tpu.memory_space<vmem>>, %arg4: memref<2x32x96xbf16, #tpu.memory_space<vmem>>, %arg5: memref<2x1x96xf32, #tpu.memory_space<vmem>>, %arg6: memref<2x32x32xbf16, #tpu.memory_space<vmem>>, %arg7: memref<2x1x32xf32, #tpu.memory_space<vmem>>, %arg8: memref<2x1x32xf32, #tpu.memory_space<vmem>>, %arg9: memref<2x1x32xf32, #tpu.memory_space<vmem>>, %arg10: memref<2x32x64xbf16, #tpu.memory_space<vmem>>, %arg11: memref<2x1x64xf32, #tpu.memory_space<vmem>>, %arg12: memref<2x64x32xbf16, #tpu.memory_space<vmem>>, %arg13: memref<2x1x32xf32, #tpu.memory_space<vmem>>, %arg14: memref<2x1x32xf32, #tpu.memory_space<vmem>>, %arg15: memref<2x1x32xf32, #tpu.memory_space<vmem>>, %arg16: memref<16x32xf32, #tpu.memory_space<vmem>>, %arg17: memref<16x32xf32, #tpu.memory_space<vmem>>) attributes {dimension_semantics = [], scalar_prefetch = 0 : i64, scratch_operands = 1 : i64, tpu.core_type = #tpu.core_type<tc>} {
    %c0 = arith.constant 0 : index
    %c0_0 = arith.constant 0 : index
    %0 = vector.load %arg0[%c0, %c0_0] : memref<16x32xf32, #tpu.memory_space<vmem>>, vector<16x32xf32>
    %c0_1 = arith.constant 0 : index
    %c0_2 = arith.constant 0 : index
    %1 = vector.load %arg2[%c0_1, %c0_2] : memref<1x32xf32, #tpu.memory_space<vmem>>, vector<1x32xf32>
    %c0_3 = arith.constant 0 : index
    %c0_4 = arith.constant 0 : index
    %2 = vector.load %arg3[%c0_3, %c0_4] : memref<1x32xf32, #tpu.memory_space<vmem>>, vector<1x32xf32>
    %cst = arith.constant dense<0.000000e+00> : vector<16xf32>
    %3 = vector.multi_reduction <add>, %0, %cst [1] : vector<16x32xf32> to vector<16xf32>
    %4 = vector.shape_cast %3 : vector<16xf32> to vector<16x1xf32>
    %cst_5 = arith.constant 3.200000e+01 : f32
    %5 = vector.broadcast %cst_5 : f32 to vector<16x1xf32>
    %6 = arith.divf %4, %5 : vector<16x1xf32>
    %7 = vector.broadcast %6 : vector<16x1xf32> to vector<16x32xf32>
    %8 = arith.subf %0, %7 : vector<16x32xf32>
    %9 = vector.broadcast %6 : vector<16x1xf32> to vector<16x32xf32>
    %10 = arith.subf %0, %9 : vector<16x32xf32>
    %11 = arith.mulf %8, %10 : vector<16x32xf32>
    %cst_6 = arith.constant dense<0.000000e+00> : vector<16xf32>
    %12 = vector.multi_reduction <add>, %11, %cst_6 [1] : vector<16x32xf32> to vector<16xf32>
    %13 = vector.shape_cast %12 : vector<16xf32> to vector<16x1xf32>
    %cst_7 = arith.constant 3.200000e+01 : f32
    %14 = vector.broadcast %cst_7 : f32 to vector<16x1xf32>
    %15 = arith.divf %13, %14 : vector<16x1xf32>
    %16 = vector.broadcast %6 : vector<16x1xf32> to vector<16x32xf32>
    %17 = arith.subf %0, %16 : vector<16x32xf32>
    %cst_8 = arith.constant 9.99999996E-13 : f32
    %18 = vector.broadcast %cst_8 : f32 to vector<16x1xf32>
    %19 = arith.addf %15, %18 : vector<16x1xf32>
    %20 = math.rsqrt %19 : vector<16x1xf32>
    %21 = vector.broadcast %20 : vector<16x1xf32> to vector<16x32xf32>
    %22 = arith.mulf %17, %21 : vector<16x32xf32>
    %23 = vector.broadcast %1 : vector<1x32xf32> to vector<16x32xf32>
    %24 = arith.mulf %22, %23 : vector<16x32xf32>
    %25 = vector.broadcast %2 : vector<1x32xf32> to vector<16x32xf32>
    %26 = arith.addf %24, %25 : vector<16x32xf32>
    %c0_9 = arith.constant 0 : index
    %c0_10 = arith.constant 0 : index
    %27 = vector.load %arg1[%c0_9, %c0_10] : memref<2x8xf32, #tpu.memory_space<vmem>>, vector<2x8xf32>
    %c0_11 = arith.constant 0 : index
    %c0_12 = arith.constant 0 : index
    %c0_13 = arith.constant 0 : index
    %28 = vector.load %arg4[%c0_11, %c0_12, %c0_13] : memref<2x32x96xbf16, #tpu.memory_space<vmem>>, vector<1x32x96xbf16>
    %29 = vector.shape_cast %28 : vector<1x32x96xbf16> to vector<32x96xbf16>
    %30 = arith.truncf %26 : vector<16x32xf32> to vector<16x32xbf16>
    %cst_14 = arith.constant dense<0.000000e+00> : vector<16x96xf32>
    %31 = tpu.matmul %30, %29, %cst_14 {dimension_numbers = #tpu.dot_dimension_numbers<[1], [0], [0], [1], [0, 0, 1, 1], [], []>} : vector<16x32xbf16>, vector<32x96xbf16>, vector<16x96xf32> -> vector<16x96xf32>
    %c0_15 = arith.constant 0 : index
    %c0_16 = arith.constant 0 : index
    %c0_17 = arith.constant 0 : index
    %32 = vector.load %arg5[%c0_15, %c0_16, %c0_17] : memref<2x1x96xf32, #tpu.memory_space<vmem>>, vector<1x1x96xf32>
    %33 = vector.shape_cast %32 : vector<1x1x96xf32> to vector<1x96xf32>
    %34 = vector.broadcast %33 : vector<1x96xf32> to vector<16x96xf32>
    %35 = arith.addf %31, %34 : vector<16x96xf32>
    %36 = vector.extract_strided_slice %27 {offsets = [0, 0], sizes = [1, 8], strides = [1, 1]} : vector<2x8xf32> to vector<1x8xf32>
    %37 = vector.extract_strided_slice %35 {offsets = [0, 0], sizes = [8, 16], strides = [1, 1]} : vector<16x96xf32> to vector<8x16xf32>
    %38 = vector.extract_strided_slice %35 {offsets = [0, 32], sizes = [8, 16], strides = [1, 1]} : vector<16x96xf32> to vector<8x16xf32>
    %39 = vector.extract_strided_slice %35 {offsets = [0, 64], sizes = [8, 16], strides = [1, 1]} : vector<16x96xf32> to vector<8x16xf32>
    %cst_18 = arith.constant dense<0.000000e+00> : vector<8x8xf32>
    %40 = tpu.matmul %37, %38, %cst_18 {dimension_numbers = #tpu.dot_dimension_numbers<[1], [1], [0], [0], [0, 0, 1, 0], [], []>} : vector<8x16xf32>, vector<8x16xf32>, vector<8x8xf32> -> vector<8x8xf32>
    %cst_19 = arith.constant 2.500000e-01 : f32
    %41 = vector.broadcast %cst_19 : f32 to vector<8x8xf32>
    %42 = arith.mulf %40, %41 : vector<8x8xf32>
    %43 = vector.broadcast %36 : vector<1x8xf32> to vector<8x8xf32>
    %44 = arith.addf %42, %43 : vector<8x8xf32>
    %cst_20 = arith.constant dense<0xFF800000> : vector<8xf32>
    %45 = vector.multi_reduction <maximumf>, %44, %cst_20 [1] : vector<8x8xf32> to vector<8xf32>
    %46 = vector.shape_cast %45 : vector<8xf32> to vector<8x1xf32>
    %47 = vector.broadcast %46 : vector<8x1xf32> to vector<8x8xf32>
    %48 = arith.subf %44, %47 : vector<8x8xf32>
    %49 = math.exp %48 : vector<8x8xf32>
    %cst_21 = arith.constant dense<0.000000e+00> : vector<8xf32>
    %50 = vector.multi_reduction <add>, %49, %cst_21 [1] : vector<8x8xf32> to vector<8xf32>
    %51 = vector.shape_cast %50 : vector<8xf32> to vector<8x1xf32>
    %52 = tpu.reciprocal %51 {approx = true} : vector<8x1xf32> -> vector<8x1xf32>
    %53 = vector.broadcast %52 : vector<8x1xf32> to vector<8x8xf32>
    %54 = arith.mulf %49, %53 : vector<8x8xf32>
    %cst_22 = arith.constant dense<0.000000e+00> : vector<8x16xf32>
    %55 = tpu.matmul %54, %39, %cst_22 {dimension_numbers = #tpu.dot_dimension_numbers<[1], [0], [0], [1], [0, 0, 1, 1], [], []>} : vector<8x8xf32>, vector<8x16xf32>, vector<8x16xf32> -> vector<8x16xf32>
    %c0_23 = arith.constant 0 : index
    %c0_24 = arith.constant 0 : index
    %56 = vector.load %arg17[%c0_23, %c0_24] : memref<16x32xf32, #tpu.memory_space<vmem>>, vector<8x16xf32>
    tpu.vector_store %arg17[%c0_23, %c0_24], %55 {strides = array<i32>} : memref<16x32xf32, #tpu.memory_space<vmem>>, vector<8x16xf32>,
    %57 = vector.extract_strided_slice %35 {offsets = [0, 16], sizes = [8, 16], strides = [1, 1]} : vector<16x96xf32> to vector<8x16xf32>
    %58 = vector.extract_strided_slice %35 {offsets = [0, 48], sizes = [8, 16], strides = [1, 1]} : vector<16x96xf32> to vector<8x16xf32>
    %59 = vector.extract_strided_slice %35 {offsets = [0, 80], sizes = [8, 16], strides = [1, 1]} : vector<16x96xf32> to vector<8x16xf32>
    %cst_25 = arith.constant dense<0.000000e+00> : vector<8x8xf32>
    %60 = tpu.matmul %57, %58, %cst_25 {dimension_numbers = #tpu.dot_dimension_numbers<[1], [1], [0], [0], [0, 0, 1, 0], [], []>} : vector<8x16xf32>, vector<8x16xf32>, vector<8x8xf32> -> vector<8x8xf32>
    %cst_26 = arith.constant 2.500000e-01 : f32
    %61 = vector.broadcast %cst_26 : f32 to vector<8x8xf32>
    %62 = arith.mulf %60, %61 : vector<8x8xf32>
    %63 = vector.broadcast %36 : vector<1x8xf32> to vector<8x8xf32>
    %64 = arith.addf %62, %63 : vector<8x8xf32>
    %cst_27 = arith.constant dense<0xFF800000> : vector<8xf32>
    %65 = vector.multi_reduction <maximumf>, %64, %cst_27 [1] : vector<8x8xf32> to vector<8xf32>
    %66 = vector.shape_cast %65 : vector<8xf32> to vector<8x1xf32>
    %67 = vector.broadcast %66 : vector<8x1xf32> to vector<8x8xf32>
    %68 = arith.subf %64, %67 : vector<8x8xf32>
    %69 = math.exp %68 : vector<8x8xf32>
    %cst_28 = arith.constant dense<0.000000e+00> : vector<8xf32>
    %70 = vector.multi_reduction <add>, %69, %cst_28 [1] : vector<8x8xf32> to vector<8xf32>
    %71 = vector.shape_cast %70 : vector<8xf32> to vector<8x1xf32>
    %72 = tpu.reciprocal %71 {approx = true} : vector<8x1xf32> -> vector<8x1xf32>
    %73 = vector.broadcast %72 : vector<8x1xf32> to vector<8x8xf32>
    %74 = arith.mulf %69, %73 : vector<8x8xf32>
    %cst_29 = arith.constant dense<0.000000e+00> : vector<8x16xf32>
    %75 = tpu.matmul %74, %59, %cst_29 {dimension_numbers = #tpu.dot_dimension_numbers<[1], [0], [0], [1], [0, 0, 1, 1], [], []>} : vector<8x8xf32>, vector<8x16xf32>, vector<8x16xf32> -> vector<8x16xf32>
    %c0_30 = arith.constant 0 : index
    %c16 = arith.constant 16 : index
    %76 = vector.load %arg17[%c0_30, %c16] : memref<16x32xf32, #tpu.memory_space<vmem>>, vector<8x16xf32>
    tpu.vector_store %arg17[%c0_30, %c16], %75 {strides = array<i32>} : memref<16x32xf32, #tpu.memory_space<vmem>>, vector<8x16xf32>,
    %77 = vector.extract_strided_slice %27 {offsets = [1, 0], sizes = [1, 8], strides = [1, 1]} : vector<2x8xf32> to vector<1x8xf32>
    %78 = vector.extract_strided_slice %35 {offsets = [8, 0], sizes = [8, 16], strides = [1, 1]} : vector<16x96xf32> to vector<8x16xf32>
    %79 = vector.extract_strided_slice %35 {offsets = [8, 32], sizes = [8, 16], strides = [1, 1]} : vector<16x96xf32> to vector<8x16xf32>
    %80 = vector.extract_strided_slice %35 {offsets = [8, 64], sizes = [8, 16], strides = [1, 1]} : vector<16x96xf32> to vector<8x16xf32>
    %cst_31 = arith.constant dense<0.000000e+00> : vector<8x8xf32>
    %81 = tpu.matmul %78, %79, %cst_31 {dimension_numbers = #tpu.dot_dimension_numbers<[1], [1], [0], [0], [0, 0, 1, 0], [], []>} : vector<8x16xf32>, vector<8x16xf32>, vector<8x8xf32> -> vector<8x8xf32>
    %cst_32 = arith.constant 2.500000e-01 : f32
    %82 = vector.broadcast %cst_32 : f32 to vector<8x8xf32>
    %83 = arith.mulf %81, %82 : vector<8x8xf32>
    %84 = vector.broadcast %77 : vector<1x8xf32> to vector<8x8xf32>
    %85 = arith.addf %83, %84 : vector<8x8xf32>
    %cst_33 = arith.constant dense<0xFF800000> : vector<8xf32>
    %86 = vector.multi_reduction <maximumf>, %85, %cst_33 [1] : vector<8x8xf32> to vector<8xf32>
    %87 = vector.shape_cast %86 : vector<8xf32> to vector<8x1xf32>
    %88 = vector.broadcast %87 : vector<8x1xf32> to vector<8x8xf32>
    %89 = arith.subf %85, %88 : vector<8x8xf32>
    %90 = math.exp %89 : vector<8x8xf32>
    %cst_34 = arith.constant dense<0.000000e+00> : vector<8xf32>
    %91 = vector.multi_reduction <add>, %90, %cst_34 [1] : vector<8x8xf32> to vector<8xf32>
    %92 = vector.shape_cast %91 : vector<8xf32> to vector<8x1xf32>
    %93 = tpu.reciprocal %92 {approx = true} : vector<8x1xf32> -> vector<8x1xf32>
    %94 = vector.broadcast %93 : vector<8x1xf32> to vector<8x8xf32>
    %95 = arith.mulf %90, %94 : vector<8x8xf32>
    %cst_35 = arith.constant dense<0.000000e+00> : vector<8x16xf32>
    %96 = tpu.matmul %95, %80, %cst_35 {dimension_numbers = #tpu.dot_dimension_numbers<[1], [0], [0], [1], [0, 0, 1, 1], [], []>} : vector<8x8xf32>, vector<8x16xf32>, vector<8x16xf32> -> vector<8x16xf32>
    %c8 = arith.constant 8 : index
    %c0_36 = arith.constant 0 : index
    %97 = vector.load %arg17[%c8, %c0_36] : memref<16x32xf32, #tpu.memory_space<vmem>>, vector<8x16xf32>
    tpu.vector_store %arg17[%c8, %c0_36], %96 {strides = array<i32>} : memref<16x32xf32, #tpu.memory_space<vmem>>, vector<8x16xf32>,
    %98 = vector.extract_strided_slice %35 {offsets = [8, 16], sizes = [8, 16], strides = [1, 1]} : vector<16x96xf32> to vector<8x16xf32>
    %99 = vector.extract_strided_slice %35 {offsets = [8, 48], sizes = [8, 16], strides = [1, 1]} : vector<16x96xf32> to vector<8x16xf32>
    %100 = vector.extract_strided_slice %35 {offsets = [8, 80], sizes = [8, 16], strides = [1, 1]} : vector<16x96xf32> to vector<8x16xf32>
    %cst_37 = arith.constant dense<0.000000e+00> : vector<8x8xf32>
    %101 = tpu.matmul %98, %99, %cst_37 {dimension_numbers = #tpu.dot_dimension_numbers<[1], [1], [0], [0], [0, 0, 1, 0], [], []>} : vector<8x16xf32>, vector<8x16xf32>, vector<8x8xf32> -> vector<8x8xf32>
    %cst_38 = arith.constant 2.500000e-01 : f32
    %102 = vector.broadcast %cst_38 : f32 to vector<8x8xf32>
    %103 = arith.mulf %101, %102 : vector<8x8xf32>
    %104 = vector.broadcast %77 : vector<1x8xf32> to vector<8x8xf32>
    %105 = arith.addf %103, %104 : vector<8x8xf32>
    %cst_39 = arith.constant dense<0xFF800000> : vector<8xf32>
    %106 = vector.multi_reduction <maximumf>, %105, %cst_39 [1] : vector<8x8xf32> to vector<8xf32>
    %107 = vector.shape_cast %106 : vector<8xf32> to vector<8x1xf32>
    %108 = vector.broadcast %107 : vector<8x1xf32> to vector<8x8xf32>
    %109 = arith.subf %105, %108 : vector<8x8xf32>
    %110 = math.exp %109 : vector<8x8xf32>
    %cst_40 = arith.constant dense<0.000000e+00> : vector<8xf32>
    %111 = vector.multi_reduction <add>, %110, %cst_40 [1] : vector<8x8xf32> to vector<8xf32>
    %112 = vector.shape_cast %111 : vector<8xf32> to vector<8x1xf32>
    %113 = tpu.reciprocal %112 {approx = true} : vector<8x1xf32> -> vector<8x1xf32>
    %114 = vector.broadcast %113 : vector<8x1xf32> to vector<8x8xf32>
    %115 = arith.mulf %110, %114 : vector<8x8xf32>
    %cst_41 = arith.constant dense<0.000000e+00> : vector<8x16xf32>
    %116 = tpu.matmul %115, %100, %cst_41 {dimension_numbers = #tpu.dot_dimension_numbers<[1], [0], [0], [1], [0, 0, 1, 1], [], []>} : vector<8x8xf32>, vector<8x16xf32>, vector<8x16xf32> -> vector<8x16xf32>
    %c8_42 = arith.constant 8 : index
    %c16_43 = arith.constant 16 : index
    %117 = vector.load %arg17[%c8_42, %c16_43] : memref<16x32xf32, #tpu.memory_space<vmem>>, vector<8x16xf32>
    tpu.vector_store %arg17[%c8_42, %c16_43], %116 {strides = array<i32>} : memref<16x32xf32, #tpu.memory_space<vmem>>, vector<8x16xf32>,
    %c0_44 = arith.constant 0 : index
    %c0_45 = arith.constant 0 : index
    %118 = vector.load %arg17[%c0_44, %c0_45] : memref<16x32xf32, #tpu.memory_space<vmem>>, vector<16x32xf32>
    %c0_46 = arith.constant 0 : index
    %c0_47 = arith.constant 0 : index
    %c0_48 = arith.constant 0 : index
    %119 = vector.load %arg6[%c0_46, %c0_47, %c0_48] : memref<2x32x32xbf16, #tpu.memory_space<vmem>>, vector<1x32x32xbf16>
    %120 = vector.shape_cast %119 : vector<1x32x32xbf16> to vector<32x32xbf16>
    %121 = arith.truncf %118 : vector<16x32xf32> to vector<16x32xbf16>
    %cst_49 = arith.constant dense<0.000000e+00> : vector<16x32xf32>
    %122 = tpu.matmul %121, %120, %cst_49 {dimension_numbers = #tpu.dot_dimension_numbers<[1], [0], [0], [1], [0, 0, 1, 1], [], []>} : vector<16x32xbf16>, vector<32x32xbf16>, vector<16x32xf32> -> vector<16x32xf32>
    %c0_50 = arith.constant 0 : index
    %c0_51 = arith.constant 0 : index
    %c0_52 = arith.constant 0 : index
    %123 = vector.load %arg7[%c0_50, %c0_51, %c0_52] : memref<2x1x32xf32, #tpu.memory_space<vmem>>, vector<1x1x32xf32>
    %124 = vector.shape_cast %123 : vector<1x1x32xf32> to vector<1x32xf32>
    %125 = vector.broadcast %124 : vector<1x32xf32> to vector<16x32xf32>
    %126 = arith.addf %122, %125 : vector<16x32xf32>
    %127 = arith.addf %26, %126 : vector<16x32xf32>
    %c0_53 = arith.constant 0 : index
    %c0_54 = arith.constant 0 : index
    %c0_55 = arith.constant 0 : index
    %128 = vector.load %arg8[%c0_53, %c0_54, %c0_55] : memref<2x1x32xf32, #tpu.memory_space<vmem>>, vector<1x1x32xf32>
    %129 = vector.shape_cast %128 : vector<1x1x32xf32> to vector<1x32xf32>
    %c0_56 = arith.constant 0 : index
    %c0_57 = arith.constant 0 : index
    %c0_58 = arith.constant 0 : index
    %130 = vector.load %arg9[%c0_56, %c0_57, %c0_58] : memref<2x1x32xf32, #tpu.memory_space<vmem>>, vector<1x1x32xf32>
    %131 = vector.shape_cast %130 : vector<1x1x32xf32> to vector<1x32xf32>
    %cst_59 = arith.constant dense<0.000000e+00> : vector<16xf32>
    %132 = vector.multi_reduction <add>, %127, %cst_59 [1] : vector<16x32xf32> to vector<16xf32>
    %133 = vector.shape_cast %132 : vector<16xf32> to vector<16x1xf32>
    %cst_60 = arith.constant 3.200000e+01 : f32
    %134 = vector.broadcast %cst_60 : f32 to vector<16x1xf32>
    %135 = arith.divf %133, %134 : vector<16x1xf32>
    %136 = vector.broadcast %135 : vector<16x1xf32> to vector<16x32xf32>
    %137 = arith.subf %127, %136 : vector<16x32xf32>
    %138 = vector.broadcast %135 : vector<16x1xf32> to vector<16x32xf32>
    %139 = arith.subf %127, %138 : vector<16x32xf32>
    %140 = arith.mulf %137, %139 : vector<16x32xf32>
    %cst_61 = arith.constant dense<0.000000e+00> : vector<16xf32>
    %141 = vector.multi_reduction <add>, %140, %cst_61 [1] : vector<16x32xf32> to vector<16xf32>
    %142 = vector.shape_cast %141 : vector<16xf32> to vector<16x1xf32>
    %cst_62 = arith.constant 3.200000e+01 : f32
    %143 = vector.broadcast %cst_62 : f32 to vector<16x1xf32>
    %144 = arith.divf %142, %143 : vector<16x1xf32>
    %145 = vector.broadcast %135 : vector<16x1xf32> to vector<16x32xf32>
    %146 = arith.subf %127, %145 : vector<16x32xf32>
    %cst_63 = arith.constant 9.99999996E-13 : f32
    %147 = vector.broadcast %cst_63 : f32 to vector<16x1xf32>
    %148 = arith.addf %144, %147 : vector<16x1xf32>
    %149 = math.rsqrt %148 : vector<16x1xf32>
    %150 = vector.broadcast %149 : vector<16x1xf32> to vector<16x32xf32>
    %151 = arith.mulf %146, %150 : vector<16x32xf32>
    %152 = vector.broadcast %129 : vector<1x32xf32> to vector<16x32xf32>
    %153 = arith.mulf %151, %152 : vector<16x32xf32>
    %154 = vector.broadcast %131 : vector<1x32xf32> to vector<16x32xf32>
    %155 = arith.addf %153, %154 : vector<16x32xf32>
    %c0_64 = arith.constant 0 : index
    %c0_65 = arith.constant 0 : index
    %c0_66 = arith.constant 0 : index
    %156 = vector.load %arg10[%c0_64, %c0_65, %c0_66] : memref<2x32x64xbf16, #tpu.memory_space<vmem>>, vector<1x32x64xbf16>
    %157 = vector.shape_cast %156 : vector<1x32x64xbf16> to vector<32x64xbf16>
    %158 = arith.truncf %155 : vector<16x32xf32> to vector<16x32xbf16>
    %cst_67 = arith.constant dense<0.000000e+00> : vector<16x64xf32>
    %159 = tpu.matmul %158, %157, %cst_67 {dimension_numbers = #tpu.dot_dimension_numbers<[1], [0], [0], [1], [0, 0, 1, 1], [], []>} : vector<16x32xbf16>, vector<32x64xbf16>, vector<16x64xf32> -> vector<16x64xf32>
    %c0_68 = arith.constant 0 : index
    %c0_69 = arith.constant 0 : index
    %c0_70 = arith.constant 0 : index
    %160 = vector.load %arg11[%c0_68, %c0_69, %c0_70] : memref<2x1x64xf32, #tpu.memory_space<vmem>>, vector<1x1x64xf32>
    %161 = vector.shape_cast %160 : vector<1x1x64xf32> to vector<1x64xf32>
    %162 = vector.broadcast %161 : vector<1x64xf32> to vector<16x64xf32>
    %163 = arith.addf %159, %162 : vector<16x64xf32>
    %cst_71 = arith.constant 5.000000e-01 : f32
    %164 = vector.broadcast %cst_71 : f32 to vector<16x64xf32>
    %165 = arith.mulf %164, %163 : vector<16x64xf32>
    %cst_72 = arith.constant 4.471500e-02 : f32
    %166 = vector.broadcast %cst_72 : f32 to vector<16x64xf32>
    %167 = arith.mulf %166, %163 : vector<16x64xf32>
    %168 = arith.mulf %167, %163 : vector<16x64xf32>
    %169 = arith.mulf %168, %163 : vector<16x64xf32>
    %170 = arith.addf %163, %169 : vector<16x64xf32>
    %cst_73 = arith.constant 0.797884583 : f32
    %171 = vector.broadcast %cst_73 : f32 to vector<16x64xf32>
    %172 = arith.mulf %171, %170 : vector<16x64xf32>
    %173 = math.tanh %172 : vector<16x64xf32>
    %cst_74 = arith.constant 1.000000e+00 : f32
    %174 = vector.broadcast %cst_74 : f32 to vector<16x64xf32>
    %175 = arith.addf %174, %173 : vector<16x64xf32>
    %176 = arith.mulf %165, %175 : vector<16x64xf32>
    %c0_75 = arith.constant 0 : index
    %c0_76 = arith.constant 0 : index
    %c0_77 = arith.constant 0 : index
    %177 = vector.load %arg12[%c0_75, %c0_76, %c0_77] : memref<2x64x32xbf16, #tpu.memory_space<vmem>>, vector<1x64x32xbf16>
    %178 = vector.shape_cast %177 : vector<1x64x32xbf16> to vector<64x32xbf16>
    %179 = arith.truncf %176 : vector<16x64xf32> to vector<16x64xbf16>
    %cst_78 = arith.constant dense<0.000000e+00> : vector<16x32xf32>
    %180 = tpu.matmul %179, %178, %cst_78 {dimension_numbers = #tpu.dot_dimension_numbers<[1], [0], [0], [1], [0, 0, 1, 1], [], []>} : vector<16x64xbf16>, vector<64x32xbf16>, vector<16x32xf32> -> vector<16x32xf32>
    %c0_79 = arith.constant 0 : index
    %c0_80 = arith.constant 0 : index
    %c0_81 = arith.constant 0 : index
    %181 = vector.load %arg13[%c0_79, %c0_80, %c0_81] : memref<2x1x32xf32, #tpu.memory_space<vmem>>, vector<1x1x32xf32>
    %182 = vector.shape_cast %181 : vector<1x1x32xf32> to vector<1x32xf32>
    %183 = vector.broadcast %182 : vector<1x32xf32> to vector<16x32xf32>
    %184 = arith.addf %180, %183 : vector<16x32xf32>
    %185 = arith.addf %155, %184 : vector<16x32xf32>
    %c0_82 = arith.constant 0 : index
    %c0_83 = arith.constant 0 : index
    %c0_84 = arith.constant 0 : index
    %186 = vector.load %arg14[%c0_82, %c0_83, %c0_84] : memref<2x1x32xf32, #tpu.memory_space<vmem>>, vector<1x1x32xf32>
    %187 = vector.shape_cast %186 : vector<1x1x32xf32> to vector<1x32xf32>
    %c0_85 = arith.constant 0 : index
    %c0_86 = arith.constant 0 : index
    %c0_87 = arith.constant 0 : index
    %188 = vector.load %arg15[%c0_85, %c0_86, %c0_87] : memref<2x1x32xf32, #tpu.memory_space<vmem>>, vector<1x1x32xf32>
    %189 = vector.shape_cast %188 : vector<1x1x32xf32> to vector<1x32xf32>
    %cst_88 = arith.constant dense<0.000000e+00> : vector<16xf32>
    %190 = vector.multi_reduction <add>, %185, %cst_88 [1] : vector<16x32xf32> to vector<16xf32>
    %191 = vector.shape_cast %190 : vector<16xf32> to vector<16x1xf32>
    %cst_89 = arith.constant 3.200000e+01 : f32
    %192 = vector.broadcast %cst_89 : f32 to vector<16x1xf32>
    %193 = arith.divf %191, %192 : vector<16x1xf32>
    %194 = vector.broadcast %193 : vector<16x1xf32> to vector<16x32xf32>
    %195 = arith.subf %185, %194 : vector<16x32xf32>
    %196 = vector.broadcast %193 : vector<16x1xf32> to vector<16x32xf32>
    %197 = arith.subf %185, %196 : vector<16x32xf32>
    %198 = arith.mulf %195, %197 : vector<16x32xf32>
    %cst_90 = arith.constant dense<0.000000e+00> : vector<16xf32>
    %199 = vector.multi_reduction <add>, %198, %cst_90 [1] : vector<16x32xf32> to vector<16xf32>
    %200 = vector.shape_cast %199 : vector<16xf32> to vector<16x1xf32>
    %cst_91 = arith.constant 3.200000e+01 : f32
    %201 = vector.broadcast %cst_91 : f32 to vector<16x1xf32>
    %202 = arith.divf %200, %201 : vector<16x1xf32>
    %203 = vector.broadcast %193 : vector<16x1xf32> to vector<16x32xf32>
    %204 = arith.subf %185, %203 : vector<16x32xf32>
    %cst_92 = arith.constant 9.99999996E-13 : f32
    %205 = vector.broadcast %cst_92 : f32 to vector<16x1xf32>
    %206 = arith.addf %202, %205 : vector<16x1xf32>
    %207 = math.rsqrt %206 : vector<16x1xf32>
    %208 = vector.broadcast %207 : vector<16x1xf32> to vector<16x32xf32>
    %209 = arith.mulf %204, %208 : vector<16x32xf32>
    %210 = vector.broadcast %187 : vector<1x32xf32> to vector<16x32xf32>
    %211 = arith.mulf %209, %210 : vector<16x32xf32>
    %212 = vector.broadcast %189 : vector<1x32xf32> to vector<16x32xf32>
    %213 = arith.addf %211, %212 : vector<16x32xf32>
    %c1 = arith.constant 1 : index
    %c0_93 = arith.constant 0 : index
    %c0_94 = arith.constant 0 : index
    %214 = vector.load %arg4[%c1, %c0_93, %c0_94] : memref<2x32x96xbf16, #tpu.memory_space<vmem>>, vector<1x32x96xbf16>
    %215 = vector.shape_cast %214 : vector<1x32x96xbf16> to vector<32x96xbf16>
    %216 = arith.truncf %213 : vector<16x32xf32> to vector<16x32xbf16>
    %cst_95 = arith.constant dense<0.000000e+00> : vector<16x96xf32>
    %217 = tpu.matmul %216, %215, %cst_95 {dimension_numbers = #tpu.dot_dimension_numbers<[1], [0], [0], [1], [0, 0, 1, 1], [], []>} : vector<16x32xbf16>, vector<32x96xbf16>, vector<16x96xf32> -> vector<16x96xf32>
    %c1_96 = arith.constant 1 : index
    %c0_97 = arith.constant 0 : index
    %c0_98 = arith.constant 0 : index
    %218 = vector.load %arg5[%c1_96, %c0_97, %c0_98] : memref<2x1x96xf32, #tpu.memory_space<vmem>>, vector<1x1x96xf32>
    %219 = vector.shape_cast %218 : vector<1x1x96xf32> to vector<1x96xf32>
    %220 = vector.broadcast %219 : vector<1x96xf32> to vector<16x96xf32>
    %221 = arith.addf %217, %220 : vector<16x96xf32>
    %222 = vector.extract_strided_slice %27 {offsets = [0, 0], sizes = [1, 8], strides = [1, 1]} : vector<2x8xf32> to vector<1x8xf32>
    %223 = vector.extract_strided_slice %221 {offsets = [0, 0], sizes = [8, 16], strides = [1, 1]} : vector<16x96xf32> to vector<8x16xf32>
    %224 = vector.extract_strided_slice %221 {offsets = [0, 32], sizes = [8, 16], strides = [1, 1]} : vector<16x96xf32> to vector<8x16xf32>
    %225 = vector.extract_strided_slice %221 {offsets = [0, 64], sizes = [8, 16], strides = [1, 1]} : vector<16x96xf32> to vector<8x16xf32>
    %cst_99 = arith.constant dense<0.000000e+00> : vector<8x8xf32>
    %226 = tpu.matmul %223, %224, %cst_99 {dimension_numbers = #tpu.dot_dimension_numbers<[1], [1], [0], [0], [0, 0, 1, 0], [], []>} : vector<8x16xf32>, vector<8x16xf32>, vector<8x8xf32> -> vector<8x8xf32>
    %cst_100 = arith.constant 2.500000e-01 : f32
    %227 = vector.broadcast %cst_100 : f32 to vector<8x8xf32>
    %228 = arith.mulf %226, %227 : vector<8x8xf32>
    %229 = vector.broadcast %222 : vector<1x8xf32> to vector<8x8xf32>
    %230 = arith.addf %228, %229 : vector<8x8xf32>
    %cst_101 = arith.constant dense<0xFF800000> : vector<8xf32>
    %231 = vector.multi_reduction <maximumf>, %230, %cst_101 [1] : vector<8x8xf32> to vector<8xf32>
    %232 = vector.shape_cast %231 : vector<8xf32> to vector<8x1xf32>
    %233 = vector.broadcast %232 : vector<8x1xf32> to vector<8x8xf32>
    %234 = arith.subf %230, %233 : vector<8x8xf32>
    %235 = math.exp %234 : vector<8x8xf32>
    %cst_102 = arith.constant dense<0.000000e+00> : vector<8xf32>
    %236 = vector.multi_reduction <add>, %235, %cst_102 [1] : vector<8x8xf32> to vector<8xf32>
    %237 = vector.shape_cast %236 : vector<8xf32> to vector<8x1xf32>
    %238 = tpu.reciprocal %237 {approx = true} : vector<8x1xf32> -> vector<8x1xf32>
    %239 = vector.broadcast %238 : vector<8x1xf32> to vector<8x8xf32>
    %240 = arith.mulf %235, %239 : vector<8x8xf32>
    %cst_103 = arith.constant dense<0.000000e+00> : vector<8x16xf32>
    %241 = tpu.matmul %240, %225, %cst_103 {dimension_numbers = #tpu.dot_dimension_numbers<[1], [0], [0], [1], [0, 0, 1, 1], [], []>} : vector<8x8xf32>, vector<8x16xf32>, vector<8x16xf32> -> vector<8x16xf32>
    %c0_104 = arith.constant 0 : index
    %c0_105 = arith.constant 0 : index
    %242 = vector.load %arg17[%c0_104, %c0_105] : memref<16x32xf32, #tpu.memory_space<vmem>>, vector<8x16xf32>
    tpu.vector_store %arg17[%c0_104, %c0_105], %241 {strides = array<i32>} : memref<16x32xf32, #tpu.memory_space<vmem>>, vector<8x16xf32>,
    %243 = vector.extract_strided_slice %221 {offsets = [0, 16], sizes = [8, 16], strides = [1, 1]} : vector<16x96xf32> to vector<8x16xf32>
    %244 = vector.extract_strided_slice %221 {offsets = [0, 48], sizes = [8, 16], strides = [1, 1]} : vector<16x96xf32> to vector<8x16xf32>
    %245 = vector.extract_strided_slice %221 {offsets = [0, 80], sizes = [8, 16], strides = [1, 1]} : vector<16x96xf32> to vector<8x16xf32>
    %cst_106 = arith.constant dense<0.000000e+00> : vector<8x8xf32>
    %246 = tpu.matmul %243, %244, %cst_106 {dimension_numbers = #tpu.dot_dimension_numbers<[1], [1], [0], [0], [0, 0, 1, 0], [], []>} : vector<8x16xf32>, vector<8x16xf32>, vector<8x8xf32> -> vector<8x8xf32>
    %cst_107 = arith.constant 2.500000e-01 : f32
    %247 = vector.broadcast %cst_107 : f32 to vector<8x8xf32>
    %248 = arith.mulf %246, %247 : vector<8x8xf32>
    %249 = vector.broadcast %222 : vector<1x8xf32> to vector<8x8xf32>
    %250 = arith.addf %248, %249 : vector<8x8xf32>
    %cst_108 = arith.constant dense<0xFF800000> : vector<8xf32>
    %251 = vector.multi_reduction <maximumf>, %250, %cst_108 [1] : vector<8x8xf32> to vector<8xf32>
    %252 = vector.shape_cast %251 : vector<8xf32> to vector<8x1xf32>
    %253 = vector.broadcast %252 : vector<8x1xf32> to vector<8x8xf32>
    %254 = arith.subf %250, %253 : vector<8x8xf32>
    %255 = math.exp %254 : vector<8x8xf32>
    %cst_109 = arith.constant dense<0.000000e+00> : vector<8xf32>
    %256 = vector.multi_reduction <add>, %255, %cst_109 [1] : vector<8x8xf32> to vector<8xf32>
    %257 = vector.shape_cast %256 : vector<8xf32> to vector<8x1xf32>
    %258 = tpu.reciprocal %257 {approx = true} : vector<8x1xf32> -> vector<8x1xf32>
    %259 = vector.broadcast %258 : vector<8x1xf32> to vector<8x8xf32>
    %260 = arith.mulf %255, %259 : vector<8x8xf32>
    %cst_110 = arith.constant dense<0.000000e+00> : vector<8x16xf32>
    %261 = tpu.matmul %260, %245, %cst_110 {dimension_numbers = #tpu.dot_dimension_numbers<[1], [0], [0], [1], [0, 0, 1, 1], [], []>} : vector<8x8xf32>, vector<8x16xf32>, vector<8x16xf32> -> vector<8x16xf32>
    %c0_111 = arith.constant 0 : index
    %c16_112 = arith.constant 16 : index
    %262 = vector.load %arg17[%c0_111, %c16_112] : memref<16x32xf32, #tpu.memory_space<vmem>>, vector<8x16xf32>
    tpu.vector_store %arg17[%c0_111, %c16_112], %261 {strides = array<i32>} : memref<16x32xf32, #tpu.memory_space<vmem>>, vector<8x16xf32>,
    %263 = vector.extract_strided_slice %27 {offsets = [1, 0], sizes = [1, 8], strides = [1, 1]} : vector<2x8xf32> to vector<1x8xf32>
    %264 = vector.extract_strided_slice %221 {offsets = [8, 0], sizes = [8, 16], strides = [1, 1]} : vector<16x96xf32> to vector<8x16xf32>
    %265 = vector.extract_strided_slice %221 {offsets = [8, 32], sizes = [8, 16], strides = [1, 1]} : vector<16x96xf32> to vector<8x16xf32>
    %266 = vector.extract_strided_slice %221 {offsets = [8, 64], sizes = [8, 16], strides = [1, 1]} : vector<16x96xf32> to vector<8x16xf32>
    %cst_113 = arith.constant dense<0.000000e+00> : vector<8x8xf32>
    %267 = tpu.matmul %264, %265, %cst_113 {dimension_numbers = #tpu.dot_dimension_numbers<[1], [1], [0], [0], [0, 0, 1, 0], [], []>} : vector<8x16xf32>, vector<8x16xf32>, vector<8x8xf32> -> vector<8x8xf32>
    %cst_114 = arith.constant 2.500000e-01 : f32
    %268 = vector.broadcast %cst_114 : f32 to vector<8x8xf32>
    %269 = arith.mulf %267, %268 : vector<8x8xf32>
    %270 = vector.broadcast %263 : vector<1x8xf32> to vector<8x8xf32>
    %271 = arith.addf %269, %270 : vector<8x8xf32>
    %cst_115 = arith.constant dense<0xFF800000> : vector<8xf32>
    %272 = vector.multi_reduction <maximumf>, %271, %cst_115 [1] : vector<8x8xf32> to vector<8xf32>
    %273 = vector.shape_cast %272 : vector<8xf32> to vector<8x1xf32>
    %274 = vector.broadcast %273 : vector<8x1xf32> to vector<8x8xf32>
    %275 = arith.subf %271, %274 : vector<8x8xf32>
    %276 = math.exp %275 : vector<8x8xf32>
    %cst_116 = arith.constant dense<0.000000e+00> : vector<8xf32>
    %277 = vector.multi_reduction <add>, %276, %cst_116 [1] : vector<8x8xf32> to vector<8xf32>
    %278 = vector.shape_cast %277 : vector<8xf32> to vector<8x1xf32>
    %279 = tpu.reciprocal %278 {approx = true} : vector<8x1xf32> -> vector<8x1xf32>
    %280 = vector.broadcast %279 : vector<8x1xf32> to vector<8x8xf32>
    %281 = arith.mulf %276, %280 : vector<8x8xf32>
    %cst_117 = arith.constant dense<0.000000e+00> : vector<8x16xf32>
    %282 = tpu.matmul %281, %266, %cst_117 {dimension_numbers = #tpu.dot_dimension_numbers<[1], [0], [0], [1], [0, 0, 1, 1], [], []>} : vector<8x8xf32>, vector<8x16xf32>, vector<8x16xf32> -> vector<8x16xf32>
    %c8_118 = arith.constant 8 : index
    %c0_119 = arith.constant 0 : index
    %283 = vector.load %arg17[%c8_118, %c0_119] : memref<16x32xf32, #tpu.memory_space<vmem>>, vector<8x16xf32>
    tpu.vector_store %arg17[%c8_118, %c0_119], %282 {strides = array<i32>} : memref<16x32xf32, #tpu.memory_space<vmem>>, vector<8x16xf32>,
    %284 = vector.extract_strided_slice %221 {offsets = [8, 16], sizes = [8, 16], strides = [1, 1]} : vector<16x96xf32> to vector<8x16xf32>
    %285 = vector.extract_strided_slice %221 {offsets = [8, 48], sizes = [8, 16], strides = [1, 1]} : vector<16x96xf32> to vector<8x16xf32>
    %286 = vector.extract_strided_slice %221 {offsets = [8, 80], sizes = [8, 16], strides = [1, 1]} : vector<16x96xf32> to vector<8x16xf32>
    %cst_120 = arith.constant dense<0.000000e+00> : vector<8x8xf32>
    %287 = tpu.matmul %284, %285, %cst_120 {dimension_numbers = #tpu.dot_dimension_numbers<[1], [1], [0], [0], [0, 0, 1, 0], [], []>} : vector<8x16xf32>, vector<8x16xf32>, vector<8x8xf32> -> vector<8x8xf32>
    %cst_121 = arith.constant 2.500000e-01 : f32
    %288 = vector.broadcast %cst_121 : f32 to vector<8x8xf32>
    %289 = arith.mulf %287, %288 : vector<8x8xf32>
    %290 = vector.broadcast %263 : vector<1x8xf32> to vector<8x8xf32>
    %291 = arith.addf %289, %290 : vector<8x8xf32>
    %cst_122 = arith.constant dense<0xFF800000> : vector<8xf32>
    %292 = vector.multi_reduction <maximumf>, %291, %cst_122 [1] : vector<8x8xf32> to vector<8xf32>
    %293 = vector.shape_cast %292 : vector<8xf32> to vector<8x1xf32>
    %294 = vector.broadcast %293 : vector<8x1xf32> to vector<8x8xf32>
    %295 = arith.subf %291, %294 : vector<8x8xf32>
    %296 = math.exp %295 : vector<8x8xf32>
    %cst_123 = arith.constant dense<0.000000e+00> : vector<8xf32>
    %297 = vector.multi_reduction <add>, %296, %cst_123 [1] : vector<8x8xf32> to vector<8xf32>
    %298 = vector.shape_cast %297 : vector<8xf32> to vector<8x1xf32>
    %299 = tpu.reciprocal %298 {approx = true} : vector<8x1xf32> -> vector<8x1xf32>
    %300 = vector.broadcast %299 : vector<8x1xf32> to vector<8x8xf32>
    %301 = arith.mulf %296, %300 : vector<8x8xf32>
    %cst_124 = arith.constant dense<0.000000e+00> : vector<8x16xf32>
    %302 = tpu.matmul %301, %286, %cst_124 {dimension_numbers = #tpu.dot_dimension_numbers<[1], [0], [0], [1], [0, 0, 1, 1], [], []>} : vector<8x8xf32>, vector<8x16xf32>, vector<8x16xf32> -> vector<8x16xf32>
    %c8_125 = arith.constant 8 : index
    %c16_126 = arith.constant 16 : index
    %303 = vector.load %arg17[%c8_125, %c16_126] : memref<16x32xf32, #tpu.memory_space<vmem>>, vector<8x16xf32>
    tpu.vector_store %arg17[%c8_125, %c16_126], %302 {strides = array<i32>} : memref<16x32xf32, #tpu.memory_space<vmem>>, vector<8x16xf32>,
    %c0_127 = arith.constant 0 : index
    %c0_128 = arith.constant 0 : index
    %304 = vector.load %arg17[%c0_127, %c0_128] : memref<16x32xf32, #tpu.memory_space<vmem>>, vector<16x32xf32>
    %c1_129 = arith.constant 1 : index
    %c0_130 = arith.constant 0 : index
    %c0_131 = arith.constant 0 : index
    %305 = vector.load %arg6[%c1_129, %c0_130, %c0_131] : memref<2x32x32xbf16, #tpu.memory_space<vmem>>, vector<1x32x32xbf16>
    %306 = vector.shape_cast %305 : vector<1x32x32xbf16> to vector<32x32xbf16>
    %307 = arith.truncf %304 : vector<16x32xf32> to vector<16x32xbf16>
    %cst_132 = arith.constant dense<0.000000e+00> : vector<16x32xf32>
    %308 = tpu.matmul %307, %306, %cst_132 {dimension_numbers = #tpu.dot_dimension_numbers<[1], [0], [0], [1], [0, 0, 1, 1], [], []>} : vector<16x32xbf16>, vector<32x32xbf16>, vector<16x32xf32> -> vector<16x32xf32>
    %c1_133 = arith.constant 1 : index
    %c0_134 = arith.constant 0 : index
    %c0_135 = arith.constant 0 : index
    %309 = vector.load %arg7[%c1_133, %c0_134, %c0_135] : memref<2x1x32xf32, #tpu.memory_space<vmem>>, vector<1x1x32xf32>
    %310 = vector.shape_cast %309 : vector<1x1x32xf32> to vector<1x32xf32>
    %311 = vector.broadcast %310 : vector<1x32xf32> to vector<16x32xf32>
    %312 = arith.addf %308, %311 : vector<16x32xf32>
    %313 = arith.addf %213, %312 : vector<16x32xf32>
    %c1_136 = arith.constant 1 : index
    %c0_137 = arith.constant 0 : index
    %c0_138 = arith.constant 0 : index
    %314 = vector.load %arg8[%c1_136, %c0_137, %c0_138] : memref<2x1x32xf32, #tpu.memory_space<vmem>>, vector<1x1x32xf32>
    %315 = vector.shape_cast %314 : vector<1x1x32xf32> to vector<1x32xf32>
    %c1_139 = arith.constant 1 : index
    %c0_140 = arith.constant 0 : index
    %c0_141 = arith.constant 0 : index
    %316 = vector.load %arg9[%c1_139, %c0_140, %c0_141] : memref<2x1x32xf32, #tpu.memory_space<vmem>>, vector<1x1x32xf32>
    %317 = vector.shape_cast %316 : vector<1x1x32xf32> to vector<1x32xf32>
    %cst_142 = arith.constant dense<0.000000e+00> : vector<16xf32>
    %318 = vector.multi_reduction <add>, %313, %cst_142 [1] : vector<16x32xf32> to vector<16xf32>
    %319 = vector.shape_cast %318 : vector<16xf32> to vector<16x1xf32>
    %cst_143 = arith.constant 3.200000e+01 : f32
    %320 = vector.broadcast %cst_143 : f32 to vector<16x1xf32>
    %321 = arith.divf %319, %320 : vector<16x1xf32>
    %322 = vector.broadcast %321 : vector<16x1xf32> to vector<16x32xf32>
    %323 = arith.subf %313, %322 : vector<16x32xf32>
    %324 = vector.broadcast %321 : vector<16x1xf32> to vector<16x32xf32>
    %325 = arith.subf %313, %324 : vector<16x32xf32>
    %326 = arith.mulf %323, %325 : vector<16x32xf32>
    %cst_144 = arith.constant dense<0.000000e+00> : vector<16xf32>
    %327 = vector.multi_reduction <add>, %326, %cst_144 [1] : vector<16x32xf32> to vector<16xf32>
    %328 = vector.shape_cast %327 : vector<16xf32> to vector<16x1xf32>
    %cst_145 = arith.constant 3.200000e+01 : f32
    %329 = vector.broadcast %cst_145 : f32 to vector<16x1xf32>
    %330 = arith.divf %328, %329 : vector<16x1xf32>
    %331 = vector.broadcast %321 : vector<16x1xf32> to vector<16x32xf32>
    %332 = arith.subf %313, %331 : vector<16x32xf32>
    %cst_146 = arith.constant 9.99999996E-13 : f32
    %333 = vector.broadcast %cst_146 : f32 to vector<16x1xf32>
    %334 = arith.addf %330, %333 : vector<16x1xf32>
    %335 = math.rsqrt %334 : vector<16x1xf32>
    %336 = vector.broadcast %335 : vector<16x1xf32> to vector<16x32xf32>
    %337 = arith.mulf %332, %336 : vector<16x32xf32>
    %338 = vector.broadcast %315 : vector<1x32xf32> to vector<16x32xf32>
    %339 = arith.mulf %337, %338 : vector<16x32xf32>
    %340 = vector.broadcast %317 : vector<1x32xf32> to vector<16x32xf32>
    %341 = arith.addf %339, %340 : vector<16x32xf32>
    %c1_147 = arith.constant 1 : index
    %c0_148 = arith.constant 0 : index
    %c0_149 = arith.constant 0 : index
    %342 = vector.load %arg10[%c1_147, %c0_148, %c0_149] : memref<2x32x64xbf16, #tpu.memory_space<vmem>>, vector<1x32x64xbf16>
    %343 = vector.shape_cast %342 : vector<1x32x64xbf16> to vector<32x64xbf16>
    %344 = arith.truncf %341 : vector<16x32xf32> to vector<16x32xbf16>
    %cst_150 = arith.constant dense<0.000000e+00> : vector<16x64xf32>
    %345 = tpu.matmul %344, %343, %cst_150 {dimension_numbers = #tpu.dot_dimension_numbers<[1], [0], [0], [1], [0, 0, 1, 1], [], []>} : vector<16x32xbf16>, vector<32x64xbf16>, vector<16x64xf32> -> vector<16x64xf32>
    %c1_151 = arith.constant 1 : index
    %c0_152 = arith.constant 0 : index
    %c0_153 = arith.constant 0 : index
    %346 = vector.load %arg11[%c1_151, %c0_152, %c0_153] : memref<2x1x64xf32, #tpu.memory_space<vmem>>, vector<1x1x64xf32>
    %347 = vector.shape_cast %346 : vector<1x1x64xf32> to vector<1x64xf32>
    %348 = vector.broadcast %347 : vector<1x64xf32> to vector<16x64xf32>
    %349 = arith.addf %345, %348 : vector<16x64xf32>
    %cst_154 = arith.constant 5.000000e-01 : f32
    %350 = vector.broadcast %cst_154 : f32 to vector<16x64xf32>
    %351 = arith.mulf %350, %349 : vector<16x64xf32>
    %cst_155 = arith.constant 4.471500e-02 : f32
    %352 = vector.broadcast %cst_155 : f32 to vector<16x64xf32>
    %353 = arith.mulf %352, %349 : vector<16x64xf32>
    %354 = arith.mulf %353, %349 : vector<16x64xf32>
    %355 = arith.mulf %354, %349 : vector<16x64xf32>
    %356 = arith.addf %349, %355 : vector<16x64xf32>
    %cst_156 = arith.constant 0.797884583 : f32
    %357 = vector.broadcast %cst_156 : f32 to vector<16x64xf32>
    %358 = arith.mulf %357, %356 : vector<16x64xf32>
    %359 = math.tanh %358 : vector<16x64xf32>
    %cst_157 = arith.constant 1.000000e+00 : f32
    %360 = vector.broadcast %cst_157 : f32 to vector<16x64xf32>
    %361 = arith.addf %360, %359 : vector<16x64xf32>
    %362 = arith.mulf %351, %361 : vector<16x64xf32>
    %c1_158 = arith.constant 1 : index
    %c0_159 = arith.constant 0 : index
    %c0_160 = arith.constant 0 : index
    %363 = vector.load %arg12[%c1_158, %c0_159, %c0_160] : memref<2x64x32xbf16, #tpu.memory_space<vmem>>, vector<1x64x32xbf16>
    %364 = vector.shape_cast %363 : vector<1x64x32xbf16> to vector<64x32xbf16>
    %365 = arith.truncf %362 : vector<16x64xf32> to vector<16x64xbf16>
    %cst_161 = arith.constant dense<0.000000e+00> : vector<16x32xf32>
    %366 = tpu.matmul %365, %364, %cst_161 {dimension_numbers = #tpu.dot_dimension_numbers<[1], [0], [0], [1], [0, 0, 1, 1], [], []>} : vector<16x64xbf16>, vector<64x32xbf16>, vector<16x32xf32> -> vector<16x32xf32>
    %c1_162 = arith.constant 1 : index
    %c0_163 = arith.constant 0 : index
    %c0_164 = arith.constant 0 : index
    %367 = vector.load %arg13[%c1_162, %c0_163, %c0_164] : memref<2x1x32xf32, #tpu.memory_space<vmem>>, vector<1x1x32xf32>
    %368 = vector.shape_cast %367 : vector<1x1x32xf32> to vector<1x32xf32>
    %369 = vector.broadcast %368 : vector<1x32xf32> to vector<16x32xf32>
    %370 = arith.addf %366, %369 : vector<16x32xf32>
    %371 = arith.addf %341, %370 : vector<16x32xf32>
    %c1_165 = arith.constant 1 : index
    %c0_166 = arith.constant 0 : index
    %c0_167 = arith.constant 0 : index
    %372 = vector.load %arg14[%c1_165, %c0_166, %c0_167] : memref<2x1x32xf32, #tpu.memory_space<vmem>>, vector<1x1x32xf32>
    %373 = vector.shape_cast %372 : vector<1x1x32xf32> to vector<1x32xf32>
    %c1_168 = arith.constant 1 : index
    %c0_169 = arith.constant 0 : index
    %c0_170 = arith.constant 0 : index
    %374 = vector.load %arg15[%c1_168, %c0_169, %c0_170] : memref<2x1x32xf32, #tpu.memory_space<vmem>>, vector<1x1x32xf32>
    %375 = vector.shape_cast %374 : vector<1x1x32xf32> to vector<1x32xf32>
    %cst_171 = arith.constant dense<0.000000e+00> : vector<16xf32>
    %376 = vector.multi_reduction <add>, %371, %cst_171 [1] : vector<16x32xf32> to vector<16xf32>
    %377 = vector.shape_cast %376 : vector<16xf32> to vector<16x1xf32>
    %cst_172 = arith.constant 3.200000e+01 : f32
    %378 = vector.broadcast %cst_172 : f32 to vector<16x1xf32>
    %379 = arith.divf %377, %378 : vector<16x1xf32>
    %380 = vector.broadcast %379 : vector<16x1xf32> to vector<16x32xf32>
    %381 = arith.subf %371, %380 : vector<16x32xf32>
    %382 = vector.broadcast %379 : vector<16x1xf32> to vector<16x32xf32>
    %383 = arith.subf %371, %382 : vector<16x32xf32>
    %384 = arith.mulf %381, %383 : vector<16x32xf32>
    %cst_173 = arith.constant dense<0.000000e+00> : vector<16xf32>
    %385 = vector.multi_reduction <add>, %384, %cst_173 [1] : vector<16x32xf32> to vector<16xf32>
    %386 = vector.shape_cast %385 : vector<16xf32> to vector<16x1xf32>
    %cst_174 = arith.constant 3.200000e+01 : f32
    %387 = vector.broadcast %cst_174 : f32 to vector<16x1xf32>
    %388 = arith.divf %386, %387 : vector<16x1xf32>
    %389 = vector.broadcast %379 : vector<16x1xf32> to vector<16x32xf32>
    %390 = arith.subf %371, %389 : vector<16x32xf32>
    %cst_175 = arith.constant 9.99999996E-13 : f32
    %391 = vector.broadcast %cst_175 : f32 to vector<16x1xf32>
    %392 = arith.addf %388, %391 : vector<16x1xf32>
    %393 = math.rsqrt %392 : vector<16x1xf32>
    %394 = vector.broadcast %393 : vector<16x1xf32> to vector<16x32xf32>
    %395 = arith.mulf %390, %394 : vector<16x32xf32>
    %396 = vector.broadcast %373 : vector<1x32xf32> to vector<16x32xf32>
    %397 = arith.mulf %395, %396 : vector<16x32xf32>
    %398 = vector.broadcast %375 : vector<1x32xf32> to vector<16x32xf32>
    %399 = arith.addf %397, %398 : vector<16x32xf32>
    %c0_176 = arith.constant 0 : index
    %c0_177 = arith.constant 0 : index
    %400 = vector.load %arg16[%c0_176, %c0_177] : memref<16x32xf32, #tpu.memory_space<vmem>>, vector<16x32xf32>
    tpu.vector_store %arg16[%c0_176, %c0_177], %399 {strides = array<i32>} : memref<16x32xf32, #tpu.memory_space<vmem>>, vector<16x32xf32>,
    return
  }
}

</mosaic_0001>

<llo_original>
// kernel: tpu_custom_call.1
$region0: #{tpu_custom_call.1}
  #allocation0 [shape = 'u32[]', space=smem, size = 0x4, offset = 0x4, fixed_abs, tag = 'smem constant byte address 0x4 - core index']
  #allocation1 [shape = 'u32[144,128]{1,0:T(1,128)}', space=vmem, size = 0x12000, scoped, tag = 'internal scratch']
  #allocation2 [shape = 'f32[16,32]{1,0:T(8,128)}', space=vmem, size = 0x2000, scoped, tag = 'scratch operand']
  %s0 = inlined_call_operand.hbm [shape: f32[16,32], index: 0, kind: input, shape index: {}]
  %s1 = inlined_call_operand.vmem [shape: f32[2,8], index: 1, kind: input, shape index: {}]
  %s2 = inlined_call_operand.vmem [shape: f32[1,32], index: 2, kind: input, shape index: {}]
  %s3 = inlined_call_operand.hbm [shape: f32[1,32], index: 3, kind: input, shape index: {}]
  %s4 = inlined_call_operand.vmem [shape: bf16[2,32,96], index: 4, kind: input, shape index: {}]
  %s5 = inlined_call_operand.vmem [shape: f32[2,1,96], index: 5, kind: input, shape index: {}]
  %s6 = inlined_call_operand.vmem [shape: bf16[2,32,32], index: 6, kind: input, shape index: {}]
  %s7 = inlined_call_operand.vmem [shape: f32[2,1,32], index: 7, kind: input, shape index: {}]
  %s8 = inlined_call_operand.vmem [shape: f32[2,1,32], index: 8, kind: input, shape index: {}]
  %s9 = inlined_call_operand.vmem [shape: f32[2,1,32], index: 9, kind: input, shape index: {}]
  %s10 = inlined_call_operand.vmem [shape: bf16[2,32,64], index: 10, kind: input, shape index: {}]
  %s11 = inlined_call_operand.vmem [shape: f32[2,1,64], index: 11, kind: input, shape index: {}]
  %s12 = inlined_call_operand.vmem [shape: bf16[2,64,32], index: 12, kind: input, shape index: {}]
  %s13 = inlined_call_operand.vmem [shape: f32[2,1,32], index: 13, kind: input, shape index: {}]
  %s14 = inlined_call_operand.vmem [shape: f32[2,1,32], index: 14, kind: input, shape index: {}]
  %s15 = inlined_call_operand.vmem [shape: f32[2,1,32], index: 15, kind: input, shape index: {}]
  %s16 = inlined_call_operand.hbm [shape: f32[16,32], index: 16, kind: output, shape index: {}]
  %s17 = sld [smem:[#allocation0]]
  $region82: #{tpu_custom_call.1} parent=0
    _
  %s19 = ssub.s32 1, %s17
  %s20 = scalar_select 0, %s19, %s17
  $region1: #{tpu_custom_call.1} parent=0
    #allocation3 [shape = 'u8[8192]{0}', space=vmem, size = 0x2000, scoped, tag = 'input window, operand 0, single buffered']
    #allocation4 [shape = 's32[1]{0}', space=sflag, size = 0x4, scoped, tag = 'scoped memory for tpu_custom_call.1']
    #allocation5 [shape = 's32[1]{0}', space=sflag, size = 0x4, scoped, tag = 'scoped memory for tpu_custom_call.1']
    #allocation6 [shape = 'u8[512]{0}', space=vmem, size = 0x400, scoped, tag = 'input window, operand 3, single buffered']
    #allocation7 [shape = 's32[1]{0}', space=sflag, size = 0x4, scoped, tag = 'scoped memory for tpu_custom_call.1']
    #allocation8 [shape = 'u8[8192]{0}', space=vmem, size = 0x2000, scoped, tag = 'output window, operand 0, single buffered']
    %21 = vsyncpa [#allocation4], 0
    %22 = vsyncpa [#allocation7], 0
    %23 = vsyncpa [#allocation5], 0
    // Predicated region
    $region2: #{tpu_custom_call.1} parent=1 // pred_check
      _
    $region3: #{tpu_custom_call.1} parent=1 // pred_check_branch
      %25 = sbr.rel (0) target = $region5
    $region4: #{tpu_custom_call.1} parent=1 // pred_region
      %s27 = ssub.s32 256, 256
      %28 = vsyncadd [#allocation4], %s27
      %s29 = sshll.u32 [#allocation3], 4
      %s30 = int_to_ptr.vmem [resolvable:$true] %s29
      %35 = dma.hbm_to_vmem [thread:$0]  %s0, 256, %s30, [#allocation4], 128, 128, 8
    $region5: #{tpu_custom_call.1} parent=1 // pred_fallthru
      _
    // Predicated region
    $region6: #{tpu_custom_call.1} parent=1 // pred_check
      _
    $region7: #{tpu_custom_call.1} parent=1 // pred_check_branch
      %37 = sbr.rel (0) target = $region9
    $region8: #{tpu_custom_call.1} parent=1 // pred_region
      _
    $region9: #{tpu_custom_call.1} parent=1 // pred_fallthru
      _
    // Predicated region
    $region10: #{tpu_custom_call.1} parent=1 // pred_check
      _
    $region11: #{tpu_custom_call.1} parent=1 // pred_check_branch
      %39 = sbr.rel (0) target = $region13
    $region12: #{tpu_custom_call.1} parent=1 // pred_region
      _
    $region13: #{tpu_custom_call.1} parent=1 // pred_fallthru
      _
    // Predicated region
    $region14: #{tpu_custom_call.1} parent=1 // pred_check
      _
    $region15: #{tpu_custom_call.1} parent=1 // pred_check_branch
      %41 = sbr.rel (0) target = $region17
    $region16: #{tpu_custom_call.1} parent=1 // pred_region
      %s43 = ssub.s32 16, 16
      %44 = vsyncadd [#allocation7], %s43
      %s46 = sshll.u32 [#allocation6], 4
      %s47 = int_to_ptr.vmem [resolvable:$true] %s46
      %49 = dma.hbm_to_vmem [thread:$0]  %s3, 16, %s47, [#allocation7]
    $region17: #{tpu_custom_call.1} parent=1 // pred_fallthru
      _
    // Predicated region
    $region18: #{tpu_custom_call.1} parent=1 // pred_check
      _
    $region19: #{tpu_custom_call.1} parent=1 // pred_check_branch
      %51 = sbr.rel (0) target = $region21
    $region20: #{tpu_custom_call.1} parent=1 // pred_region
      _
    $region21: #{tpu_custom_call.1} parent=1 // pred_fallthru
      _
    // Predicated region
    $region22: #{tpu_custom_call.1} parent=1 // pred_check
      _
    $region23: #{tpu_custom_call.1} parent=1 // pred_check_branch
      %53 = sbr.rel (0) target = $region25
    $region24: #{tpu_custom_call.1} parent=1 // pred_region
      _
    $region25: #{tpu_custom_call.1} parent=1 // pred_fallthru
      _
    // Predicated region
    $region26: #{tpu_custom_call.1} parent=1 // pred_check
      _
    $region27: #{tpu_custom_call.1} parent=1 // pred_check_branch
      %55 = sbr.rel (0) target = $region29
    $region28: #{tpu_custom_call.1} parent=1 // pred_region
      _
    $region29: #{tpu_custom_call.1} parent=1 // pred_fallthru
      _
    // Predicated region
    $region30: #{tpu_custom_call.1} parent=1 // pred_check
      _
    $region31: #{tpu_custom_call.1} parent=1 // pred_check_branch
      %57 = sbr.rel (0) target = $region33
    $region32: #{tpu_custom_call.1} parent=1 // pred_region
      _
    $region33: #{tpu_custom_call.1} parent=1 // pred_fallthru
      _
    // Predicated region
    $region34: #{tpu_custom_call.1} parent=1 // pred_check
      _
    $region35: #{tpu_custom_call.1} parent=1 // pred_check_branch
      %59 = sbr.rel (0) target = $region37
    $region36: #{tpu_custom_call.1} parent=1 // pred_region
      _
    $region37: #{tpu_custom_call.1} parent=1 // pred_fallthru
      _
    // Predicated region
    $region38: #{tpu_custom_call.1} parent=1 // pred_check
      _
    $region39: #{tpu_custom_call.1} parent=1 // pred_check_branch
      %61 = sbr.rel (0) target = $region41
    $region40: #{tpu_custom_call.1} parent=1 // pred_region
      _
    $region41: #{tpu_custom_call.1} parent=1 // pred_fallthru
      _
    // Predicated region
    $region42: #{tpu_custom_call.1} parent=1 // pred_check
      _
    $region43: #{tpu_custom_call.1} parent=1 // pred_check_branch
      %63 = sbr.rel (0) target = $region45
    $region44: #{tpu_custom_call.1} parent=1 // pred_region
      _
    $region45: #{tpu_custom_call.1} parent=1 // pred_fallthru
      _
    // Predicated region
    $region46: #{tpu_custom_call.1} parent=1 // pred_check
      _
    $region47: #{tpu_custom_call.1} parent=1 // pred_check_branch
      %65 = sbr.rel (0) target = $region49
    $region48: #{tpu_custom_call.1} parent=1 // pred_region
      _
    $region49: #{tpu_custom_call.1} parent=1 // pred_fallthru
      _
    // Predicated region
    $region50: #{tpu_custom_call.1} parent=1 // pred_check
      _
    $region51: #{tpu_custom_call.1} parent=1 // pred_check_branch
      %67 = sbr.rel (0) target = $region53
    $region52: #{tpu_custom_call.1} parent=1 // pred_region
      _
    $region53: #{tpu_custom_call.1} parent=1 // pred_fallthru
      _
    // Predicated region
    $region54: #{tpu_custom_call.1} parent=1 // pred_check
      _
    $region55: #{tpu_custom_call.1} parent=1 // pred_check_branch
      %69 = sbr.rel (0) target = $region57
    $region56: #{tpu_custom_call.1} parent=1 // pred_region
      _
    $region57: #{tpu_custom_call.1} parent=1 // pred_fallthru
      _
    // Predicated region
    $region58: #{tpu_custom_call.1} parent=1 // pred_check
      _
    $region59: #{tpu_custom_call.1} parent=1 // pred_check_branch
      %71 = sbr.rel (0) target = $region61
    $region60: #{tpu_custom_call.1} parent=1 // pred_region
      _
    $region61: #{tpu_custom_call.1} parent=1 // pred_fallthru
      _
    // Predicated region
    $region62: #{tpu_custom_call.1} parent=1 // pred_check
      _
    $region63: #{tpu_custom_call.1} parent=1 // pred_check_branch
      %73 = sbr.rel (0) target = $region65
    $region64: #{tpu_custom_call.1} parent=1 // pred_region
      _
    $region65: #{tpu_custom_call.1} parent=1 // pred_fallthru
      _
    // Predicated region
    $region66: #{tpu_custom_call.1} parent=1 // pred_check
      _
    $region67: #{tpu_custom_call.1} parent=1 // pred_check_branch
      %75 = sbr.rel (0) target = $region69
    $region68: #{tpu_custom_call.1} parent=1 // pred_region
      %76 = dma.done [#allocation4], 256
    $region69: #{tpu_custom_call.1} parent=1 // pred_fallthru
      _
    // Predicated region
    $region70: #{tpu_custom_call.1} parent=1 // pred_check
      _
    $region71: #{tpu_custom_call.1} parent=1 // pred_check_branch
      %78 = sbr.rel (0) target = $region73
    $region72: #{tpu_custom_call.1} parent=1 // pred_region
      %79 = dma.done [#allocation7], 16
    $region73: #{tpu_custom_call.1} parent=1 // pred_fallthru
      _
    %v81 = vld [vmem:[#allocation3] sm:$0xff]
    %v82 = vld [vmem:[#allocation3 + $0x8] sm:$0xff]
    %v83 = vld [vmem:[%s2] sm:$0x1]
    %v84 = vld [vmem:[#allocation6] sm:$0x1]
    %vm85 = vcmask 261120
    %v86 = vsel %vm85, %v81, 0.0
    %87 = vadd.xlane.f32.xlu0 %v86
    %v88 = vpop.xlane.xlu0 %87
    %v89 = vsel %vm85, %v82, 0.0
    %90 = vadd.xlane.f32.xlu0 %v89
    %v91 = vpop.xlane.xlu0 %90
    %v92 = vrcp.pop 32.0
    %v93 = vmul.f32 %v88, %v92
    %v94 = vmul.f32 %v91, %v92
    %v95 = vsub.f32 %v81, %v93
    %v96 = vsub.f32 %v82, %v94
    %v97 = vmul.f32 %v95, %v95
    %v98 = vmul.f32 %v96, %v96
    %v99 = vsel %vm85, %v97, 0.0
    %100 = vadd.xlane.f32.xlu0 %v99
    %v101 = vpop.xlane.xlu0 %100
    %v102 = vsel %vm85, %v98, 0.0
    %103 = vadd.xlane.f32.xlu0 %v102
    %v104 = vpop.xlane.xlu0 %103
    %v105 = vmul.f32 %v101, %v92
    %v106 = vmul.f32 %v104, %v92
    %v107 = vadd.f32 %v105, 1e-12
    %v108 = vadd.f32 %v106, 1e-12
    %v109 = vrsqrt.pop %v107
    %v110 = vrsqrt.pop %v108
    %v111 = vmul.f32 %v95, %v109
    %v112 = vmul.f32 %v96, %v110
    %v114 = vlaneseq
    %v115 = vshrl.u32 %v114, 7
    %v116 = vsub.s32 0, %v115
    %v117 = vrot.slane %v83, %v116
    %v119 = vmul.f32 %v111, %v117
    %v120 = vmul.f32 %v112, %v117
    %v122 = vlaneseq
    %v123 = vshrl.u32 %v122, 7
    %v124 = vsub.s32 0, %v123
    %v125 = vrot.slane %v84, %v124
    %v127 = vadd.f32 %v119, %v125
    %v128 = vadd.f32 %v120, %v125
    %v129 = vld [vmem:[%s1] sm:$0x3]
    %v130 = vld [vmem:[%s4] sm:$0xf]
    %v131 = vld [vmem:[%s4 + $0x4] sm:$0xf]
    %v132 = vld [vmem:[%s4 + $0x8] sm:$0xf]
    %v133 = vld [vmem:[%s4 + $0xc] sm:$0xf]
    %v134 = vpack.c.bf16 %v128, %v127
    %v135 = vld [vmem:[%s5] sm:$0x1]
    %v137 = vlaneseq
    %v138 = vshrl.u32 %v137, 7
    %v139 = vsub.s32 0, %v138
    %v140 = vrot.slane %v135, %v139
    %v146 = vunpack.c.l.b16 %v130
    %v147 = vunpack.c.l.b16 %v131
    %v148 = vunpack.c.l.b16 %v132
    %v149 = vunpack.c.l.b16 %v133
    %v150 = vpack.c.b16 %v147, %v146
    %v151 = vpack.c.b16 %v149, %v148
    %v155 = vsel %vm85, %v134, 0
    %157 = vmatprep.subr.bf16.mxu0 0
    %158 = vmatpush1.bf16.msra.mxu0 %v150
    %159 = vmatprep.subr.bf16.mxu0 0
    %160 = vmatpush1.bf16.msra.mxu0 %v151
    %161 = vmatprep.subr.bf16.mxu0 0
    %162 = vmatpush1.bf16.msra.mxu0 0
    %163 = vmatprep.subr.bf16.mxu0 0
    %164 = vmatpush1.bf16.msra.mxu0 0
    %165 = vmatprep.subr.bf16.mxu0 0
    %166 = vmatpush1.bf16.msra.mxu0 0
    %167 = vmatprep.subr.bf16.mxu0 0
    %168 = vmatpush1.bf16.msra.mxu0 0
    %169 = vmatprep.subr.bf16.mxu0 0
    %170 = vmatpush1.bf16.msra.mxu0 0
    %171 = vmatprep.subr.bf16.mxu0 0
    %172 = vmatpush1.bf16.msra.mxu0 0
    %173 = vmatprep.subr.bf16.mxu0 0
    %174 = vmatpush1.bf16.msra.mxu0 0
    %175 = vmatprep.subr.bf16.mxu0 0
    %176 = vmatpush1.bf16.msra.mxu0 0
    %177 = vmatprep.subr.bf16.mxu0 0
    %178 = vmatpush1.bf16.msra.mxu0 0
    %179 = vmatprep.subr.bf16.mxu0 0
    %180 = vmatpush1.bf16.msra.mxu0 0
    %181 = vmatprep.subr.bf16.mxu0 0
    %182 = vmatpush1.bf16.msra.mxu0 0
    %183 = vmatprep.subr.bf16.mxu0 0
    %184 = vmatpush1.bf16.msra.mxu0 0
    %185 = vmatprep.subr.bf16.mxu0 0
    %186 = vmatpush1.bf16.msra.mxu0 0
    %187 = vmatprep.subr.bf16.mxu0 0
    %188 = vmatpush1.bf16.msra.mxu0 0
    %189 = vmatprep.mubr.bf16.mxu0 0
    %190 = vmatmul.mubr.bf16.gmra.mrb[0].mxu0 %v155
    %v191 = vpop.f32.mrb[0].mxu0
    %v192 = vadd.f32 %v140, %v191
    %v193 = vpop.f32.mrb[0].mxu0
    %v194 = vpop.f32.mrb[0].mxu0
    %v195 = vadd.f32 %v140, %v194
    %v196 = vpop.f32.mrb[0].mxu0
    %197 = vdwg.mxu0
    %199 = vrot.lane.b32.xlu0 %v192, 96
    %v200 = vpop.permute.xlu0 %199
    %vm201 = vcmask 130048
    %v202 = vsel %vm201, %v192, 0
    %v204 = vsel %vm201, %v200, 0
    %206 = vmatprep.subr.mxu0 0.0
    %207 = vmatpush1.xpose.msra.mxu0 %v204
    %208 = vmatprep.subr.mxu0 0.0
    %209 = vmatpush1.xpose.msra.mxu0 0.0
    %210 = vmatprep.subr.mxu0 0.0
    %211 = vmatpush1.xpose.msra.mxu0 0.0
    %212 = vmatprep.subr.mxu0 0.0
    %213 = vmatpush1.xpose.msra.mxu0 0.0
    %214 = vmatprep.subr.mxu0 0.0
    %215 = vmatpush1.xpose.msra.mxu0 0.0
    %216 = vmatprep.subr.mxu0 0.0
    %217 = vmatpush1.xpose.msra.mxu0 0.0
    %218 = vmatprep.subr.mxu0 0.0
    %219 = vmatpush1.xpose.msra.mxu0 0.0
    %220 = vmatprep.subr.mxu0 0.0
    %221 = vmatpush1.xpose.msra.mxu0 0.0
    %222 = vmatprep.subr.mxu0 0.0
    %223 = vmatpush1.xpose.msra.mxu0 0.0
    %224 = vmatprep.subr.mxu0 0.0
    %225 = vmatpush1.xpose.msra.mxu0 0.0
    %226 = vmatprep.subr.mxu0 0.0
    %227 = vmatpush1.xpose.msra.mxu0 0.0
    %228 = vmatprep.subr.mxu0 0.0
    %229 = vmatpush1.xpose.msra.mxu0 0.0
    %230 = vmatprep.subr.mxu0 0.0
    %231 = vmatpush1.xpose.msra.mxu0 0.0
    %232 = vmatprep.subr.mxu0 0.0
    %233 = vmatpush1.xpose.msra.mxu0 0.0
    %234 = vmatprep.subr.mxu0 0.0
    %235 = vmatpush1.xpose.msra.mxu0 0.0
    %236 = vmatprep.subr.mxu0 0.0
    %237 = vmatpush1.xpose.msra.mxu0 0.0
    %238 = vmatprep.subr.mxu0 0.0
    %239 = vmatpush1.xpose.msra.mxu0 0.0
    %240 = vmatprep.subr.mxu0 0.0
    %241 = vmatpush1.xpose.msra.mxu0 0.0
    %242 = vmatprep.subr.mxu0 0.0
    %243 = vmatpush1.xpose.msra.mxu0 0.0
    %244 = vmatprep.subr.mxu0 0.0
    %245 = vmatpush1.xpose.msra.mxu0 0.0
    %246 = vmatprep.subr.mxu0 0.0
    %247 = vmatpush1.xpose.msra.mxu0 0.0
    %248 = vmatprep.subr.mxu0 0.0
    %249 = vmatpush1.xpose.msra.mxu0 0.0
    %250 = vmatprep.subr.mxu0 0.0
    %251 = vmatpush1.xpose.msra.mxu0 0.0
    %252 = vmatprep.subr.mxu0 0.0
    %253 = vmatpush1.xpose.msra.mxu0 0.0
    %254 = vmatprep.subr.mxu0 0.0
    %255 = vmatpush1.xpose.msra.mxu0 0.0
    %256 = vmatprep.subr.mxu0 0.0
    %257 = vmatpush1.xpose.msra.mxu0 0.0
    %258 = vmatprep.subr.mxu0 0.0
    %259 = vmatpush1.xpose.msra.mxu0 0.0
    %260 = vmatprep.subr.mxu0 0.0
    %261 = vmatpush1.xpose.msra.mxu0 0.0
    %262 = vmatprep.subr.mxu0 0.0
    %263 = vmatpush1.xpose.msra.mxu0 0.0
    %264 = vmatprep.subr.mxu0 0.0
    %265 = vmatpush1.xpose.msra.mxu0 0.0
    %266 = vmatprep.subr.mxu0 0.0
    %267 = vmatpush1.xpose.msra.mxu0 0.0
    %268 = vmatprep.subr.mxu0 0.0
    %269 = vmatpush1.xpose.msra.mxu0 0.0
    %270 = vmatprep.mubr.f32.mxu0 0.0
    %271 = vmatmul.mubr.f32.gmra.mrb[0].mxu0 %v202
    %v272 = vpop.f32.mrb[0].mxu0
    %v273 = vadd.f32 0.0, %v272
    %v274 = vpop.f32.mrb[0].mxu0
    %275 = vdwg.mxu0
    %v276 = vmul.f32 %v273, 0.25
    %v277 = vlaneseq
    %v278 = vshrl.u32 %v277, 7
    %v279 = vsub.s32 0, %v278
    %v280 = vrot.slane %v129, %v279
    %v281 = vadd.f32 %v276, %v280
    %vm282 = vcmask 64512
    %v283 = vsel %vm282, %v281, -inf
    %284 = vmax.xlane.f32.xlu0 %v283
    %v285 = vpop.xlane.xlu0 %284
    %v286 = vsub.f32 %v281, %v285
    %v287 = vmul.f32 %v286, 1.442695
    %v288 = vpow.pop %v287
    %v289 = vsel %vm282, %v288, 0.0
    %290 = vadd.xlane.f32.xlu0 %v289
    %v291 = vpop.xlane.xlu0 %290
    %v292 = vrcp.pop %v291
    %v293 = vmul.f32 %v288, %v292
    %294 = vrot.lane.b32.xlu0 %v192, 64
    %v295 = vpop.permute.xlu0 %294
    %v298 = vsel %vm282, %v293, 0
    %300 = vmatprep.subr.mxu0 0.0
    %301 = vmatpush1.msra.mxu0 %v295
    %302 = vmatprep.subr.mxu0 0.0
    %303 = vmatpush1.msra.mxu0 0.0
    %304 = vmatprep.subr.mxu0 0.0
    %305 = vmatpush1.msra.mxu0 0.0
    %306 = vmatprep.subr.mxu0 0.0
    %307 = vmatpush1.msra.mxu0 0.0
    %308 = vmatprep.subr.mxu0 0.0
    %309 = vmatpush1.msra.mxu0 0.0
    %310 = vmatprep.subr.mxu0 0.0
    %311 = vmatpush1.msra.mxu0 0.0
    %312 = vmatprep.subr.mxu0 0.0
    %313 = vmatpush1.msra.mxu0 0.0
    %314 = vmatprep.subr.mxu0 0.0
    %315 = vmatpush1.msra.mxu0 0.0
    %316 = vmatprep.subr.mxu0 0.0
    %317 = vmatpush1.msra.mxu0 0.0
    %318 = vmatprep.subr.mxu0 0.0
    %319 = vmatpush1.msra.mxu0 0.0
    %320 = vmatprep.subr.mxu0 0.0
    %321 = vmatpush1.msra.mxu0 0.0
    %322 = vmatprep.subr.mxu0 0.0
    %323 = vmatpush1.msra.mxu0 0.0
    %324 = vmatprep.subr.mxu0 0.0
    %325 = vmatpush1.msra.mxu0 0.0
    %326 = vmatprep.subr.mxu0 0.0
    %327 = vmatpush1.msra.mxu0 0.0
    %328 = vmatprep.subr.mxu0 0.0
    %329 = vmatpush1.msra.mxu0 0.0
    %330 = vmatprep.subr.mxu0 0.0
    %331 = vmatpush1.msra.mxu0 0.0
    %332 = vmatprep.subr.mxu0 0.0
    %333 = vmatpush1.msra.mxu0 0.0
    %334 = vmatprep.subr.mxu0 0.0
    %335 = vmatpush1.msra.mxu0 0.0
    %336 = vmatprep.subr.mxu0 0.0
    %337 = vmatpush1.msra.mxu0 0.0
    %338 = vmatprep.subr.mxu0 0.0
    %339 = vmatpush1.msra.mxu0 0.0
    %340 = vmatprep.subr.mxu0 0.0
    %341 = vmatpush1.msra.mxu0 0.0
    %342 = vmatprep.subr.mxu0 0.0
    %343 = vmatpush1.msra.mxu0 0.0
    %344 = vmatprep.subr.mxu0 0.0
    %345 = vmatpush1.msra.mxu0 0.0
    %346 = vmatprep.subr.mxu0 0.0
    %347 = vmatpush1.msra.mxu0 0.0
    %348 = vmatprep.subr.mxu0 0.0
    %349 = vmatpush1.msra.mxu0 0.0
    %350 = vmatprep.subr.mxu0 0.0
    %351 = vmatpush1.msra.mxu0 0.0
    %352 = vmatprep.subr.mxu0 0.0
    %353 = vmatpush1.msra.mxu0 0.0
    %354 = vmatprep.subr.mxu0 0.0
    %355 = vmatpush1.msra.mxu0 0.0
    %356 = vmatprep.subr.mxu0 0.0
    %357 = vmatpush1.msra.mxu0 0.0
    %358 = vmatprep.subr.mxu0 0.0
    %359 = vmatpush1.msra.mxu0 0.0
    %360 = vmatprep.subr.mxu0 0.0
    %361 = vmatpush1.msra.mxu0 0.0
    %362 = vmatprep.subr.mxu0 0.0
    %363 = vmatpush1.msra.mxu0 0.0
    %364 = vmatprep.mubr.f32.mxu0 0.0
    %365 = vmatmul.mubr.f32.gmra.mrb[0].mxu0 %v298
    %v366 = vpop.f32.mrb[0].mxu0
    %v367 = vadd.f32 0.0, %v366
    %v368 = vpop.f32.mrb[0].mxu0
    %369 = vdwg.mxu0
    %370 = vst.msk [vmem:[#allocation2] sm:$0xff] %vm201, %v367
    %371 = vrot.lane.b32.xlu0 %v192, 112
    %v372 = vpop.permute.xlu0 %371
    %373 = vrot.lane.b32.xlu0 %v192, 80
    %v374 = vpop.permute.xlu0 %373
    %v375 = vsel %vm201, %v372, 0
    %v377 = vsel %vm201, %v374, 0
    %379 = vmatprep.subr.mxu0 0.0
    %380 = vmatpush1.xpose.msra.mxu0 %v377
    %381 = vmatprep.subr.mxu0 0.0
    %382 = vmatpush1.xpose.msra.mxu0 0.0
    %383 = vmatprep.subr.mxu0 0.0
    %384 = vmatpush1.xpose.msra.mxu0 0.0
    %385 = vmatprep.subr.mxu0 0.0
    %386 = vmatpush1.xpose.msra.mxu0 0.0
    %387 = vmatprep.subr.mxu0 0.0
    %388 = vmatpush1.xpose.msra.mxu0 0.0
    %389 = vmatprep.subr.mxu0 0.0
    %390 = vmatpush1.xpose.msra.mxu0 0.0
    %391 = vmatprep.subr.mxu0 0.0
    %392 = vmatpush1.xpose.msra.mxu0 0.0
    %393 = vmatprep.subr.mxu0 0.0
    %394 = vmatpush1.xpose.msra.mxu0 0.0
    %395 = vmatprep.subr.mxu0 0.0
    %396 = vmatpush1.xpose.msra.mxu0 0.0
    %397 = vmatprep.subr.mxu0 0.0
    %398 = vmatpush1.xpose.msra.mxu0 0.0
    %399 = vmatprep.subr.mxu0 0.0
    %400 = vmatpush1.xpose.msra.mxu0 0.0
    %401 = vmatprep.subr.mxu0 0.0
    %402 = vmatpush1.xpose.msra.mxu0 0.0
    %403 = vmatprep.subr.mxu0 0.0
    %404 = vmatpush1.xpose.msra.mxu0 0.0
    %405 = vmatprep.subr.mxu0 0.0
    %406 = vmatpush1.xpose.msra.mxu0 0.0
    %407 = vmatprep.subr.mxu0 0.0
    %408 = vmatpush1.xpose.msra.mxu0 0.0
    %409 = vmatprep.subr.mxu0 0.0
    %410 = vmatpush1.xpose.msra.mxu0 0.0
    %411 = vmatprep.subr.mxu0 0.0
    %412 = vmatpush1.xpose.msra.mxu0 0.0
    %413 = vmatprep.subr.mxu0 0.0
    %414 = vmatpush1.xpose.msra.mxu0 0.0
    %415 = vmatprep.subr.mxu0 0.0
    %416 = vmatpush1.xpose.msra.mxu0 0.0
    %417 = vmatprep.subr.mxu0 0.0
    %418 = vmatpush1.xpose.msra.mxu0 0.0
    %419 = vmatprep.subr.mxu0 0.0
    %420 = vmatpush1.xpose.msra.mxu0 0.0
    %421 = vmatprep.subr.mxu0 0.0
    %422 = vmatpush1.xpose.msra.mxu0 0.0
    %423 = vmatprep.subr.mxu0 0.0
    %424 = vmatpush1.xpose.msra.mxu0 0.0
    %425 = vmatprep.subr.mxu0 0.0
    %426 = vmatpush1.xpose.msra.mxu0 0.0
    %427 = vmatprep.subr.mxu0 0.0
    %428 = vmatpush1.xpose.msra.mxu0 0.0
    %429 = vmatprep.subr.mxu0 0.0
    %430 = vmatpush1.xpose.msra.mxu0 0.0
    %431 = vmatprep.subr.mxu0 0.0
    %432 = vmatpush1.xpose.msra.mxu0 0.0
    %433 = vmatprep.subr.mxu0 0.0
    %434 = vmatpush1.xpose.msra.mxu0 0.0
    %435 = vmatprep.subr.mxu0 0.0
    %436 = vmatpush1.xpose.msra.mxu0 0.0
    %437 = vmatprep.subr.mxu0 0.0
    %438 = vmatpush1.xpose.msra.mxu0 0.0
    %439 = vmatprep.subr.mxu0 0.0
    %440 = vmatpush1.xpose.msra.mxu0 0.0
    %441 = vmatprep.subr.mxu0 0.0
    %442 = vmatpush1.xpose.msra.mxu0 0.0
    %443 = vmatprep.mubr.f32.mxu0 0.0
    %444 = vmatmul.mubr.f32.gmra.mrb[0].mxu0 %v375
    %v445 = vpop.f32.mrb[0].mxu0
    %v446 = vadd.f32 0.0, %v445
    %v447 = vpop.f32.mrb[0].mxu0
    %448 = vdwg.mxu0
    %v449 = vmul.f32 %v446, 0.25
    %v450 = vadd.f32 %v449, %v280
    %v451 = vsel %vm282, %v450, -inf
    %452 = vmax.xlane.f32.xlu0 %v451
    %v453 = vpop.xlane.xlu0 %452
    %v454 = vsub.f32 %v450, %v453
    %v455 = vmul.f32 %v454, 1.442695
    %v456 = vpow.pop %v455
    %v457 = vsel %vm282, %v456, 0.0
    %458 = vadd.xlane.f32.xlu0 %v457
    %v459 = vpop.xlane.xlu0 %458
    %v460 = vrcp.pop %v459
    %v461 = vmul.f32 %v456, %v460
    %462 = vrot.lane.b32.xlu0 %v192, 48
    %v463 = vpop.permute.xlu0 %462
    %v466 = vsel %vm282, %v461, 0
    %468 = vmatprep.subr.mxu0 0.0
    %469 = vmatpush1.msra.mxu0 %v463
    %470 = vmatprep.subr.mxu0 0.0
    %471 = vmatpush1.msra.mxu0 0.0
    %472 = vmatprep.subr.mxu0 0.0
    %473 = vmatpush1.msra.mxu0 0.0
    %474 = vmatprep.subr.mxu0 0.0
    %475 = vmatpush1.msra.mxu0 0.0
    %476 = vmatprep.subr.mxu0 0.0
    %477 = vmatpush1.msra.mxu0 0.0
    %478 = vmatprep.subr.mxu0 0.0
    %479 = vmatpush1.msra.mxu0 0.0
    %480 = vmatprep.subr.mxu0 0.0
    %481 = vmatpush1.msra.mxu0 0.0
    %482 = vmatprep.subr.mxu0 0.0
    %483 = vmatpush1.msra.mxu0 0.0
    %484 = vmatprep.subr.mxu0 0.0
    %485 = vmatpush1.msra.mxu0 0.0
    %486 = vmatprep.subr.mxu0 0.0
    %487 = vmatpush1.msra.mxu0 0.0
    %488 = vmatprep.subr.mxu0 0.0
    %489 = vmatpush1.msra.mxu0 0.0
    %490 = vmatprep.subr.mxu0 0.0
    %491 = vmatpush1.msra.mxu0 0.0
    %492 = vmatprep.subr.mxu0 0.0
    %493 = vmatpush1.msra.mxu0 0.0
    %494 = vmatprep.subr.mxu0 0.0
    %495 = vmatpush1.msra.mxu0 0.0
    %496 = vmatprep.subr.mxu0 0.0
    %497 = vmatpush1.msra.mxu0 0.0
    %498 = vmatprep.subr.mxu0 0.0
    %499 = vmatpush1.msra.mxu0 0.0
    %500 = vmatprep.subr.mxu0 0.0
    %501 = vmatpush1.msra.mxu0 0.0
    %502 = vmatprep.subr.mxu0 0.0
    %503 = vmatpush1.msra.mxu0 0.0
    %504 = vmatprep.subr.mxu0 0.0
    %505 = vmatpush1.msra.mxu0 0.0
    %506 = vmatprep.subr.mxu0 0.0
    %507 = vmatpush1.msra.mxu0 0.0
    %508 = vmatprep.subr.mxu0 0.0
    %509 = vmatpush1.msra.mxu0 0.0
    %510 = vmatprep.subr.mxu0 0.0
    %511 = vmatpush1.msra.mxu0 0.0
    %512 = vmatprep.subr.mxu0 0.0
    %513 = vmatpush1.msra.mxu0 0.0
    %514 = vmatprep.subr.mxu0 0.0
    %515 = vmatpush1.msra.mxu0 0.0
    %516 = vmatprep.subr.mxu0 0.0
    %517 = vmatpush1.msra.mxu0 0.0
    %518 = vmatprep.subr.mxu0 0.0
    %519 = vmatpush1.msra.mxu0 0.0
    %520 = vmatprep.subr.mxu0 0.0
    %521 = vmatpush1.msra.mxu0 0.0
    %522 = vmatprep.subr.mxu0 0.0
    %523 = vmatpush1.msra.mxu0 0.0
    %524 = vmatprep.subr.mxu0 0.0
    %525 = vmatpush1.msra.mxu0 0.0
    %526 = vmatprep.subr.mxu0 0.0
    %527 = vmatpush1.msra.mxu0 0.0
    %528 = vmatprep.subr.mxu0 0.0
    %529 = vmatpush1.msra.mxu0 0.0
    %530 = vmatprep.subr.mxu0 0.0
    %531 = vmatpush1.msra.mxu0 0.0
    %532 = vmatprep.mubr.f32.mxu0 0.0
    %533 = vmatmul.mubr.f32.gmra.mrb[0].mxu0 %v466
    %v534 = vpop.f32.mrb[0].mxu0
    %v535 = vadd.f32 0.0, %v534
    %v536 = vpop.f32.mrb[0].mxu0
    %537 = vdwg.mxu0
    %539 = vrot.lane.b32.xlu0 %v535, 16
    %v540 = vpop.permute.xlu0 %539
    %vm542 = vcmask 261248
    %543 = vst.msk [vmem:[#allocation2] sm:$0xff] %vm542, %v540
    %545 = vrot.lane.b32.xlu0 %v195, 96
    %v546 = vpop.permute.xlu0 %545
    %v547 = vsel %vm201, %v195, 0
    %v549 = vsel %vm201, %v546, 0
    %551 = vmatprep.subr.mxu0 0.0
    %552 = vmatpush1.xpose.msra.mxu0 %v549
    %553 = vmatprep.subr.mxu0 0.0
    %554 = vmatpush1.xpose.msra.mxu0 0.0
    %555 = vmatprep.subr.mxu0 0.0
    %556 = vmatpush1.xpose.msra.mxu0 0.0
    %557 = vmatprep.subr.mxu0 0.0
    %558 = vmatpush1.xpose.msra.mxu0 0.0
    %559 = vmatprep.subr.mxu0 0.0
    %560 = vmatpush1.xpose.msra.mxu0 0.0
    %561 = vmatprep.subr.mxu0 0.0
    %562 = vmatpush1.xpose.msra.mxu0 0.0
    %563 = vmatprep.subr.mxu0 0.0
    %564 = vmatpush1.xpose.msra.mxu0 0.0
    %565 = vmatprep.subr.mxu0 0.0
    %566 = vmatpush1.xpose.msra.mxu0 0.0
    %567 = vmatprep.subr.mxu0 0.0
    %568 = vmatpush1.xpose.msra.mxu0 0.0
    %569 = vmatprep.subr.mxu0 0.0
    %570 = vmatpush1.xpose.msra.mxu0 0.0
    %571 = vmatprep.subr.mxu0 0.0
    %572 = vmatpush1.xpose.msra.mxu0 0.0
    %573 = vmatprep.subr.mxu0 0.0
    %574 = vmatpush1.xpose.msra.mxu0 0.0
    %575 = vmatprep.subr.mxu0 0.0
    %576 = vmatpush1.xpose.msra.mxu0 0.0
    %577 = vmatprep.subr.mxu0 0.0
    %578 = vmatpush1.xpose.msra.mxu0 0.0
    %579 = vmatprep.subr.mxu0 0.0
    %580 = vmatpush1.xpose.msra.mxu0 0.0
    %581 = vmatprep.subr.mxu0 0.0
    %582 = vmatpush1.xpose.msra.mxu0 0.0
    %583 = vmatprep.subr.mxu0 0.0
    %584 = vmatpush1.xpose.msra.mxu0 0.0
    %585 = vmatprep.subr.mxu0 0.0
    %586 = vmatpush1.xpose.msra.mxu0 0.0
    %587 = vmatprep.subr.mxu0 0.0
    %588 = vmatpush1.xpose.msra.mxu0 0.0
    %589 = vmatprep.subr.mxu0 0.0
    %590 = vmatpush1.xpose.msra.mxu0 0.0
    %591 = vmatprep.subr.mxu0 0.0
    %592 = vmatpush1.xpose.msra.mxu0 0.0
    %593 = vmatprep.subr.mxu0 0.0
    %594 = vmatpush1.xpose.msra.mxu0 0.0
    %595 = vmatprep.subr.mxu0 0.0
    %596 = vmatpush1.xpose.msra.mxu0 0.0
    %597 = vmatprep.subr.mxu0 0.0
    %598 = vmatpush1.xpose.msra.mxu0 0.0
    %599 = vmatprep.subr.mxu0 0.0
    %600 = vmatpush1.xpose.msra.mxu0 0.0
    %601 = vmatprep.subr.mxu0 0.0
    %602 = vmatpush1.xpose.msra.mxu0 0.0
    %603 = vmatprep.subr.mxu0 0.0
    %604 = vmatpush1.xpose.msra.mxu0 0.0
    %605 = vmatprep.subr.mxu0 0.0
    %606 = vmatpush1.xpose.msra.mxu0 0.0
    %607 = vmatprep.subr.mxu0 0.0
    %608 = vmatpush1.xpose.msra.mxu0 0.0
    %609 = vmatprep.subr.mxu0 0.0
    %610 = vmatpush1.xpose.msra.mxu0 0.0
    %611 = vmatprep.subr.mxu0 0.0
    %612 = vmatpush1.xpose.msra.mxu0 0.0
    %613 = vmatprep.subr.mxu0 0.0
    %614 = vmatpush1.xpose.msra.mxu0 0.0
    %615 = vmatprep.mubr.f32.mxu0 0.0
    %616 = vmatmul.mubr.f32.gmra.mrb[0].mxu0 %v547
    %v617 = vpop.f32.mrb[0].mxu0
    %v618 = vadd.f32 0.0, %v617
    %v619 = vpop.f32.mrb[0].mxu0
    %620 = vdwg.mxu0
    %v621 = vmul.f32 %v618, 0.25
    %v622 = vlaneseq
    %v623 = vshrl.u32 %v622, 7
    %v624 = vsub.s32 1, %v623
    %v625 = vrot.slane %v129, %v624
    %v626 = vadd.f32 %v621, %v625
    %v627 = vsel %vm282, %v626, -inf
    %628 = vmax.xlane.f32.xlu0 %v627
    %v629 = vpop.xlane.xlu0 %628
    %v630 = vsub.f32 %v626, %v629
    %v631 = vmul.f32 %v630, 1.442695
    %v632 = vpow.pop %v631
    %v633 = vsel %vm282, %v632, 0.0
    %634 = vadd.xlane.f32.xlu0 %v633
    %v635 = vpop.xlane.xlu0 %634
    %v636 = vrcp.pop %v635
    %v637 = vmul.f32 %v632, %v636
    %638 = vrot.lane.b32.xlu0 %v195, 64
    %v639 = vpop.permute.xlu0 %638
    %v642 = vsel %vm282, %v637, 0
    %644 = vmatprep.subr.mxu0 0.0
    %645 = vmatpush1.msra.mxu0 %v639
    %646 = vmatprep.subr.mxu0 0.0
    %647 = vmatpush1.msra.mxu0 0.0
    %648 = vmatprep.subr.mxu0 0.0
    %649 = vmatpush1.msra.mxu0 0.0
    %650 = vmatprep.subr.mxu0 0.0
    %651 = vmatpush1.msra.mxu0 0.0
    %652 = vmatprep.subr.mxu0 0.0
    %653 = vmatpush1.msra.mxu0 0.0
    %654 = vmatprep.subr.mxu0 0.0
    %655 = vmatpush1.msra.mxu0 0.0
    %656 = vmatprep.subr.mxu0 0.0
    %657 = vmatpush1.msra.mxu0 0.0
    %658 = vmatprep.subr.mxu0 0.0
    %659 = vmatpush1.msra.mxu0 0.0
    %660 = vmatprep.subr.mxu0 0.0
    %661 = vmatpush1.msra.mxu0 0.0
    %662 = vmatprep.subr.mxu0 0.0
    %663 = vmatpush1.msra.mxu0 0.0
    %664 = vmatprep.subr.mxu0 0.0
    %665 = vmatpush1.msra.mxu0 0.0
    %666 = vmatprep.subr.mxu0 0.0
    %667 = vmatpush1.msra.mxu0 0.0
    %668 = vmatprep.subr.mxu0 0.0
    %669 = vmatpush1.msra.mxu0 0.0
    %670 = vmatprep.subr.mxu0 0.0
    %671 = vmatpush1.msra.mxu0 0.0
    %672 = vmatprep.subr.mxu0 0.0
    %673 = vmatpush1.msra.mxu0 0.0
    %674 = vmatprep.subr.mxu0 0.0
    %675 = vmatpush1.msra.mxu0 0.0
    %676 = vmatprep.subr.mxu0 0.0
    %677 = vmatpush1.msra.mxu0 0.0
    %678 = vmatprep.subr.mxu0 0.0
    %679 = vmatpush1.msra.mxu0 0.0
    %680 = vmatprep.subr.mxu0 0.0
    %681 = vmatpush1.msra.mxu0 0.0
    %682 = vmatprep.subr.mxu0 0.0
    %683 = vmatpush1.msra.mxu0 0.0
    %684 = vmatprep.subr.mxu0 0.0
    %685 = vmatpush1.msra.mxu0 0.0
    %686 = vmatprep.subr.mxu0 0.0
    %687 = vmatpush1.msra.mxu0 0.0
    %688 = vmatprep.subr.mxu0 0.0
    %689 = vmatpush1.msra.mxu0 0.0
    %690 = vmatprep.subr.mxu0 0.0
    %691 = vmatpush1.msra.mxu0 0.0
    %692 = vmatprep.subr.mxu0 0.0
    %693 = vmatpush1.msra.mxu0 0.0
    %694 = vmatprep.subr.mxu0 0.0
    %695 = vmatpush1.msra.mxu0 0.0
    %696 = vmatprep.subr.mxu0 0.0
    %697 = vmatpush1.msra.mxu0 0.0
    %698 = vmatprep.subr.mxu0 0.0
    %699 = vmatpush1.msra.mxu0 0.0
    %700 = vmatprep.subr.mxu0 0.0
    %701 = vmatpush1.msra.mxu0 0.0
    %702 = vmatprep.subr.mxu0 0.0
    %703 = vmatpush1.msra.mxu0 0.0
    %704 = vmatprep.subr.mxu0 0.0
    %705 = vmatpush1.msra.mxu0 0.0
    %706 = vmatprep.subr.mxu0 0.0
    %707 = vmatpush1.msra.mxu0 0.0
    %708 = vmatprep.mubr.f32.mxu0 0.0
    %709 = vmatmul.mubr.f32.gmra.mrb[0].mxu0 %v642
    %v710 = vpop.f32.mrb[0].mxu0
    %v711 = vadd.f32 0.0, %v710
    %v712 = vpop.f32.mrb[0].mxu0
    %713 = vdwg.mxu0
    %714 = vst.msk [vmem:[#allocation2 + $0x8] sm:$0xff] %vm201, %v711
    %715 = vrot.lane.b32.xlu0 %v195, 112
    %v716 = vpop.permute.xlu0 %715
    %717 = vrot.lane.b32.xlu0 %v195, 80
    %v718 = vpop.permute.xlu0 %717
    %v719 = vsel %vm201, %v716, 0
    %v721 = vsel %vm201, %v718, 0
    %723 = vmatprep.subr.mxu0 0.0
    %724 = vmatpush1.xpose.msra.mxu0 %v721
    %725 = vmatprep.subr.mxu0 0.0
    %726 = vmatpush1.xpose.msra.mxu0 0.0
    %727 = vmatprep.subr.mxu0 0.0
    %728 = vmatpush1.xpose.msra.mxu0 0.0
    %729 = vmatprep.subr.mxu0 0.0
    %730 = vmatpush1.xpose.msra.mxu0 0.0
    %731 = vmatprep.subr.mxu0 0.0
    %732 = vmatpush1.xpose.msra.mxu0 0.0
    %733 = vmatprep.subr.mxu0 0.0
    %734 = vmatpush1.xpose.msra.mxu0 0.0
    %735 = vmatprep.subr.mxu0 0.0
    %736 = vmatpush1.xpose.msra.mxu0 0.0
    %737 = vmatprep.subr.mxu0 0.0
    %738 = vmatpush1.xpose.msra.mxu0 0.0
    %739 = vmatprep.subr.mxu0 0.0
    %740 = vmatpush1.xpose.msra.mxu0 0.0
    %741 = vmatprep.subr.mxu0 0.0
    %742 = vmatpush1.xpose.msra.mxu0 0.0
    %743 = vmatprep.subr.mxu0 0.0
    %744 = vmatpush1.xpose.msra.mxu0 0.0
    %745 = vmatprep.subr.mxu0 0.0
    %746 = vmatpush1.xpose.msra.mxu0 0.0
    %747 = vmatprep.subr.mxu0 0.0
    %748 = vmatpush1.xpose.msra.mxu0 0.0
    %749 = vmatprep.subr.mxu0 0.0
    %750 = vmatpush1.xpose.msra.mxu0 0.0
    %751 = vmatprep.subr.mxu0 0.0
    %752 = vmatpush1.xpose.msra.mxu0 0.0
    %753 = vmatprep.subr.mxu0 0.0
    %754 = vmatpush1.xpose.msra.mxu0 0.0
    %755 = vmatprep.subr.mxu0 0.0
    %756 = vmatpush1.xpose.msra.mxu0 0.0
    %757 = vmatprep.subr.mxu0 0.0
    %758 = vmatpush1.xpose.msra.mxu0 0.0
    %759 = vmatprep.subr.mxu0 0.0
    %760 = vmatpush1.xpose.msra.mxu0 0.0
    %761 = vmatprep.subr.mxu0 0.0
    %762 = vmatpush1.xpose.msra.mxu0 0.0
    %763 = vmatprep.subr.mxu0 0.0
    %764 = vmatpush1.xpose.msra.mxu0 0.0
    %765 = vmatprep.subr.mxu0 0.0
    %766 = vmatpush1.xpose.msra.mxu0 0.0
    %767 = vmatprep.subr.mxu0 0.0
    %768 = vmatpush1.xpose.msra.mxu0 0.0
    %769 = vmatprep.subr.mxu0 0.0
    %770 = vmatpush1.xpose.msra.mxu0 0.0
    %771 = vmatprep.subr.mxu0 0.0
    %772 = vmatpush1.xpose.msra.mxu0 0.0
    %773 = vmatprep.subr.mxu0 0.0
    %774 = vmatpush1.xpose.msra.mxu0 0.0
    %775 = vmatprep.subr.mxu0 0.0
    %776 = vmatpush1.xpose.msra.mxu0 0.0
    %777 = vmatprep.subr.mxu0 0.0
    %778 = vmatpush1.xpose.msra.mxu0 0.0
    %779 = vmatprep.subr.mxu0 0.0
    %780 = vmatpush1.xpose.msra.mxu0 0.0
    %781 = vmatprep.subr.mxu0 0.0
    %782 = vmatpush1.xpose.msra.mxu0 0.0
    %783 = vmatprep.subr.mxu0 0.0
    %784 = vmatpush1.xpose.msra.mxu0 0.0
    %785 = vmatprep.subr.mxu0 0.0
    %786 = vmatpush1.xpose.msra.mxu0 0.0
    %787 = vmatprep.mubr.f32.mxu0 0.0
    %788 = vmatmul.mubr.f32.gmra.mrb[0].mxu0 %v719
    %v789 = vpop.f32.mrb[0].mxu0
    %v790 = vadd.f32 0.0, %v789
    %v791 = vpop.f32.mrb[0].mxu0
    %792 = vdwg.mxu0
    %v793 = vmul.f32 %v790, 0.25
    %v794 = vadd.f32 %v793, %v625
    %v795 = vsel %vm282, %v794, -inf
    %796 = vmax.xlane.f32.xlu0 %v795
    %v797 = vpop.xlane.xlu0 %796
    %v798 = vsub.f32 %v794, %v797
    %v799 = vmul.f32 %v798, 1.442695
    %v800 = vpow.pop %v799
    %v801 = vsel %vm282, %v800, 0.0
    %802 = vadd.xlane.f32.xlu0 %v801
    %v803 = vpop.xlane.xlu0 %802
    %v804 = vrcp.pop %v803
    %v805 = vmul.f32 %v800, %v804
    %806 = vrot.lane.b32.xlu0 %v195, 48
    %v807 = vpop.permute.xlu0 %806
    %v810 = vsel %vm282, %v805, 0
    %812 = vmatprep.subr.mxu0 0.0
    %813 = vmatpush1.msra.mxu0 %v807
    %814 = vmatprep.subr.mxu0 0.0
    %815 = vmatpush1.msra.mxu0 0.0
    %816 = vmatprep.subr.mxu0 0.0
    %817 = vmatpush1.msra.mxu0 0.0
    %818 = vmatprep.subr.mxu0 0.0
    %819 = vmatpush1.msra.mxu0 0.0
    %820 = vmatprep.subr.mxu0 0.0
    %821 = vmatpush1.msra.mxu0 0.0
    %822 = vmatprep.subr.mxu0 0.0
    %823 = vmatpush1.msra.mxu0 0.0
    %824 = vmatprep.subr.mxu0 0.0
    %825 = vmatpush1.msra.mxu0 0.0
    %826 = vmatprep.subr.mxu0 0.0
    %827 = vmatpush1.msra.mxu0 0.0
    %828 = vmatprep.subr.mxu0 0.0
    %829 = vmatpush1.msra.mxu0 0.0
    %830 = vmatprep.subr.mxu0 0.0
    %831 = vmatpush1.msra.mxu0 0.0
    %832 = vmatprep.subr.mxu0 0.0
    %833 = vmatpush1.msra.mxu0 0.0
    %834 = vmatprep.subr.mxu0 0.0
    %835 = vmatpush1.msra.mxu0 0.0
    %836 = vmatprep.subr.mxu0 0.0
    %837 = vmatpush1.msra.mxu0 0.0
    %838 = vmatprep.subr.mxu0 0.0
    %839 = vmatpush1.msra.mxu0 0.0
    %840 = vmatprep.subr.mxu0 0.0
    %841 = vmatpush1.msra.mxu0 0.0
    %842 = vmatprep.subr.mxu0 0.0
    %843 = vmatpush1.msra.mxu0 0.0
    %844 = vmatprep.subr.mxu0 0.0
    %845 = vmatpush1.msra.mxu0 0.0
    %846 = vmatprep.subr.mxu0 0.0
    %847 = vmatpush1.msra.mxu0 0.0
    %848 = vmatprep.subr.mxu0 0.0
    %849 = vmatpush1.msra.mxu0 0.0
    %850 = vmatprep.subr.mxu0 0.0
    %851 = vmatpush1.msra.mxu0 0.0
    %852 = vmatprep.subr.mxu0 0.0
    %853 = vmatpush1.msra.mxu0 0.0
    %854 = vmatprep.subr.mxu0 0.0
    %855 = vmatpush1.msra.mxu0 0.0
    %856 = vmatprep.subr.mxu0 0.0
    %857 = vmatpush1.msra.mxu0 0.0
    %858 = vmatprep.subr.mxu0 0.0
    %859 = vmatpush1.msra.mxu0 0.0
    %860 = vmatprep.subr.mxu0 0.0
    %861 = vmatpush1.msra.mxu0 0.0
    %862 = vmatprep.subr.mxu0 0.0
    %863 = vmatpush1.msra.mxu0 0.0
    %864 = vmatprep.subr.mxu0 0.0
    %865 = vmatpush1.msra.mxu0 0.0
    %866 = vmatprep.subr.mxu0 0.0
    %867 = vmatpush1.msra.mxu0 0.0
    %868 = vmatprep.subr.mxu0 0.0
    %869 = vmatpush1.msra.mxu0 0.0
    %870 = vmatprep.subr.mxu0 0.0
    %871 = vmatpush1.msra.mxu0 0.0
    %872 = vmatprep.subr.mxu0 0.0
    %873 = vmatpush1.msra.mxu0 0.0
    %874 = vmatprep.subr.mxu0 0.0
    %875 = vmatpush1.msra.mxu0 0.0
    %876 = vmatprep.mubr.f32.mxu0 0.0
    %877 = vmatmul.mubr.f32.gmra.mrb[0].mxu0 %v810
    %v878 = vpop.f32.mrb[0].mxu0
    %v879 = vadd.f32 0.0, %v878
    %v880 = vpop.f32.mrb[0].mxu0
    %881 = vdwg.mxu0
    %883 = vrot.lane.b32.xlu0 %v879, 16
    %v884 = vpop.permute.xlu0 %883
    %886 = vst.msk [vmem:[#allocation2 + $0x8] sm:$0xff] %vm542, %v884
    %v887 = vld [vmem:[#allocation2] sm:$0xff]
    %v888 = vld [vmem:[#allocation2 + $0x8] sm:$0xff]
    %v889 = vld [vmem:[%s6] sm:$0xf]
    %v890 = vld [vmem:[%s6 + $0x4] sm:$0xf]
    %v891 = vld [vmem:[%s6 + $0x8] sm:$0xf]
    %v892 = vld [vmem:[%s6 + $0xc] sm:$0xf]
    %v893 = vpack.c.bf16 %v888, %v887
    %v894 = vld [vmem:[%s7] sm:$0x1]
    %v896 = vlaneseq
    %v897 = vshrl.u32 %v896, 7
    %v898 = vsub.s32 0, %v897
    %v899 = vrot.slane %v894, %v898
    %v905 = vunpack.c.l.b16 %v889
    %v906 = vunpack.c.l.b16 %v890
    %v907 = vunpack.c.l.b16 %v891
    %v908 = vunpack.c.l.b16 %v892
    %v909 = vpack.c.b16 %v906, %v905
    %v910 = vpack.c.b16 %v908, %v907
    %v914 = vsel %vm85, %v893, 0
    %916 = vmatprep.subr.bf16.mxu0 0
    %917 = vmatpush1.bf16.msra.mxu0 %v909
    %918 = vmatprep.subr.bf16.mxu0 0
    %919 = vmatpush1.bf16.msra.mxu0 %v910
    %920 = vmatprep.subr.bf16.mxu0 0
    %921 = vmatpush1.bf16.msra.mxu0 0
    %922 = vmatprep.subr.bf16.mxu0 0
    %923 = vmatpush1.bf16.msra.mxu0 0
    %924 = vmatprep.subr.bf16.mxu0 0
    %925 = vmatpush1.bf16.msra.mxu0 0
    %926 = vmatprep.subr.bf16.mxu0 0
    %927 = vmatpush1.bf16.msra.mxu0 0
    %928 = vmatprep.subr.bf16.mxu0 0
    %929 = vmatpush1.bf16.msra.mxu0 0
    %930 = vmatprep.subr.bf16.mxu0 0
    %931 = vmatpush1.bf16.msra.mxu0 0
    %932 = vmatprep.subr.bf16.mxu0 0
    %933 = vmatpush1.bf16.msra.mxu0 0
    %934 = vmatprep.subr.bf16.mxu0 0
    %935 = vmatpush1.bf16.msra.mxu0 0
    %936 = vmatprep.subr.bf16.mxu0 0
    %937 = vmatpush1.bf16.msra.mxu0 0
    %938 = vmatprep.subr.bf16.mxu0 0
    %939 = vmatpush1.bf16.msra.mxu0 0
    %940 = vmatprep.subr.bf16.mxu0 0
    %941 = vmatpush1.bf16.msra.mxu0 0
    %942 = vmatprep.subr.bf16.mxu0 0
    %943 = vmatpush1.bf16.msra.mxu0 0
    %944 = vmatprep.subr.bf16.mxu0 0
    %945 = vmatpush1.bf16.msra.mxu0 0
    %946 = vmatprep.subr.bf16.mxu0 0
    %947 = vmatpush1.bf16.msra.mxu0 0
    %948 = vmatprep.mubr.bf16.mxu0 0
    %949 = vmatmul.mubr.bf16.gmra.mrb[0].mxu0 %v914
    %v950 = vpop.f32.mrb[0].mxu0
    %v951 = vadd.f32 %v899, %v950
    %v952 = vpop.f32.mrb[0].mxu0
    %v953 = vpop.f32.mrb[0].mxu0
    %v954 = vadd.f32 %v899, %v953
    %v955 = vpop.f32.mrb[0].mxu0
    %956 = vdwg.mxu0
    %v957 = vadd.f32 %v127, %v951
    %v958 = vadd.f32 %v128, %v954
    %v959 = vld [vmem:[%s8] sm:$0x1]
    %v960 = vld [vmem:[%s9] sm:$0x1]
    %v961 = vsel %vm85, %v957, 0.0
    %962 = vadd.xlane.f32.xlu0 %v961
    %v963 = vpop.xlane.xlu0 %962
    %v964 = vsel %vm85, %v958, 0.0
    %965 = vadd.xlane.f32.xlu0 %v964
    %v966 = vpop.xlane.xlu0 %965
    %v967 = vmul.f32 %v963, %v92
    %v968 = vmul.f32 %v966, %v92
    %v969 = vsub.f32 %v957, %v967
    %v970 = vsub.f32 %v958, %v968
    %v971 = vmul.f32 %v969, %v969
    %v972 = vmul.f32 %v970, %v970
    %v973 = vsel %vm85, %v971, 0.0
    %974 = vadd.xlane.f32.xlu0 %v973
    %v975 = vpop.xlane.xlu0 %974
    %v976 = vsel %vm85, %v972, 0.0
    %977 = vadd.xlane.f32.xlu0 %v976
    %v978 = vpop.xlane.xlu0 %977
    %v979 = vmul.f32 %v975, %v92
    %v980 = vmul.f32 %v978, %v92
    %v981 = vadd.f32 %v979, 1e-12
    %v982 = vadd.f32 %v980, 1e-12
    %v983 = vrsqrt.pop %v981
    %v984 = vrsqrt.pop %v982
    %v985 = vmul.f32 %v969, %v983
    %v986 = vmul.f32 %v970, %v984
    %v988 = vlaneseq
    %v989 = vshrl.u32 %v988, 7
    %v990 = vsub.s32 0, %v989
    %v991 = vrot.slane %v959, %v990
    %v993 = vmul.f32 %v985, %v991
    %v994 = vmul.f32 %v986, %v991
    %v996 = vlaneseq
    %v997 = vshrl.u32 %v996, 7
    %v998 = vsub.s32 0, %v997
    %v999 = vrot.slane %v960, %v998
    %v1001 = vadd.f32 %v993, %v999
    %v1002 = vadd.f32 %v994, %v999
    %v1003 = vld [vmem:[%s10] sm:$0xf]
    %v1004 = vld [vmem:[%s10 + $0x4] sm:$0xf]
    %v1005 = vld [vmem:[%s10 + $0x8] sm:$0xf]
    %v1006 = vld [vmem:[%s10 + $0xc] sm:$0xf]
    %v1007 = vpack.c.bf16 %v1002, %v1001
    %v1008 = vld [vmem:[%s11] sm:$0x1]
    %v1010 = vlaneseq
    %v1011 = vshrl.u32 %v1010, 7
    %v1012 = vsub.s32 0, %v1011
    %v1013 = vrot.slane %v1008, %v1012
    %v1019 = vunpack.c.l.b16 %v1003
    %v1020 = vunpack.c.l.b16 %v1004
    %v1021 = vunpack.c.l.b16 %v1005
    %v1022 = vunpack.c.l.b16 %v1006
    %v1023 = vpack.c.b16 %v1020, %v1019
    %v1024 = vpack.c.b16 %v1022, %v1021
    %v1028 = vsel %vm85, %v1007, 0
    %1030 = vmatprep.subr.bf16.mxu0 0
    %1031 = vmatpush1.bf16.msra.mxu0 %v1023
    %1032 = vmatprep.subr.bf16.mxu0 0
    %1033 = vmatpush1.bf16.msra.mxu0 %v1024
    %1034 = vmatprep.subr.bf16.mxu0 0
    %1035 = vmatpush1.bf16.msra.mxu0 0
    %1036 = vmatprep.subr.bf16.mxu0 0
    %1037 = vmatpush1.bf16.msra.mxu0 0
    %1038 = vmatprep.subr.bf16.mxu0 0
    %1039 = vmatpush1.bf16.msra.mxu0 0
    %1040 = vmatprep.subr.bf16.mxu0 0
    %1041 = vmatpush1.bf16.msra.mxu0 0
    %1042 = vmatprep.subr.bf16.mxu0 0
    %1043 = vmatpush1.bf16.msra.mxu0 0
    %1044 = vmatprep.subr.bf16.mxu0 0
    %1045 = vmatpush1.bf16.msra.mxu0 0
    %1046 = vmatprep.subr.bf16.mxu0 0
    %1047 = vmatpush1.bf16.msra.mxu0 0
    %1048 = vmatprep.subr.bf16.mxu0 0
    %1049 = vmatpush1.bf16.msra.mxu0 0
    %1050 = vmatprep.subr.bf16.mxu0 0
    %1051 = vmatpush1.bf16.msra.mxu0 0
    %1052 = vmatprep.subr.bf16.mxu0 0
    %1053 = vmatpush1.bf16.msra.mxu0 0
    %1054 = vmatprep.subr.bf16.mxu0 0
    %1055 = vmatpush1.bf16.msra.mxu0 0
    %1056 = vmatprep.subr.bf16.mxu0 0
    %1057 = vmatpush1.bf16.msra.mxu0 0
    %1058 = vmatprep.subr.bf16.mxu0 0
    %1059 = vmatpush1.bf16.msra.mxu0 0
    %1060 = vmatprep.subr.bf16.mxu0 0
    %1061 = vmatpush1.bf16.msra.mxu0 0
    %1062 = vmatprep.mubr.bf16.mxu0 0
    %1063 = vmatmul.mubr.bf16.gmra.mrb[0].mxu0 %v1028
    %v1064 = vpop.f32.mrb[0].mxu0
    %v1065 = vadd.f32 %v1013, %v1064
    %v1066 = vpop.f32.mrb[0].mxu0
    %v1067 = vpop.f32.mrb[0].mxu0
    %v1068 = vadd.f32 %v1013, %v1067
    %v1069 = vpop.f32.mrb[0].mxu0
    %1070 = vdwg.mxu0
    %v1071 = vmul.f32 %v1065, 0.5
    %v1072 = vmul.f32 %v1068, 0.5
    %v1073 = vmul.f32 %v1065, 0.044715
    %v1074 = vmul.f32 %v1068, 0.044715
    %v1075 = vmul.f32 %v1073, %v1065
    %v1076 = vmul.f32 %v1074, %v1068
    %v1077 = vmul.f32 %v1075, %v1065
    %v1078 = vmul.f32 %v1076, %v1068
    %v1079 = vadd.f32 %v1065, %v1077
    %v1080 = vadd.f32 %v1068, %v1078
    %v1081 = vmul.f32 %v1079, 0.7978846
    %v1082 = vmul.f32 %v1080, 0.7978846
    %v1083 = vtanh.pop %v1081
    %v1084 = vtanh.pop %v1082
    %v1085 = vadd.f32 %v1083, 1.0
    %v1086 = vadd.f32 %v1084, 1.0
    %v1087 = vmul.f32 %v1071, %v1085
    %v1088 = vmul.f32 %v1072, %v1086
    %v1089 = vld [vmem:[%s12] sm:$0xf]
    %v1090 = vld [vmem:[%s12 + $0x4] sm:$0xf]
    %v1091 = vld [vmem:[%s12 + $0x8] sm:$0xf]
    %v1092 = vld [vmem:[%s12 + $0xc] sm:$0xf]
    %v1093 = vld [vmem:[%s12 + $0x10] sm:$0xf]
    %v1094 = vld [vmem:[%s12 + $0x14] sm:$0xf]
    %v1095 = vld [vmem:[%s12 + $0x18] sm:$0xf]
    %v1096 = vld [vmem:[%s12 + $0x1c] sm:$0xf]
    %v1097 = vpack.c.bf16 %v1088, %v1087
    %v1098 = vld [vmem:[%s13] sm:$0x1]
    %v1100 = vlaneseq
    %v1101 = vshrl.u32 %v1100, 7
    %v1102 = vsub.s32 0, %v1101
    %v1103 = vrot.slane %v1098, %v1102
    %v1113 = vunpack.c.l.b16 %v1089
    %v1114 = vunpack.c.l.b16 %v1090
    %v1115 = vunpack.c.l.b16 %v1091
    %v1116 = vunpack.c.l.b16 %v1092
    %v1117 = vunpack.c.l.b16 %v1093
    %v1118 = vunpack.c.l.b16 %v1094
    %v1119 = vunpack.c.l.b16 %v1095
    %v1120 = vunpack.c.l.b16 %v1096
    %v1121 = vpack.c.b16 %v1114, %v1113
    %v1122 = vpack.c.b16 %v1116, %v1115
    %v1123 = vpack.c.b16 %v1118, %v1117
    %v1124 = vpack.c.b16 %v1120, %v1119
    %vm1129 = vcmask 523264
    %v1131 = vsel %vm1129, %v1097, 0
    %1133 = vmatprep.subr.bf16.mxu0 0
    %1134 = vmatpush1.bf16.msra.mxu0 %v1121
    %1135 = vmatprep.subr.bf16.mxu0 0
    %1136 = vmatpush1.bf16.msra.mxu0 %v1122
    %1137 = vmatprep.subr.bf16.mxu0 0
    %1138 = vmatpush1.bf16.msra.mxu0 %v1123
    %1139 = vmatprep.subr.bf16.mxu0 0
    %1140 = vmatpush1.bf16.msra.mxu0 %v1124
    %1141 = vmatprep.subr.bf16.mxu0 0
    %1142 = vmatpush1.bf16.msra.mxu0 0
    %1143 = vmatprep.subr.bf16.mxu0 0
    %1144 = vmatpush1.bf16.msra.mxu0 0
    %1145 = vmatprep.subr.bf16.mxu0 0
    %1146 = vmatpush1.bf16.msra.mxu0 0
    %1147 = vmatprep.subr.bf16.mxu0 0
    %1148 = vmatpush1.bf16.msra.mxu0 0
    %1149 = vmatprep.subr.bf16.mxu0 0
    %1150 = vmatpush1.bf16.msra.mxu0 0
    %1151 = vmatprep.subr.bf16.mxu0 0
    %1152 = vmatpush1.bf16.msra.mxu0 0
    %1153 = vmatprep.subr.bf16.mxu0 0
    %1154 = vmatpush1.bf16.msra.mxu0 0
    %1155 = vmatprep.subr.bf16.mxu0 0
    %1156 = vmatpush1.bf16.msra.mxu0 0
    %1157 = vmatprep.subr.bf16.mxu0 0
    %1158 = vmatpush1.bf16.msra.mxu0 0
    %1159 = vmatprep.subr.bf16.mxu0 0
    %1160 = vmatpush1.bf16.msra.mxu0 0
    %1161 = vmatprep.subr.bf16.mxu0 0
    %1162 = vmatpush1.bf16.msra.mxu0 0
    %1163 = vmatprep.subr.bf16.mxu0 0
    %1164 = vmatpush1.bf16.msra.mxu0 0
    %1165 = vmatprep.mubr.bf16.mxu0 0
    %1166 = vmatmul.mubr.bf16.gmra.mrb[0].mxu0 %v1131
    %v1167 = vpop.f32.mrb[0].mxu0
    %v1168 = vadd.f32 %v1103, %v1167
    %v1169 = vpop.f32.mrb[0].mxu0
    %v1170 = vpop.f32.mrb[0].mxu0
    %v1171 = vadd.f32 %v1103, %v1170
    %v1172 = vpop.f32.mrb[0].mxu0
    %1173 = vdwg.mxu0
    %v1174 = vadd.f32 %v1001, %v1168
    %v1175 = vadd.f32 %v1002, %v1171
    %v1176 = vld [vmem:[%s14] sm:$0x1]
    %v1177 = vld [vmem:[%s15] sm:$0x1]
    %v1178 = vsel %vm85, %v1174, 0.0
    %1179 = vadd.xlane.f32.xlu0 %v1178
    %v1180 = vpop.xlane.xlu0 %1179
    %v1181 = vsel %vm85, %v1175, 0.0
    %1182 = vadd.xlane.f32.xlu0 %v1181
    %v1183 = vpop.xlane.xlu0 %1182
    %v1184 = vmul.f32 %v1180, %v92
    %v1185 = vmul.f32 %v1183, %v92
    %v1186 = vsub.f32 %v1174, %v1184
    %v1187 = vsub.f32 %v1175, %v1185
    %v1188 = vmul.f32 %v1186, %v1186
    %v1189 = vmul.f32 %v1187, %v1187
    %v1190 = vsel %vm85, %v1188, 0.0
    %1191 = vadd.xlane.f32.xlu0 %v1190
    %v1192 = vpop.xlane.xlu0 %1191
    %v1193 = vsel %vm85, %v1189, 0.0
    %1194 = vadd.xlane.f32.xlu0 %v1193
    %v1195 = vpop.xlane.xlu0 %1194
    %v1196 = vmul.f32 %v1192, %v92
    %v1197 = vmul.f32 %v1195, %v92
    %v1198 = vadd.f32 %v1196, 1e-12
    %v1199 = vadd.f32 %v1197, 1e-12
    %v1200 = vrsqrt.pop %v1198
    %v1201 = vrsqrt.pop %v1199
    %v1202 = vmul.f32 %v1186, %v1200
    %v1203 = vmul.f32 %v1187, %v1201
    %v1205 = vlaneseq
    %v1206 = vshrl.u32 %v1205, 7
    %v1207 = vsub.s32 0, %v1206
    %v1208 = vrot.slane %v1176, %v1207
    %v1210 = vmul.f32 %v1202, %v1208
    %v1211 = vmul.f32 %v1203, %v1208
    %v1213 = vlaneseq
    %v1214 = vshrl.u32 %v1213, 7
    %v1215 = vsub.s32 0, %v1214
    %v1216 = vrot.slane %v1177, %v1215
    %v1218 = vadd.f32 %v1210, %v1216
    %v1219 = vadd.f32 %v1211, %v1216
    %s1220 = scalar_lea.vmem %s4, 16
    %v1221 = vld [vmem:[%s1220] sm:$0xf]
    %v1222 = vld [vmem:[%s1220 + $0x4] sm:$0xf]
    %v1223 = vld [vmem:[%s1220 + $0x8] sm:$0xf]
    %v1224 = vld [vmem:[%s1220 + $0xc] sm:$0xf]
    %v1225 = vpack.c.bf16 %v1219, %v1218
    %s1226 = scalar_lea.vmem %s5, 1
    %v1227 = vld [vmem:[%s1226] sm:$0x1]
    %v1229 = vlaneseq
    %v1230 = vshrl.u32 %v1229, 7
    %v1231 = vsub.s32 0, %v1230
    %v1232 = vrot.slane %v1227, %v1231
    %v1238 = vunpack.c.l.b16 %v1221
    %v1239 = vunpack.c.l.b16 %v1222
    %v1240 = vunpack.c.l.b16 %v1223
    %v1241 = vunpack.c.l.b16 %v1224
    %v1242 = vpack.c.b16 %v1239, %v1238
    %v1243 = vpack.c.b16 %v1241, %v1240
    %v1247 = vsel %vm85, %v1225, 0
    %1249 = vmatprep.subr.bf16.mxu0 0
    %1250 = vmatpush1.bf16.msra.mxu0 %v1242
    %1251 = vmatprep.subr.bf16.mxu0 0
    %1252 = vmatpush1.bf16.msra.mxu0 %v1243
    %1253 = vmatprep.subr.bf16.mxu0 0
    %1254 = vmatpush1.bf16.msra.mxu0 0
    %1255 = vmatprep.subr.bf16.mxu0 0
    %1256 = vmatpush1.bf16.msra.mxu0 0
    %1257 = vmatprep.subr.bf16.mxu0 0
    %1258 = vmatpush1.bf16.msra.mxu0 0
    %1259 = vmatprep.subr.bf16.mxu0 0
    %1260 = vmatpush1.bf16.msra.mxu0 0
    %1261 = vmatprep.subr.bf16.mxu0 0
    %1262 = vmatpush1.bf16.msra.mxu0 0
    %1263 = vmatprep.subr.bf16.mxu0 0
    %1264 = vmatpush1.bf16.msra.mxu0 0
    %1265 = vmatprep.subr.bf16.mxu0 0
    %1266 = vmatpush1.bf16.msra.mxu0 0
    %1267 = vmatprep.subr.bf16.mxu0 0
    %1268 = vmatpush1.bf16.msra.mxu0 0
    %1269 = vmatprep.subr.bf16.mxu0 0
    %1270 = vmatpush1.bf16.msra.mxu0 0
    %1271 = vmatprep.subr.bf16.mxu0 0
    %1272 = vmatpush1.bf16.msra.mxu0 0
    %1273 = vmatprep.subr.bf16.mxu0 0
    %1274 = vmatpush1.bf16.msra.mxu0 0
    %1275 = vmatprep.subr.bf16.mxu0 0
    %1276 = vmatpush1.bf16.msra.mxu0 0
    %1277 = vmatprep.subr.bf16.mxu0 0
    %1278 = vmatpush1.bf16.msra.mxu0 0
    %1279 = vmatprep.subr.bf16.mxu0 0
    %1280 = vmatpush1.bf16.msra.mxu0 0
    %1281 = vmatprep.mubr.bf16.mxu0 0
    %1282 = vmatmul.mubr.bf16.gmra.mrb[0].mxu0 %v1247
    %v1283 = vpop.f32.mrb[0].mxu0
    %v1284 = vadd.f32 %v1232, %v1283
    %v1285 = vpop.f32.mrb[0].mxu0
    %v1286 = vpop.f32.mrb[0].mxu0
    %v1287 = vadd.f32 %v1232, %v1286
    %v1288 = vpop.f32.mrb[0].mxu0
    %1289 = vdwg.mxu0
    %1291 = vrot.lane.b32.xlu0 %v1284, 96
    %v1292 = vpop.permute.xlu0 %1291
    %v1293 = vsel %vm201, %v1284, 0
    %v1295 = vsel %vm201, %v1292, 0
    %1297 = vmatprep.subr.mxu0 0.0
    %1298 = vmatpush1.xpose.msra.mxu0 %v1295
    %1299 = vmatprep.subr.mxu0 0.0
    %1300 = vmatpush1.xpose.msra.mxu0 0.0
    %1301 = vmatprep.subr.mxu0 0.0
    %1302 = vmatpush1.xpose.msra.mxu0 0.0
    %1303 = vmatprep.subr.mxu0 0.0
    %1304 = vmatpush1.xpose.msra.mxu0 0.0
    %1305 = vmatprep.subr.mxu0 0.0
    %1306 = vmatpush1.xpose.msra.mxu0 0.0
    %1307 = vmatprep.subr.mxu0 0.0
    %1308 = vmatpush1.xpose.msra.mxu0 0.0
    %1309 = vmatprep.subr.mxu0 0.0
    %1310 = vmatpush1.xpose.msra.mxu0 0.0
    %1311 = vmatprep.subr.mxu0 0.0
    %1312 = vmatpush1.xpose.msra.mxu0 0.0
    %1313 = vmatprep.subr.mxu0 0.0
    %1314 = vmatpush1.xpose.msra.mxu0 0.0
    %1315 = vmatprep.subr.mxu0 0.0
    %1316 = vmatpush1.xpose.msra.mxu0 0.0
    %1317 = vmatprep.subr.mxu0 0.0
    %1318 = vmatpush1.xpose.msra.mxu0 0.0
    %1319 = vmatprep.subr.mxu0 0.0
    %1320 = vmatpush1.xpose.msra.mxu0 0.0
    %1321 = vmatprep.subr.mxu0 0.0
    %1322 = vmatpush1.xpose.msra.mxu0 0.0
    %1323 = vmatprep.subr.mxu0 0.0
    %1324 = vmatpush1.xpose.msra.mxu0 0.0
    %1325 = vmatprep.subr.mxu0 0.0
    %1326 = vmatpush1.xpose.msra.mxu0 0.0
    %1327 = vmatprep.subr.mxu0 0.0
    %1328 = vmatpush1.xpose.msra.mxu0 0.0
    %1329 = vmatprep.subr.mxu0 0.0
    %1330 = vmatpush1.xpose.msra.mxu0 0.0
    %1331 = vmatprep.subr.mxu0 0.0
    %1332 = vmatpush1.xpose.msra.mxu0 0.0
    %1333 = vmatprep.subr.mxu0 0.0
    %1334 = vmatpush1.xpose.msra.mxu0 0.0
    %1335 = vmatprep.subr.mxu0 0.0
    %1336 = vmatpush1.xpose.msra.mxu0 0.0
    %1337 = vmatprep.subr.mxu0 0.0
    %1338 = vmatpush1.xpose.msra.mxu0 0.0
    %1339 = vmatprep.subr.mxu0 0.0
    %1340 = vmatpush1.xpose.msra.mxu0 0.0
    %1341 = vmatprep.subr.mxu0 0.0
    %1342 = vmatpush1.xpose.msra.mxu0 0.0
    %1343 = vmatprep.subr.mxu0 0.0
    %1344 = vmatpush1.xpose.msra.mxu0 0.0
    %1345 = vmatprep.subr.mxu0 0.0
    %1346 = vmatpush1.xpose.msra.mxu0 0.0
    %1347 = vmatprep.subr.mxu0 0.0
    %1348 = vmatpush1.xpose.msra.mxu0 0.0
    %1349 = vmatprep.subr.mxu0 0.0
    %1350 = vmatpush1.xpose.msra.mxu0 0.0
    %1351 = vmatprep.subr.mxu0 0.0
    %1352 = vmatpush1.xpose.msra.mxu0 0.0
    %1353 = vmatprep.subr.mxu0 0.0
    %1354 = vmatpush1.xpose.msra.mxu0 0.0
    %1355 = vmatprep.subr.mxu0 0.0
    %1356 = vmatpush1.xpose.msra.mxu0 0.0
    %1357 = vmatprep.subr.mxu0 0.0
    %1358 = vmatpush1.xpose.msra.mxu0 0.0
    %1359 = vmatprep.subr.mxu0 0.0
    %1360 = vmatpush1.xpose.msra.mxu0 0.0
    %1361 = vmatprep.mubr.f32.mxu0 0.0
    %1362 = vmatmul.mubr.f32.gmra.mrb[0].mxu0 %v1293
    %v1363 = vpop.f32.mrb[0].mxu0
    %v1364 = vadd.f32 0.0, %v1363
    %v1365 = vpop.f32.mrb[0].mxu0
    %1366 = vdwg.mxu0
    %v1367 = vmul.f32 %v1364, 0.25
    %v1368 = vadd.f32 %v1367, %v280
    %v1369 = vsel %vm282, %v1368, -inf
    %1370 = vmax.xlane.f32.xlu0 %v1369
    %v1371 = vpop.xlane.xlu0 %1370
    %v1372 = vsub.f32 %v1368, %v1371
    %v1373 = vmul.f32 %v1372, 1.442695
    %v1374 = vpow.pop %v1373
    %v1375 = vsel %vm282, %v1374, 0.0
    %1376 = vadd.xlane.f32.xlu0 %v1375
    %v1377 = vpop.xlane.xlu0 %1376
    %v1378 = vrcp.pop %v1377
    %v1379 = vmul.f32 %v1374, %v1378
    %1380 = vrot.lane.b32.xlu0 %v1284, 64
    %v1381 = vpop.permute.xlu0 %1380
    %v1384 = vsel %vm282, %v1379, 0
    %1386 = vmatprep.subr.mxu0 0.0
    %1387 = vmatpush1.msra.mxu0 %v1381
    %1388 = vmatprep.subr.mxu0 0.0
    %1389 = vmatpush1.msra.mxu0 0.0
    %1390 = vmatprep.subr.mxu0 0.0
    %1391 = vmatpush1.msra.mxu0 0.0
    %1392 = vmatprep.subr.mxu0 0.0
    %1393 = vmatpush1.msra.mxu0 0.0
    %1394 = vmatprep.subr.mxu0 0.0
    %1395 = vmatpush1.msra.mxu0 0.0
    %1396 = vmatprep.subr.mxu0 0.0
    %1397 = vmatpush1.msra.mxu0 0.0
    %1398 = vmatprep.subr.mxu0 0.0
    %1399 = vmatpush1.msra.mxu0 0.0
    %1400 = vmatprep.subr.mxu0 0.0
    %1401 = vmatpush1.msra.mxu0 0.0
    %1402 = vmatprep.subr.mxu0 0.0
    %1403 = vmatpush1.msra.mxu0 0.0
    %1404 = vmatprep.subr.mxu0 0.0
    %1405 = vmatpush1.msra.mxu0 0.0
    %1406 = vmatprep.subr.mxu0 0.0
    %1407 = vmatpush1.msra.mxu0 0.0
    %1408 = vmatprep.subr.mxu0 0.0
    %1409 = vmatpush1.msra.mxu0 0.0
    %1410 = vmatprep.subr.mxu0 0.0
    %1411 = vmatpush1.msra.mxu0 0.0
    %1412 = vmatprep.subr.mxu0 0.0
    %1413 = vmatpush1.msra.mxu0 0.0
    %1414 = vmatprep.subr.mxu0 0.0
    %1415 = vmatpush1.msra.mxu0 0.0
    %1416 = vmatprep.subr.mxu0 0.0
    %1417 = vmatpush1.msra.mxu0 0.0
    %1418 = vmatprep.subr.mxu0 0.0
    %1419 = vmatpush1.msra.mxu0 0.0
    %1420 = vmatprep.subr.mxu0 0.0
    %1421 = vmatpush1.msra.mxu0 0.0
    %1422 = vmatprep.subr.mxu0 0.0
    %1423 = vmatpush1.msra.mxu0 0.0
    %1424 = vmatprep.subr.mxu0 0.0
    %1425 = vmatpush1.msra.mxu0 0.0
    %1426 = vmatprep.subr.mxu0 0.0
    %1427 = vmatpush1.msra.mxu0 0.0
    %1428 = vmatprep.subr.mxu0 0.0
    %1429 = vmatpush1.msra.mxu0 0.0
    %1430 = vmatprep.subr.mxu0 0.0
    %1431 = vmatpush1.msra.mxu0 0.0
    %1432 = vmatprep.subr.mxu0 0.0
    %1433 = vmatpush1.msra.mxu0 0.0
    %1434 = vmatprep.subr.mxu0 0.0
    %1435 = vmatpush1.msra.mxu0 0.0
    %1436 = vmatprep.subr.mxu0 0.0
    %1437 = vmatpush1.msra.mxu0 0.0
    %1438 = vmatprep.subr.mxu0 0.0
    %1439 = vmatpush1.msra.mxu0 0.0
    %1440 = vmatprep.subr.mxu0 0.0
    %1441 = vmatpush1.msra.mxu0 0.0
    %1442 = vmatprep.subr.mxu0 0.0
    %1443 = vmatpush1.msra.mxu0 0.0
    %1444 = vmatprep.subr.mxu0 0.0
    %1445 = vmatpush1.msra.mxu0 0.0
    %1446 = vmatprep.subr.mxu0 0.0
    %1447 = vmatpush1.msra.mxu0 0.0
    %1448 = vmatprep.subr.mxu0 0.0
    %1449 = vmatpush1.msra.mxu0 0.0
    %1450 = vmatprep.mubr.f32.mxu0 0.0
    %1451 = vmatmul.mubr.f32.gmra.mrb[0].mxu0 %v1384
    %v1452 = vpop.f32.mrb[0].mxu0
    %v1453 = vadd.f32 0.0, %v1452
    %v1454 = vpop.f32.mrb[0].mxu0
    %1455 = vdwg.mxu0
    %1456 = vst.msk [vmem:[#allocation2] sm:$0xff] %vm201, %v1453
    %1457 = vrot.lane.b32.xlu0 %v1284, 112
    %v1458 = vpop.permute.xlu0 %1457
    %1459 = vrot.lane.b32.xlu0 %v1284, 80
    %v1460 = vpop.permute.xlu0 %1459
    %v1461 = vsel %vm201, %v1458, 0
    %v1463 = vsel %vm201, %v1460, 0
    %1465 = vmatprep.subr.mxu0 0.0
    %1466 = vmatpush1.xpose.msra.mxu0 %v1463
    %1467 = vmatprep.subr.mxu0 0.0
    %1468 = vmatpush1.xpose.msra.mxu0 0.0
    %1469 = vmatprep.subr.mxu0 0.0
    %1470 = vmatpush1.xpose.msra.mxu0 0.0
    %1471 = vmatprep.subr.mxu0 0.0
    %1472 = vmatpush1.xpose.msra.mxu0 0.0
    %1473 = vmatprep.subr.mxu0 0.0
    %1474 = vmatpush1.xpose.msra.mxu0 0.0
    %1475 = vmatprep.subr.mxu0 0.0
    %1476 = vmatpush1.xpose.msra.mxu0 0.0
    %1477 = vmatprep.subr.mxu0 0.0
    %1478 = vmatpush1.xpose.msra.mxu0 0.0
    %1479 = vmatprep.subr.mxu0 0.0
    %1480 = vmatpush1.xpose.msra.mxu0 0.0
    %1481 = vmatprep.subr.mxu0 0.0
    %1482 = vmatpush1.xpose.msra.mxu0 0.0
    %1483 = vmatprep.subr.mxu0 0.0
    %1484 = vmatpush1.xpose.msra.mxu0 0.0
    %1485 = vmatprep.subr.mxu0 0.0
    %1486 = vmatpush1.xpose.msra.mxu0 0.0
    %1487 = vmatprep.subr.mxu0 0.0
    %1488 = vmatpush1.xpose.msra.mxu0 0.0
    %1489 = vmatprep.subr.mxu0 0.0
    %1490 = vmatpush1.xpose.msra.mxu0 0.0
    %1491 = vmatprep.subr.mxu0 0.0
    %1492 = vmatpush1.xpose.msra.mxu0 0.0
    %1493 = vmatprep.subr.mxu0 0.0
    %1494 = vmatpush1.xpose.msra.mxu0 0.0
    %1495 = vmatprep.subr.mxu0 0.0
    %1496 = vmatpush1.xpose.msra.mxu0 0.0
    %1497 = vmatprep.subr.mxu0 0.0
    %1498 = vmatpush1.xpose.msra.mxu0 0.0
    %1499 = vmatprep.subr.mxu0 0.0
    %1500 = vmatpush1.xpose.msra.mxu0 0.0
    %1501 = vmatprep.subr.mxu0 0.0
    %1502 = vmatpush1.xpose.msra.mxu0 0.0
    %1503 = vmatprep.subr.mxu0 0.0
    %1504 = vmatpush1.xpose.msra.mxu0 0.0
    %1505 = vmatprep.subr.mxu0 0.0
    %1506 = vmatpush1.xpose.msra.mxu0 0.0
    %1507 = vmatprep.subr.mxu0 0.0
    %1508 = vmatpush1.xpose.msra.mxu0 0.0
    %1509 = vmatprep.subr.mxu0 0.0
    %1510 = vmatpush1.xpose.msra.mxu0 0.0
    %1511 = vmatprep.subr.mxu0 0.0
    %1512 = vmatpush1.xpose.msra.mxu0 0.0
    %1513 = vmatprep.subr.mxu0 0.0
    %1514 = vmatpush1.xpose.msra.mxu0 0.0
    %1515 = vmatprep.subr.mxu0 0.0
    %1516 = vmatpush1.xpose.msra.mxu0 0.0
    %1517 = vmatprep.subr.mxu0 0.0
    %1518 = vmatpush1.xpose.msra.mxu0 0.0
    %1519 = vmatprep.subr.mxu0 0.0
    %1520 = vmatpush1.xpose.msra.mxu0 0.0
    %1521 = vmatprep.subr.mxu0 0.0
    %1522 = vmatpush1.xpose.msra.mxu0 0.0
    %1523 = vmatprep.subr.mxu0 0.0
    %1524 = vmatpush1.xpose.msra.mxu0 0.0
    %1525 = vmatprep.subr.mxu0 0.0
    %1526 = vmatpush1.xpose.msra.mxu0 0.0
    %1527 = vmatprep.subr.mxu0 0.0
    %1528 = vmatpush1.xpose.msra.mxu0 0.0
    %1529 = vmatprep.mubr.f32.mxu0 0.0
    %1530 = vmatmul.mubr.f32.gmra.mrb[0].mxu0 %v1461
    %v1531 = vpop.f32.mrb[0].mxu0
    %v1532 = vadd.f32 0.0, %v1531
    %v1533 = vpop.f32.mrb[0].mxu0
    %1534 = vdwg.mxu0
    %v1535 = vmul.f32 %v1532, 0.25
    %v1536 = vadd.f32 %v1535, %v280
    %v1537 = vsel %vm282, %v1536, -inf
    %1538 = vmax.xlane.f32.xlu0 %v1537
    %v1539 = vpop.xlane.xlu0 %1538
    %v1540 = vsub.f32 %v1536, %v1539
    %v1541 = vmul.f32 %v1540, 1.442695
    %v1542 = vpow.pop %v1541
    %v1543 = vsel %vm282, %v1542, 0.0
    %1544 = vadd.xlane.f32.xlu0 %v1543
    %v1545 = vpop.xlane.xlu0 %1544
    %v1546 = vrcp.pop %v1545
    %v1547 = vmul.f32 %v1542, %v1546
    %1548 = vrot.lane.b32.xlu0 %v1284, 48
    %v1549 = vpop.permute.xlu0 %1548
    %v1552 = vsel %vm282, %v1547, 0
    %1554 = vmatprep.subr.mxu0 0.0
    %1555 = vmatpush1.msra.mxu0 %v1549
    %1556 = vmatprep.subr.mxu0 0.0
    %1557 = vmatpush1.msra.mxu0 0.0
    %1558 = vmatprep.subr.mxu0 0.0
    %1559 = vmatpush1.msra.mxu0 0.0
    %1560 = vmatprep.subr.mxu0 0.0
    %1561 = vmatpush1.msra.mxu0 0.0
    %1562 = vmatprep.subr.mxu0 0.0
    %1563 = vmatpush1.msra.mxu0 0.0
    %1564 = vmatprep.subr.mxu0 0.0
    %1565 = vmatpush1.msra.mxu0 0.0
    %1566 = vmatprep.subr.mxu0 0.0
    %1567 = vmatpush1.msra.mxu0 0.0
    %1568 = vmatprep.subr.mxu0 0.0
    %1569 = vmatpush1.msra.mxu0 0.0
    %1570 = vmatprep.subr.mxu0 0.0
    %1571 = vmatpush1.msra.mxu0 0.0
    %1572 = vmatprep.subr.mxu0 0.0
    %1573 = vmatpush1.msra.mxu0 0.0
    %1574 = vmatprep.subr.mxu0 0.0
    %1575 = vmatpush1.msra.mxu0 0.0
    %1576 = vmatprep.subr.mxu0 0.0
    %1577 = vmatpush1.msra.mxu0 0.0
    %1578 = vmatprep.subr.mxu0 0.0
    %1579 = vmatpush1.msra.mxu0 0.0
    %1580 = vmatprep.subr.mxu0 0.0
    %1581 = vmatpush1.msra.mxu0 0.0
    %1582 = vmatprep.subr.mxu0 0.0
    %1583 = vmatpush1.msra.mxu0 0.0
    %1584 = vmatprep.subr.mxu0 0.0
    %1585 = vmatpush1.msra.mxu0 0.0
    %1586 = vmatprep.subr.mxu0 0.0
    %1587 = vmatpush1.msra.mxu0 0.0
    %1588 = vmatprep.subr.mxu0 0.0
    %1589 = vmatpush1.msra.mxu0 0.0
    %1590 = vmatprep.subr.mxu0 0.0
    %1591 = vmatpush1.msra.mxu0 0.0
    %1592 = vmatprep.subr.mxu0 0.0
    %1593 = vmatpush1.msra.mxu0 0.0
    %1594 = vmatprep.subr.mxu0 0.0
    %1595 = vmatpush1.msra.mxu0 0.0
    %1596 = vmatprep.subr.mxu0 0.0
    %1597 = vmatpush1.msra.mxu0 0.0
    %1598 = vmatprep.subr.mxu0 0.0
    %1599 = vmatpush1.msra.mxu0 0.0
    %1600 = vmatprep.subr.mxu0 0.0
    %1601 = vmatpush1.msra.mxu0 0.0
    %1602 = vmatprep.subr.mxu0 0.0
    %1603 = vmatpush1.msra.mxu0 0.0
    %1604 = vmatprep.subr.mxu0 0.0
    %1605 = vmatpush1.msra.mxu0 0.0
    %1606 = vmatprep.subr.mxu0 0.0
    %1607 = vmatpush1.msra.mxu0 0.0
    %1608 = vmatprep.subr.mxu0 0.0
    %1609 = vmatpush1.msra.mxu0 0.0
    %1610 = vmatprep.subr.mxu0 0.0
    %1611 = vmatpush1.msra.mxu0 0.0
    %1612 = vmatprep.subr.mxu0 0.0
    %1613 = vmatpush1.msra.mxu0 0.0
    %1614 = vmatprep.subr.mxu0 0.0
    %1615 = vmatpush1.msra.mxu0 0.0
    %1616 = vmatprep.subr.mxu0 0.0
    %1617 = vmatpush1.msra.mxu0 0.0
    %1618 = vmatprep.mubr.f32.mxu0 0.0
    %1619 = vmatmul.mubr.f32.gmra.mrb[0].mxu0 %v1552
    %v1620 = vpop.f32.mrb[0].mxu0
    %v1621 = vadd.f32 0.0, %v1620
    %v1622 = vpop.f32.mrb[0].mxu0
    %1623 = vdwg.mxu0
    %1625 = vrot.lane.b32.xlu0 %v1621, 16
    %v1626 = vpop.permute.xlu0 %1625
    %1628 = vst.msk [vmem:[#allocation2] sm:$0xff] %vm542, %v1626
    %1630 = vrot.lane.b32.xlu0 %v1287, 96
    %v1631 = vpop.permute.xlu0 %1630
    %v1632 = vsel %vm201, %v1287, 0
    %v1634 = vsel %vm201, %v1631, 0
    %1636 = vmatprep.subr.mxu0 0.0
    %1637 = vmatpush1.xpose.msra.mxu0 %v1634
    %1638 = vmatprep.subr.mxu0 0.0
    %1639 = vmatpush1.xpose.msra.mxu0 0.0
    %1640 = vmatprep.subr.mxu0 0.0
    %1641 = vmatpush1.xpose.msra.mxu0 0.0
    %1642 = vmatprep.subr.mxu0 0.0
    %1643 = vmatpush1.xpose.msra.mxu0 0.0
    %1644 = vmatprep.subr.mxu0 0.0
    %1645 = vmatpush1.xpose.msra.mxu0 0.0
    %1646 = vmatprep.subr.mxu0 0.0
    %1647 = vmatpush1.xpose.msra.mxu0 0.0
    %1648 = vmatprep.subr.mxu0 0.0
    %1649 = vmatpush1.xpose.msra.mxu0 0.0
    %1650 = vmatprep.subr.mxu0 0.0
    %1651 = vmatpush1.xpose.msra.mxu0 0.0
    %1652 = vmatprep.subr.mxu0 0.0
    %1653 = vmatpush1.xpose.msra.mxu0 0.0
    %1654 = vmatprep.subr.mxu0 0.0
    %1655 = vmatpush1.xpose.msra.mxu0 0.0
    %1656 = vmatprep.subr.mxu0 0.0
    %1657 = vmatpush1.xpose.msra.mxu0 0.0
    %1658 = vmatprep.subr.mxu0 0.0
    %1659 = vmatpush1.xpose.msra.mxu0 0.0
    %1660 = vmatprep.subr.mxu0 0.0
    %1661 = vmatpush1.xpose.msra.mxu0 0.0
    %1662 = vmatprep.subr.mxu0 0.0
    %1663 = vmatpush1.xpose.msra.mxu0 0.0
    %1664 = vmatprep.subr.mxu0 0.0
    %1665 = vmatpush1.xpose.msra.mxu0 0.0
    %1666 = vmatprep.subr.mxu0 0.0
    %1667 = vmatpush1.xpose.msra.mxu0 0.0
    %1668 = vmatprep.subr.mxu0 0.0
    %1669 = vmatpush1.xpose.msra.mxu0 0.0
    %1670 = vmatprep.subr.mxu0 0.0
    %1671 = vmatpush1.xpose.msra.mxu0 0.0
    %1672 = vmatprep.subr.mxu0 0.0
    %1673 = vmatpush1.xpose.msra.mxu0 0.0
    %1674 = vmatprep.subr.mxu0 0.0
    %1675 = vmatpush1.xpose.msra.mxu0 0.0
    %1676 = vmatprep.subr.mxu0 0.0
    %1677 = vmatpush1.xpose.msra.mxu0 0.0
    %1678 = vmatprep.subr.mxu0 0.0
    %1679 = vmatpush1.xpose.msra.mxu0 0.0
    %1680 = vmatprep.subr.mxu0 0.0
    %1681 = vmatpush1.xpose.msra.mxu0 0.0
    %1682 = vmatprep.subr.mxu0 0.0
    %1683 = vmatpush1.xpose.msra.mxu0 0.0
    %1684 = vmatprep.subr.mxu0 0.0
    %1685 = vmatpush1.xpose.msra.mxu0 0.0
    %1686 = vmatprep.subr.mxu0 0.0
    %1687 = vmatpush1.xpose.msra.mxu0 0.0
    %1688 = vmatprep.subr.mxu0 0.0
    %1689 = vmatpush1.xpose.msra.mxu0 0.0
    %1690 = vmatprep.subr.mxu0 0.0
    %1691 = vmatpush1.xpose.msra.mxu0 0.0
    %1692 = vmatprep.subr.mxu0 0.0
    %1693 = vmatpush1.xpose.msra.mxu0 0.0
    %1694 = vmatprep.subr.mxu0 0.0
    %1695 = vmatpush1.xpose.msra.mxu0 0.0
    %1696 = vmatprep.subr.mxu0 0.0
    %1697 = vmatpush1.xpose.msra.mxu0 0.0
    %1698 = vmatprep.subr.mxu0 0.0
    %1699 = vmatpush1.xpose.msra.mxu0 0.0
    %1700 = vmatprep.mubr.f32.mxu0 0.0
    %1701 = vmatmul.mubr.f32.gmra.mrb[0].mxu0 %v1632
    %v1702 = vpop.f32.mrb[0].mxu0
    %v1703 = vadd.f32 0.0, %v1702
    %v1704 = vpop.f32.mrb[0].mxu0
    %1705 = vdwg.mxu0
    %v1706 = vmul.f32 %v1703, 0.25
    %v1707 = vadd.f32 %v1706, %v625
    %v1708 = vsel %vm282, %v1707, -inf
    %1709 = vmax.xlane.f32.xlu0 %v1708
    %v1710 = vpop.xlane.xlu0 %1709
    %v1711 = vsub.f32 %v1707, %v1710
    %v1712 = vmul.f32 %v1711, 1.442695
    %v1713 = vpow.pop %v1712
    %v1714 = vsel %vm282, %v1713, 0.0
    %1715 = vadd.xlane.f32.xlu0 %v1714
    %v1716 = vpop.xlane.xlu0 %1715
    %v1717 = vrcp.pop %v1716
    %v1718 = vmul.f32 %v1713, %v1717
    %1719 = vrot.lane.b32.xlu0 %v1287, 64
    %v1720 = vpop.permute.xlu0 %1719
    %v1723 = vsel %vm282, %v1718, 0
    %1725 = vmatprep.subr.mxu0 0.0
    %1726 = vmatpush1.msra.mxu0 %v1720
    %1727 = vmatprep.subr.mxu0 0.0
    %1728 = vmatpush1.msra.mxu0 0.0
    %1729 = vmatprep.subr.mxu0 0.0
    %1730 = vmatpush1.msra.mxu0 0.0
    %1731 = vmatprep.subr.mxu0 0.0
    %1732 = vmatpush1.msra.mxu0 0.0
    %1733 = vmatprep.subr.mxu0 0.0
    %1734 = vmatpush1.msra.mxu0 0.0
    %1735 = vmatprep.subr.mxu0 0.0
    %1736 = vmatpush1.msra.mxu0 0.0
    %1737 = vmatprep.subr.mxu0 0.0
    %1738 = vmatpush1.msra.mxu0 0.0
    %1739 = vmatprep.subr.mxu0 0.0
    %1740 = vmatpush1.msra.mxu0 0.0
    %1741 = vmatprep.subr.mxu0 0.0
    %1742 = vmatpush1.msra.mxu0 0.0
    %1743 = vmatprep.subr.mxu0 0.0
    %1744 = vmatpush1.msra.mxu0 0.0
    %1745 = vmatprep.subr.mxu0 0.0
    %1746 = vmatpush1.msra.mxu0 0.0
    %1747 = vmatprep.subr.mxu0 0.0
    %1748 = vmatpush1.msra.mxu0 0.0
    %1749 = vmatprep.subr.mxu0 0.0
    %1750 = vmatpush1.msra.mxu0 0.0
    %1751 = vmatprep.subr.mxu0 0.0
    %1752 = vmatpush1.msra.mxu0 0.0
    %1753 = vmatprep.subr.mxu0 0.0
    %1754 = vmatpush1.msra.mxu0 0.0
    %1755 = vmatprep.subr.mxu0 0.0
    %1756 = vmatpush1.msra.mxu0 0.0
    %1757 = vmatprep.subr.mxu0 0.0
    %1758 = vmatpush1.msra.mxu0 0.0
    %1759 = vmatprep.subr.mxu0 0.0
    %1760 = vmatpush1.msra.mxu0 0.0
    %1761 = vmatprep.subr.mxu0 0.0
    %1762 = vmatpush1.msra.mxu0 0.0
    %1763 = vmatprep.subr.mxu0 0.0
    %1764 = vmatpush1.msra.mxu0 0.0
    %1765 = vmatprep.subr.mxu0 0.0
    %1766 = vmatpush1.msra.mxu0 0.0
    %1767 = vmatprep.subr.mxu0 0.0
    %1768 = vmatpush1.msra.mxu0 0.0
    %1769 = vmatprep.subr.mxu0 0.0
    %1770 = vmatpush1.msra.mxu0 0.0
    %1771 = vmatprep.subr.mxu0 0.0
    %1772 = vmatpush1.msra.mxu0 0.0
    %1773 = vmatprep.subr.mxu0 0.0
    %1774 = vmatpush1.msra.mxu0 0.0
    %1775 = vmatprep.subr.mxu0 0.0
    %1776 = vmatpush1.msra.mxu0 0.0
    %1777 = vmatprep.subr.mxu0 0.0
    %1778 = vmatpush1.msra.mxu0 0.0
    %1779 = vmatprep.subr.mxu0 0.0
    %1780 = vmatpush1.msra.mxu0 0.0
    %1781 = vmatprep.subr.mxu0 0.0
    %1782 = vmatpush1.msra.mxu0 0.0
    %1783 = vmatprep.subr.mxu0 0.0
    %1784 = vmatpush1.msra.mxu0 0.0
    %1785 = vmatprep.subr.mxu0 0.0
    %1786 = vmatpush1.msra.mxu0 0.0
    %1787 = vmatprep.subr.mxu0 0.0
    %1788 = vmatpush1.msra.mxu0 0.0
    %1789 = vmatprep.mubr.f32.mxu0 0.0
    %1790 = vmatmul.mubr.f32.gmra.mrb[0].mxu0 %v1723
    %v1791 = vpop.f32.mrb[0].mxu0
    %v1792 = vadd.f32 0.0, %v1791
    %v1793 = vpop.f32.mrb[0].mxu0
    %1794 = vdwg.mxu0
    %1795 = vst.msk [vmem:[#allocation2 + $0x8] sm:$0xff] %vm201, %v1792
    %1796 = vrot.lane.b32.xlu0 %v1287, 112
    %v1797 = vpop.permute.xlu0 %1796
    %1798 = vrot.lane.b32.xlu0 %v1287, 80
    %v1799 = vpop.permute.xlu0 %1798
    %v1800 = vsel %vm201, %v1797, 0
    %v1802 = vsel %vm201, %v1799, 0
    %1804 = vmatprep.subr.mxu0 0.0
    %1805 = vmatpush1.xpose.msra.mxu0 %v1802
    %1806 = vmatprep.subr.mxu0 0.0
    %1807 = vmatpush1.xpose.msra.mxu0 0.0
    %1808 = vmatprep.subr.mxu0 0.0
    %1809 = vmatpush1.xpose.msra.mxu0 0.0
    %1810 = vmatprep.subr.mxu0 0.0
    %1811 = vmatpush1.xpose.msra.mxu0 0.0
    %1812 = vmatprep.subr.mxu0 0.0
    %1813 = vmatpush1.xpose.msra.mxu0 0.0
    %1814 = vmatprep.subr.mxu0 0.0
    %1815 = vmatpush1.xpose.msra.mxu0 0.0
    %1816 = vmatprep.subr.mxu0 0.0
    %1817 = vmatpush1.xpose.msra.mxu0 0.0
    %1818 = vmatprep.subr.mxu0 0.0
    %1819 = vmatpush1.xpose.msra.mxu0 0.0
    %1820 = vmatprep.subr.mxu0 0.0
    %1821 = vmatpush1.xpose.msra.mxu0 0.0
    %1822 = vmatprep.subr.mxu0 0.0
    %1823 = vmatpush1.xpose.msra.mxu0 0.0
    %1824 = vmatprep.subr.mxu0 0.0
    %1825 = vmatpush1.xpose.msra.mxu0 0.0
    %1826 = vmatprep.subr.mxu0 0.0
    %1827 = vmatpush1.xpose.msra.mxu0 0.0
    %1828 = vmatprep.subr.mxu0 0.0
    %1829 = vmatpush1.xpose.msra.mxu0 0.0
    %1830 = vmatprep.subr.mxu0 0.0
    %1831 = vmatpush1.xpose.msra.mxu0 0.0
    %1832 = vmatprep.subr.mxu0 0.0
    %1833 = vmatpush1.xpose.msra.mxu0 0.0
    %1834 = vmatprep.subr.mxu0 0.0
    %1835 = vmatpush1.xpose.msra.mxu0 0.0
    %1836 = vmatprep.subr.mxu0 0.0
    %1837 = vmatpush1.xpose.msra.mxu0 0.0
    %1838 = vmatprep.subr.mxu0 0.0
    %1839 = vmatpush1.xpose.msra.mxu0 0.0
    %1840 = vmatprep.subr.mxu0 0.0
    %1841 = vmatpush1.xpose.msra.mxu0 0.0
    %1842 = vmatprep.subr.mxu0 0.0
    %1843 = vmatpush1.xpose.msra.mxu0 0.0
    %1844 = vmatprep.subr.mxu0 0.0
    %1845 = vmatpush1.xpose.msra.mxu0 0.0
    %1846 = vmatprep.subr.mxu0 0.0
    %1847 = vmatpush1.xpose.msra.mxu0 0.0
    %1848 = vmatprep.subr.mxu0 0.0
    %1849 = vmatpush1.xpose.msra.mxu0 0.0
    %1850 = vmatprep.subr.mxu0 0.0
    %1851 = vmatpush1.xpose.msra.mxu0 0.0
    %1852 = vmatprep.subr.mxu0 0.0
    %1853 = vmatpush1.xpose.msra.mxu0 0.0
    %1854 = vmatprep.subr.mxu0 0.0
    %1855 = vmatpush1.xpose.msra.mxu0 0.0
    %1856 = vmatprep.subr.mxu0 0.0
    %1857 = vmatpush1.xpose.msra.mxu0 0.0
    %1858 = vmatprep.subr.mxu0 0.0
    %1859 = vmatpush1.xpose.msra.mxu0 0.0
    %1860 = vmatprep.subr.mxu0 0.0
    %1861 = vmatpush1.xpose.msra.mxu0 0.0
    %1862 = vmatprep.subr.mxu0 0.0
    %1863 = vmatpush1.xpose.msra.mxu0 0.0
    %1864 = vmatprep.subr.mxu0 0.0
    %1865 = vmatpush1.xpose.msra.mxu0 0.0
    %1866 = vmatprep.subr.mxu0 0.0
    %1867 = vmatpush1.xpose.msra.mxu0 0.0
    %1868 = vmatprep.mubr.f32.mxu0 0.0
    %1869 = vmatmul.mubr.f32.gmra.mrb[0].mxu0 %v1800
    %v1870 = vpop.f32.mrb[0].mxu0
    %v1871 = vadd.f32 0.0, %v1870
    %v1872 = vpop.f32.mrb[0].mxu0
    %1873 = vdwg.mxu0
    %v1874 = vmul.f32 %v1871, 0.25
    %v1875 = vadd.f32 %v1874, %v625
    %v1876 = vsel %vm282, %v1875, -inf
    %1877 = vmax.xlane.f32.xlu0 %v1876
    %v1878 = vpop.xlane.xlu0 %1877
    %v1879 = vsub.f32 %v1875, %v1878
    %v1880 = vmul.f32 %v1879, 1.442695
    %v1881 = vpow.pop %v1880
    %v1882 = vsel %vm282, %v1881, 0.0
    %1883 = vadd.xlane.f32.xlu0 %v1882
    %v1884 = vpop.xlane.xlu0 %1883
    %v1885 = vrcp.pop %v1884
    %v1886 = vmul.f32 %v1881, %v1885
    %1887 = vrot.lane.b32.xlu0 %v1287, 48
    %v1888 = vpop.permute.xlu0 %1887
    %v1891 = vsel %vm282, %v1886, 0
    %1893 = vmatprep.subr.mxu0 0.0
    %1894 = vmatpush1.msra.mxu0 %v1888
    %1895 = vmatprep.subr.mxu0 0.0
    %1896 = vmatpush1.msra.mxu0 0.0
    %1897 = vmatprep.subr.mxu0 0.0
    %1898 = vmatpush1.msra.mxu0 0.0
    %1899 = vmatprep.subr.mxu0 0.0
    %1900 = vmatpush1.msra.mxu0 0.0
    %1901 = vmatprep.subr.mxu0 0.0
    %1902 = vmatpush1.msra.mxu0 0.0
    %1903 = vmatprep.subr.mxu0 0.0
    %1904 = vmatpush1.msra.mxu0 0.0
    %1905 = vmatprep.subr.mxu0 0.0
    %1906 = vmatpush1.msra.mxu0 0.0
    %1907 = vmatprep.subr.mxu0 0.0
    %1908 = vmatpush1.msra.mxu0 0.0
    %1909 = vmatprep.subr.mxu0 0.0
    %1910 = vmatpush1.msra.mxu0 0.0
    %1911 = vmatprep.subr.mxu0 0.0
    %1912 = vmatpush1.msra.mxu0 0.0
    %1913 = vmatprep.subr.mxu0 0.0
    %1914 = vmatpush1.msra.mxu0 0.0
    %1915 = vmatprep.subr.mxu0 0.0
    %1916 = vmatpush1.msra.mxu0 0.0
    %1917 = vmatprep.subr.mxu0 0.0
    %1918 = vmatpush1.msra.mxu0 0.0
    %1919 = vmatprep.subr.mxu0 0.0
    %1920 = vmatpush1.msra.mxu0 0.0
    %1921 = vmatprep.subr.mxu0 0.0
    %1922 = vmatpush1.msra.mxu0 0.0
    %1923 = vmatprep.subr.mxu0 0.0
    %1924 = vmatpush1.msra.mxu0 0.0
    %1925 = vmatprep.subr.mxu0 0.0
    %1926 = vmatpush1.msra.mxu0 0.0
    %1927 = vmatprep.subr.mxu0 0.0
    %1928 = vmatpush1.msra.mxu0 0.0
    %1929 = vmatprep.subr.mxu0 0.0
    %1930 = vmatpush1.msra.mxu0 0.0
    %1931 = vmatprep.subr.mxu0 0.0
    %1932 = vmatpush1.msra.mxu0 0.0
    %1933 = vmatprep.subr.mxu0 0.0
    %1934 = vmatpush1.msra.mxu0 0.0
    %1935 = vmatprep.subr.mxu0 0.0
    %1936 = vmatpush1.msra.mxu0 0.0
    %1937 = vmatprep.subr.mxu0 0.0
    %1938 = vmatpush1.msra.mxu0 0.0
    %1939 = vmatprep.subr.mxu0 0.0
    %1940 = vmatpush1.msra.mxu0 0.0
    %1941 = vmatprep.subr.mxu0 0.0
    %1942 = vmatpush1.msra.mxu0 0.0
    %1943 = vmatprep.subr.mxu0 0.0
    %1944 = vmatpush1.msra.mxu0 0.0
    %1945 = vmatprep.subr.mxu0 0.0
    %1946 = vmatpush1.msra.mxu0 0.0
    %1947 = vmatprep.subr.mxu0 0.0
    %1948 = vmatpush1.msra.mxu0 0.0
    %1949 = vmatprep.subr.mxu0 0.0
    %1950 = vmatpush1.msra.mxu0 0.0
    %1951 = vmatprep.subr.mxu0 0.0
    %1952 = vmatpush1.msra.mxu0 0.0
    %1953 = vmatprep.subr.mxu0 0.0
    %1954 = vmatpush1.msra.mxu0 0.0
    %1955 = vmatprep.subr.mxu0 0.0
    %1956 = vmatpush1.msra.mxu0 0.0
    %1957 = vmatprep.mubr.f32.mxu0 0.0
    %1958 = vmatmul.mubr.f32.gmra.mrb[0].mxu0 %v1891
    %v1959 = vpop.f32.mrb[0].mxu0
    %v1960 = vadd.f32 0.0, %v1959
    %v1961 = vpop.f32.mrb[0].mxu0
    %1962 = vdwg.mxu0
    %1964 = vrot.lane.b32.xlu0 %v1960, 16
    %v1965 = vpop.permute.xlu0 %1964
    %1967 = vst.msk [vmem:[#allocation2 + $0x8] sm:$0xff] %vm542, %v1965
    %v1968 = vld [vmem:[#allocation2] sm:$0xff]
    %v1969 = vld [vmem:[#allocation2 + $0x8] sm:$0xff]
    %s1970 = scalar_lea.vmem %s6, 16
    %v1971 = vld [vmem:[%s1970] sm:$0xf]
    %v1972 = vld [vmem:[%s1970 + $0x4] sm:$0xf]
    %v1973 = vld [vmem:[%s1970 + $0x8] sm:$0xf]
    %v1974 = vld [vmem:[%s1970 + $0xc] sm:$0xf]
    %v1975 = vpack.c.bf16 %v1969, %v1968
    %s1976 = scalar_lea.vmem %s7, 1
    %v1977 = vld [vmem:[%s1976] sm:$0x1]
    %v1979 = vlaneseq
    %v1980 = vshrl.u32 %v1979, 7
    %v1981 = vsub.s32 0, %v1980
    %v1982 = vrot.slane %v1977, %v1981
    %v1988 = vunpack.c.l.b16 %v1971
    %v1989 = vunpack.c.l.b16 %v1972
    %v1990 = vunpack.c.l.b16 %v1973
    %v1991 = vunpack.c.l.b16 %v1974
    %v1992 = vpack.c.b16 %v1989, %v1988
    %v1993 = vpack.c.b16 %v1991, %v1990
    %v1997 = vsel %vm85, %v1975, 0
    %1999 = vmatprep.subr.bf16.mxu0 0
    %2000 = vmatpush1.bf16.msra.mxu0 %v1992
    %2001 = vmatprep.subr.bf16.mxu0 0
    %2002 = vmatpush1.bf16.msra.mxu0 %v1993
    %2003 = vmatprep.subr.bf16.mxu0 0
    %2004 = vmatpush1.bf16.msra.mxu0 0
    %2005 = vmatprep.subr.bf16.mxu0 0
    %2006 = vmatpush1.bf16.msra.mxu0 0
    %2007 = vmatprep.subr.bf16.mxu0 0
    %2008 = vmatpush1.bf16.msra.mxu0 0
    %2009 = vmatprep.subr.bf16.mxu0 0
    %2010 = vmatpush1.bf16.msra.mxu0 0
    %2011 = vmatprep.subr.bf16.mxu0 0
    %2012 = vmatpush1.bf16.msra.mxu0 0
    %2013 = vmatprep.subr.bf16.mxu0 0
    %2014 = vmatpush1.bf16.msra.mxu0 0
    %2015 = vmatprep.subr.bf16.mxu0 0
    %2016 = vmatpush1.bf16.msra.mxu0 0
    %2017 = vmatprep.subr.bf16.mxu0 0
    %2018 = vmatpush1.bf16.msra.mxu0 0
    %2019 = vmatprep.subr.bf16.mxu0 0
    %2020 = vmatpush1.bf16.msra.mxu0 0
    %2021 = vmatprep.subr.bf16.mxu0 0
    %2022 = vmatpush1.bf16.msra.mxu0 0
    %2023 = vmatprep.subr.bf16.mxu0 0
    %2024 = vmatpush1.bf16.msra.mxu0 0
    %2025 = vmatprep.subr.bf16.mxu0 0
    %2026 = vmatpush1.bf16.msra.mxu0 0
    %2027 = vmatprep.subr.bf16.mxu0 0
    %2028 = vmatpush1.bf16.msra.mxu0 0
    %2029 = vmatprep.subr.bf16.mxu0 0
    %2030 = vmatpush1.bf16.msra.mxu0 0
    %2031 = vmatprep.mubr.bf16.mxu0 0
    %2032 = vmatmul.mubr.bf16.gmra.mrb[0].mxu0 %v1997
    %v2033 = vpop.f32.mrb[0].mxu0
    %v2034 = vadd.f32 %v1982, %v2033
    %v2035 = vpop.f32.mrb[0].mxu0
    %v2036 = vpop.f32.mrb[0].mxu0
    %v2037 = vadd.f32 %v1982, %v2036
    %v2038 = vpop.f32.mrb[0].mxu0
    %2039 = vdwg.mxu0
    %v2040 = vadd.f32 %v1218, %v2034
    %v2041 = vadd.f32 %v1219, %v2037
    %s2042 = scalar_lea.vmem %s8, 1
    %v2043 = vld [vmem:[%s2042] sm:$0x1]
    %s2044 = scalar_lea.vmem %s9, 1
    %v2045 = vld [vmem:[%s2044] sm:$0x1]
    %v2046 = vsel %vm85, %v2040, 0.0
    %2047 = vadd.xlane.f32.xlu0 %v2046
    %v2048 = vpop.xlane.xlu0 %2047
    %v2049 = vsel %vm85, %v2041, 0.0
    %2050 = vadd.xlane.f32.xlu0 %v2049
    %v2051 = vpop.xlane.xlu0 %2050
    %v2052 = vmul.f32 %v2048, %v92
    %v2053 = vmul.f32 %v2051, %v92
    %v2054 = vsub.f32 %v2040, %v2052
    %v2055 = vsub.f32 %v2041, %v2053
    %v2056 = vmul.f32 %v2054, %v2054
    %v2057 = vmul.f32 %v2055, %v2055
    %v2058 = vsel %vm85, %v2056, 0.0
    %2059 = vadd.xlane.f32.xlu0 %v2058
    %v2060 = vpop.xlane.xlu0 %2059
    %v2061 = vsel %vm85, %v2057, 0.0
    %2062 = vadd.xlane.f32.xlu0 %v2061
    %v2063 = vpop.xlane.xlu0 %2062
    %v2064 = vmul.f32 %v2060, %v92
    %v2065 = vmul.f32 %v2063, %v92
    %v2066 = vadd.f32 %v2064, 1e-12
    %v2067 = vadd.f32 %v2065, 1e-12
    %v2068 = vrsqrt.pop %v2066
    %v2069 = vrsqrt.pop %v2067
    %v2070 = vmul.f32 %v2054, %v2068
    %v2071 = vmul.f32 %v2055, %v2069
    %v2073 = vlaneseq
    %v2074 = vshrl.u32 %v2073, 7
    %v2075 = vsub.s32 0, %v2074
    %v2076 = vrot.slane %v2043, %v2075
    %v2078 = vmul.f32 %v2070, %v2076
    %v2079 = vmul.f32 %v2071, %v2076
    %v2081 = vlaneseq
    %v2082 = vshrl.u32 %v2081, 7
    %v2083 = vsub.s32 0, %v2082
    %v2084 = vrot.slane %v2045, %v2083
    %v2086 = vadd.f32 %v2078, %v2084
    %v2087 = vadd.f32 %v2079, %v2084
    %s2088 = scalar_lea.vmem %s10, 16
    %v2089 = vld [vmem:[%s2088] sm:$0xf]
    %v2090 = vld [vmem:[%s2088 + $0x4] sm:$0xf]
    %v2091 = vld [vmem:[%s2088 + $0x8] sm:$0xf]
    %v2092 = vld [vmem:[%s2088 + $0xc] sm:$0xf]
    %v2093 = vpack.c.bf16 %v2087, %v2086
    %s2094 = scalar_lea.vmem %s11, 1
    %v2095 = vld [vmem:[%s2094] sm:$0x1]
    %v2097 = vlaneseq
    %v2098 = vshrl.u32 %v2097, 7
    %v2099 = vsub.s32 0, %v2098
    %v2100 = vrot.slane %v2095, %v2099
    %v2106 = vunpack.c.l.b16 %v2089
    %v2107 = vunpack.c.l.b16 %v2090
    %v2108 = vunpack.c.l.b16 %v2091
    %v2109 = vunpack.c.l.b16 %v2092
    %v2110 = vpack.c.b16 %v2107, %v2106
    %v2111 = vpack.c.b16 %v2109, %v2108
    %v2115 = vsel %vm85, %v2093, 0
    %2117 = vmatprep.subr.bf16.mxu0 0
    %2118 = vmatpush1.bf16.msra.mxu0 %v2110
    %2119 = vmatprep.subr.bf16.mxu0 0
    %2120 = vmatpush1.bf16.msra.mxu0 %v2111
    %2121 = vmatprep.subr.bf16.mxu0 0
    %2122 = vmatpush1.bf16.msra.mxu0 0
    %2123 = vmatprep.subr.bf16.mxu0 0
    %2124 = vmatpush1.bf16.msra.mxu0 0
    %2125 = vmatprep.subr.bf16.mxu0 0
    %2126 = vmatpush1.bf16.msra.mxu0 0
    %2127 = vmatprep.subr.bf16.mxu0 0
    %2128 = vmatpush1.bf16.msra.mxu0 0
    %2129 = vmatprep.subr.bf16.mxu0 0
    %2130 = vmatpush1.bf16.msra.mxu0 0
    %2131 = vmatprep.subr.bf16.mxu0 0
    %2132 = vmatpush1.bf16.msra.mxu0 0
    %2133 = vmatprep.subr.bf16.mxu0 0
    %2134 = vmatpush1.bf16.msra.mxu0 0
    %2135 = vmatprep.subr.bf16.mxu0 0
    %2136 = vmatpush1.bf16.msra.mxu0 0
    %2137 = vmatprep.subr.bf16.mxu0 0
    %2138 = vmatpush1.bf16.msra.mxu0 0
    %2139 = vmatprep.subr.bf16.mxu0 0
    %2140 = vmatpush1.bf16.msra.mxu0 0
    %2141 = vmatprep.subr.bf16.mxu0 0
    %2142 = vmatpush1.bf16.msra.mxu0 0
    %2143 = vmatprep.subr.bf16.mxu0 0
    %2144 = vmatpush1.bf16.msra.mxu0 0
    %2145 = vmatprep.subr.bf16.mxu0 0
    %2146 = vmatpush1.bf16.msra.mxu0 0
    %2147 = vmatprep.subr.bf16.mxu0 0
    %2148 = vmatpush1.bf16.msra.mxu0 0
    %2149 = vmatprep.mubr.bf16.mxu0 0
    %2150 = vmatmul.mubr.bf16.gmra.mrb[0].mxu0 %v2115
    %v2151 = vpop.f32.mrb[0].mxu0
    %v2152 = vadd.f32 %v2100, %v2151
    %v2153 = vpop.f32.mrb[0].mxu0
    %v2154 = vpop.f32.mrb[0].mxu0
    %v2155 = vadd.f32 %v2100, %v2154
    %v2156 = vpop.f32.mrb[0].mxu0
    %2157 = vdwg.mxu0
    %v2158 = vmul.f32 %v2152, 0.5
    %v2159 = vmul.f32 %v2155, 0.5
    %v2160 = vmul.f32 %v2152, 0.044715
    %v2161 = vmul.f32 %v2155, 0.044715
    %v2162 = vmul.f32 %v2160, %v2152
    %v2163 = vmul.f32 %v2161, %v2155
    %v2164 = vmul.f32 %v2162, %v2152
    %v2165 = vmul.f32 %v2163, %v2155
    %v2166 = vadd.f32 %v2152, %v2164
    %v2167 = vadd.f32 %v2155, %v2165
    %v2168 = vmul.f32 %v2166, 0.7978846
    %v2169 = vmul.f32 %v2167, 0.7978846
    %v2170 = vtanh.pop %v2168
    %v2171 = vtanh.pop %v2169
    %v2172 = vadd.f32 %v2170, 1.0
    %v2173 = vadd.f32 %v2171, 1.0
    %v2174 = vmul.f32 %v2158, %v2172
    %v2175 = vmul.f32 %v2159, %v2173
    %s2176 = scalar_lea.vmem %s12, 32
    %v2177 = vld [vmem:[%s2176] sm:$0xf]
    %v2178 = vld [vmem:[%s2176 + $0x4] sm:$0xf]
    %v2179 = vld [vmem:[%s2176 + $0x8] sm:$0xf]
    %v2180 = vld [vmem:[%s2176 + $0xc] sm:$0xf]
    %v2181 = vld [vmem:[%s2176 + $0x10] sm:$0xf]
    %v2182 = vld [vmem:[%s2176 + $0x14] sm:$0xf]
    %v2183 = vld [vmem:[%s2176 + $0x18] sm:$0xf]
    %v2184 = vld [vmem:[%s2176 + $0x1c] sm:$0xf]
    %v2185 = vpack.c.bf16 %v2175, %v2174
    %s2186 = scalar_lea.vmem %s13, 1
    %v2187 = vld [vmem:[%s2186] sm:$0x1]
    %v2189 = vlaneseq
    %v2190 = vshrl.u32 %v2189, 7
    %v2191 = vsub.s32 0, %v2190
    %v2192 = vrot.slane %v2187, %v2191
    %v2202 = vunpack.c.l.b16 %v2177
    %v2203 = vunpack.c.l.b16 %v2178
    %v2204 = vunpack.c.l.b16 %v2179
    %v2205 = vunpack.c.l.b16 %v2180
    %v2206 = vunpack.c.l.b16 %v2181
    %v2207 = vunpack.c.l.b16 %v2182
    %v2208 = vunpack.c.l.b16 %v2183
    %v2209 = vunpack.c.l.b16 %v2184
    %v2210 = vpack.c.b16 %v2203, %v2202
    %v2211 = vpack.c.b16 %v2205, %v2204
    %v2212 = vpack.c.b16 %v2207, %v2206
    %v2213 = vpack.c.b16 %v2209, %v2208
    %v2219 = vsel %vm1129, %v2185, 0
    %2221 = vmatprep.subr.bf16.mxu0 0
    %2222 = vmatpush1.bf16.msra.mxu0 %v2210
    %2223 = vmatprep.subr.bf16.mxu0 0
    %2224 = vmatpush1.bf16.msra.mxu0 %v2211
    %2225 = vmatprep.subr.bf16.mxu0 0
    %2226 = vmatpush1.bf16.msra.mxu0 %v2212
    %2227 = vmatprep.subr.bf16.mxu0 0
    %2228 = vmatpush1.bf16.msra.mxu0 %v2213
    %2229 = vmatprep.subr.bf16.mxu0 0
    %2230 = vmatpush1.bf16.msra.mxu0 0
    %2231 = vmatprep.subr.bf16.mxu0 0
    %2232 = vmatpush1.bf16.msra.mxu0 0
    %2233 = vmatprep.subr.bf16.mxu0 0
    %2234 = vmatpush1.bf16.msra.mxu0 0
    %2235 = vmatprep.subr.bf16.mxu0 0
    %2236 = vmatpush1.bf16.msra.mxu0 0
    %2237 = vmatprep.subr.bf16.mxu0 0
    %2238 = vmatpush1.bf16.msra.mxu0 0
    %2239 = vmatprep.subr.bf16.mxu0 0
    %2240 = vmatpush1.bf16.msra.mxu0 0
    %2241 = vmatprep.subr.bf16.mxu0 0
    %2242 = vmatpush1.bf16.msra.mxu0 0
    %2243 = vmatprep.subr.bf16.mxu0 0
    %2244 = vmatpush1.bf16.msra.mxu0 0
    %2245 = vmatprep.subr.bf16.mxu0 0
    %2246 = vmatpush1.bf16.msra.mxu0 0
    %2247 = vmatprep.subr.bf16.mxu0 0
    %2248 = vmatpush1.bf16.msra.mxu0 0
    %2249 = vmatprep.subr.bf16.mxu0 0
    %2250 = vmatpush1.bf16.msra.mxu0 0
    %2251 = vmatprep.subr.bf16.mxu0 0
    %2252 = vmatpush1.bf16.msra.mxu0 0
    %2253 = vmatprep.mubr.bf16.mxu0 0
    %2254 = vmatmul.mubr.bf16.gmra.mrb[0].mxu0 %v2219
    %v2255 = vpop.f32.mrb[0].mxu0
    %v2256 = vadd.f32 %v2192, %v2255
    %v2257 = vpop.f32.mrb[0].mxu0
    %v2258 = vpop.f32.mrb[0].mxu0
    %v2259 = vadd.f32 %v2192, %v2258
    %v2260 = vpop.f32.mrb[0].mxu0
    %2261 = vdwg.mxu0
    %v2262 = vadd.f32 %v2086, %v2256
    %v2263 = vadd.f32 %v2087, %v2259
    %s2264 = scalar_lea.vmem %s14, 1
    %v2265 = vld [vmem:[%s2264] sm:$0x1]
    %s2266 = scalar_lea.vmem %s15, 1
    %v2267 = vld [vmem:[%s2266] sm:$0x1]
    %v2268 = vsel %vm85, %v2262, 0.0
    %2269 = vadd.xlane.f32.xlu0 %v2268
    %v2270 = vpop.xlane.xlu0 %2269
    %v2271 = vsel %vm85, %v2263, 0.0
    %2272 = vadd.xlane.f32.xlu0 %v2271
    %v2273 = vpop.xlane.xlu0 %2272
    %v2274 = vmul.f32 %v2270, %v92
    %v2275 = vmul.f32 %v2273, %v92
    %v2276 = vsub.f32 %v2262, %v2274
    %v2277 = vsub.f32 %v2263, %v2275
    %v2278 = vmul.f32 %v2276, %v2276
    %v2279 = vmul.f32 %v2277, %v2277
    %v2280 = vsel %vm85, %v2278, 0.0
    %2281 = vadd.xlane.f32.xlu0 %v2280
    %v2282 = vpop.xlane.xlu0 %2281
    %v2283 = vsel %vm85, %v2279, 0.0
    %2284 = vadd.xlane.f32.xlu0 %v2283
    %v2285 = vpop.xlane.xlu0 %2284
    %v2286 = vmul.f32 %v2282, %v92
    %v2287 = vmul.f32 %v2285, %v92
    %v2288 = vadd.f32 %v2286, 1e-12
    %v2289 = vadd.f32 %v2287, 1e-12
    %v2290 = vrsqrt.pop %v2288
    %v2291 = vrsqrt.pop %v2289
    %v2292 = vmul.f32 %v2276, %v2290
    %v2293 = vmul.f32 %v2277, %v2291
    %v2295 = vlaneseq
    %v2296 = vshrl.u32 %v2295, 7
    %v2297 = vsub.s32 0, %v2296
    %v2298 = vrot.slane %v2265, %v2297
    %v2300 = vmul.f32 %v2292, %v2298
    %v2301 = vmul.f32 %v2293, %v2298
    %v2303 = vlaneseq
    %v2304 = vshrl.u32 %v2303, 7
    %v2305 = vsub.s32 0, %v2304
    %v2306 = vrot.slane %v2267, %v2305
    %v2308 = vadd.f32 %v2300, %v2306
    %v2309 = vadd.f32 %v2301, %v2306
    %2310 = vst.msk [vmem:[#allocation8] sm:$0xff] %vm85, %v2308
    %2311 = vst.msk [vmem:[#allocation8 + $0x8] sm:$0xff] %vm85, %v2309
    // Predicated region
    $region74: #{tpu_custom_call.1} parent=1 // pred_check
      _
    $region75: #{tpu_custom_call.1} parent=1 // pred_check_branch
      %2313 = sbr.rel (0) target = $region77
    $region76: #{tpu_custom_call.1} parent=1 // pred_region
      %s2315 = ssub.s32 256, 256
      %2316 = vsyncadd [#allocation5], %s2315
      %s2317 = sshll.u32 [#allocation8], 4
      %s2318 = int_to_ptr.vmem [resolvable:$true] %s2317
      %2323 = dma.vmem_to_hbm [thread:$0]  %s2318, 256, %s16, [#allocation5], 128, 128, 8
    $region77: #{tpu_custom_call.1} parent=1 // pred_fallthru
      _
    // Predicated region
    $region78: #{tpu_custom_call.1} parent=1 // pred_check
      _
    $region79: #{tpu_custom_call.1} parent=1 // pred_check_branch
      %2325 = sbr.rel (0) target = $region81
    $region80: #{tpu_custom_call.1} parent=1 // pred_region
      %2326 = dma.done [#allocation5], 256
    $region81: #{tpu_custom_call.1} parent=1 // pred_fallthru
      _
    %2327 = vsyncpa [#allocation4], 1
    %2328 = vsyncpa [#allocation7], 1
    %2329 = vsyncpa [#allocation5], 1

</llo_original>
